<compile_context>
chip_gen: v5e
topology: v5e:2x2
jax: 0.10.0
libtpu: 0.0.40
codegen_flags: <defaults>
</compile_context>

<pallas_src>
import jax
import jax.numpy as jnp
from jax.experimental import pallas as pl
from jax.experimental.pallas import tpu as pltpu

# ------------- static model config (mirrors the args in CurvAGN.__init__) ----
NUM_CONVS  = 2
INFEAT_DIM = 16
HIDDEN_DIM = 32
CUT_DIST   = 5.0
NUM_FLT    = 8
NUM_ANGLE  = 4
NUM_HEADS  = 4
NUM_TYPES  = 8          # TODO(synk): real SIGN uses 4*9=36 atom-pair types; kept small here
DENSE_DIMS = (32, 16)
MERGE_B2B  = "cat"      # bond2bond merge -> bond dim = HIDDEN_DIM * NUM_ANGLE (=128, lane-dense)
MERGE_B2A  = "mean"     # bond2atom merge -> atom dim = HIDDEN_DIM
GAMMA      = 10.0       # RBF width for SpatialInputLayer
NEG_SLOPE  = 0.2        # leaky-relu slope of GAT-style attention
# TODO(synk): feat_drop dropout omitted (eval/inference mode -> identity).

BOND_DIM = HIDDEN_DIM * NUM_ANGLE      # 128
HEAD_DIM = HIDDEN_DIM * NUM_HEADS      # 128

# Per-conv parameter order as passed to the kernel.
CONV_KEYS = ("a2b_w", "a2b_b",
             "b2b_w", "b2b_a_src", "b2b_a_dst",
             "b2a_w_src", "b2a_w_dst", "b2a_w_edg",
             "b2a_a_src", "b2a_a_edg", "b2a_a_dst")
N_CONV_REFS = len(CONV_KEYS)           # 11
N_FIXED_REFS = 11                      # 8 graph tensors + 3 input-layer params
N_READOUT_REFS = 9                     # pipool (3) + dense stack (6)


def _full_spec(shape):
    nd = len(shape)
    return pl.BlockSpec(shape, lambda *_: (0,) * nd)


# ------------------------------------------------------------------ kernel ---

def _curvagn_kernel(*refs):
    f32 = jnp.float32
    H, A, NH = HIDDEN_DIM, NUM_ANGLE, NUM_HEADS

    (atom_ref, distf_ref, src_ref, dst_ref, adj_ref, inc_ref,
     typeoh_ref, count_ref, mu_ref, win_ref, bin_ref) = refs[:N_FIXED_REFS]
    base = N_FIXED_REFS
    conv_refs = [refs[base + c * N_CONV_REFS: base + (c + 1) * N_CONV_REFS]
                 for c in range(NUM_CONVS)]
    base += NUM_CONVS * N_CONV_REFS
    (pw1_ref, pb1_ref, pw2_ref,
     wd1_ref, bd1_ref, wd2_ref, bd2_ref, wo_ref, bo_ref) = refs[base:base + N_READOUT_REFS]
    inter_ref, score_ref = refs[base + N_READOUT_REFS:base + N_READOUT_REFS + 2]

    # ---- SpatialInputLayer: RBF + dense + relu, computed ONCE (shared) ----
    d = distf_ref[...]                                           # [E, 1]
    rbf = jnp.exp(-GAMMA * (d - mu_ref[...]) ** 2)               # [E, NUM_FLT]
    dist_h = jnp.maximum(
        jnp.dot(rbf, win_ref[...], preferred_element_type=f32) + bin_ref[...], 0.0)  # [E, H]

    src_oh = src_ref[...]                                        # [E, N]
    dst_oh = dst_ref[...]                                        # [E, N]
    inc = inc_ref[...]                                           # [N, E]

    # [A*H, A] block-indicator: column a selects lane slab a (angle / head).
    # One lane-dense multiply + one MXU push replaces A sub-vreg slab reductions.
    row = jax.lax.broadcasted_iota(jnp.int32, (A * H, A), 0)
    col = jax.lax.broadcasted_iota(jnp.int32, (A * H, A), 1)
    seg = jnp.logical_and(row >= col * H, row < (col + 1) * H).astype(f32)

    atom_h = atom_ref[...]                                       # [N, atom_dim]
    bond2 = None
    for c in range(NUM_CONVS):
        (a2bw_ref, a2bb_ref,
         b2bw_ref, b2basrc_ref, b2badst_ref,
         b2awsrc_ref, b2awdst_ref, b2awedg_ref,
         b2aasrc_ref, b2aaedg_ref, b2aadst_ref) = conv_refs[c]

        # ---- Atom2BondLayer: endpoint gathers (one-hot MXU matmuls) + ONE
        #      packed dense over [h_src | h_dst | dist_h] (K = 2*atom_dim+H) ----
        h_src = jnp.dot(src_oh, atom_h, preferred_element_type=f32)   # [E, atom_dim]
        h_dst = jnp.dot(dst_oh, atom_h, preferred_element_type=f32)   # [E, atom_dim]
        a2b_in = jnp.concatenate([h_src, h_dst, dist_h], axis=-1)     # [E, 2*ad+H]
        bond1 = jnp.maximum(
            jnp.dot(a2b_in, a2bw_ref[...], preferred_element_type=f32)
            + a2bb_ref[...], 0.0)                                      # [E, H]

        # ---- Bond2BondLayer: per-angle GAT, angle weights lane-packed ----
        z_all = jnp.dot(bond1, b2bw_ref[...], preferred_element_type=f32)   # [E, A*H]
        # all-angle attention logits in one full-width multiply + one matmul
        s_src_all = jnp.dot(z_all * b2basrc_ref[...], seg,
                            preferred_element_type=f32)                      # [E, A]
        s_dst_all = jnp.dot(z_all * b2badst_ref[...], seg,
                            preferred_element_type=f32)                      # [E, A]
        angle_outs = []
        for a in range(A):
            scores = s_dst_all[:, a:a + 1] + jnp.transpose(s_src_all[:, a:a + 1])  # [E, E]
            scores = jnp.where(scores > 0, scores, NEG_SLOPE * scores)       # leaky relu
            mask = adj_ref[a]                                                # [E, E]
            masked = jnp.where(mask > 0, scores, -1e30)
            m = jnp.max(masked, axis=-1, keepdims=True)
            p = jnp.where(mask > 0, jnp.exp(masked - m), 0.0)
            inv = pl.reciprocal(
                jnp.maximum(jnp.sum(p, axis=-1, keepdims=True), 1e-9), approx=True)
            alpha = p * inv
            angle_outs.append(
                jnp.dot(alpha, z_all[:, a * H:(a + 1) * H],
                        preferred_element_type=f32))                         # [E, H]
        # TODO(synk): at real E, consolidate the A tiny alpha@z matmuls into one
        # block-diag push ([E, A*E] @ [A*E, A*H]) producing lane-dense bond2.
        bond2 = jnp.concatenate(angle_outs, axis=-1)                          # [E, A*H] ('cat')

        # ---- Bond2AtomLayer: multi-head GAT, head weights lane-packed ----
        zs_all = jnp.dot(bond2, b2awsrc_ref[...], preferred_element_type=f32)   # [E, NH*H]
        ze_all = jnp.dot(dist_h, b2awedg_ref[...], preferred_element_type=f32)  # [E, NH*H]
        zd_all = jnp.dot(atom_h, b2awdst_ref[...], preferred_element_type=f32)  # [N, NH*H]
        zse_all = zs_all + ze_all                                                # message values
        # all-head logits: one full-width multiply + one [128, NH] matmul each
        s_e_all = jnp.dot(zs_all * b2aasrc_ref[...] + ze_all * b2aaedg_ref[...],
                          seg, preferred_element_type=f32)                      # [E, NH]
        s_d_all = jnp.dot(zd_all * b2aadst_ref[...], seg,
                          preferred_element_type=f32)                           # [N, NH]
        acc = jnp.zeros((inc.shape[0], H), f32)
        for hh in range(NH):
            scores = s_d_all[:, hh:hh + 1] + jnp.transpose(s_e_all[:, hh:hh + 1])  # [N, E]
            scores = jnp.where(scores > 0, scores, NEG_SLOPE * scores)
            masked = jnp.where(inc > 0, scores, -1e30)
            m = jnp.max(masked, axis=-1, keepdims=True)
            p = jnp.where(inc > 0, jnp.exp(masked - m), 0.0)
            inv = pl.reciprocal(
                jnp.maximum(jnp.sum(p, axis=-1, keepdims=True), 1e-9), approx=True)
            alpha = p * inv
            acc = acc + jnp.dot(alpha, zse_all[:, hh * H:(hh + 1) * H],
                                preferred_element_type=f32)                     # [N, H]
        # merge_b2a == 'mean' over heads, then relu; stays in VMEM for next conv
        atom_h = jnp.maximum(acc * (1.0 / NH), 0.0)

    # ---- Readout: PiPool (per-bond-type segment-sum + MLP) + OutputLayer ----
    # TODO(synk): per-graph batched segment pooling simplified to single-graph pooling.
    pooled = jnp.dot(typeoh_ref[...], bond2, preferred_element_type=f32)   # [T, A*H]
    h1 = jnp.maximum(
        jnp.dot(pooled, pw1_ref[...], preferred_element_type=f32) + pb1_ref[...], 0.0)
    sc = jnp.dot(h1, pw2_ref[...], preferred_element_type=f32)             # [T, 1]
    sc = sc * (count_ref[...] > 0).astype(f32)
    inter_ref[...] = jnp.transpose(sc)                                      # [1, T]

    g = jnp.sum(atom_h, axis=0, keepdims=True)                              # [1, H]
    g = jnp.maximum(jnp.dot(g, wd1_ref[...], preferred_element_type=f32) + bd1_ref[...], 0.0)
    g = jnp.maximum(jnp.dot(g, wd2_ref[...], preferred_element_type=f32) + bd2_ref[...], 0.0)
    score_ref[...] = jnp.dot(g, wo_ref[...], preferred_element_type=f32) + bo_ref[...]


def curvagn_fused(params, atom_x, dist_feat, src_oh, dst_oh,
                  b2b_adj, b2a_inc, type_oh, type_count):
    conv_args = []
    for cp in params["convs"]:
        conv_args += [cp[k] for k in CONV_KEYS]
    (wd1, bd1), (wd2, bd2) = params["output"]["dense"]
    args = (atom_x, dist_feat, src_oh, dst_oh, b2b_adj, b2a_inc, type_oh, type_count,
            params["input"]["mu"], params["input"]["w"], params["input"]["b"],
            *conv_args,
            params["pipool"]["w1"], params["pipool"]["b1"], params["pipool"]["w2"],
            wd1, bd1, wd2, bd2,
            params["output"]["w_out"], params["output"]["b_out"])
    t = type_oh.shape[0]
    return pl.pallas_call(
        _curvagn_kernel,
        grid=(1,),
        out_shape=(jax.ShapeDtypeStruct((1, t), jnp.float32),
                   jax.ShapeDtypeStruct((1, 1), jnp.float32)),
        in_specs=[_full_spec(a.shape) for a in args],
        out_specs=(_full_spec((1, t)), _full_spec((1, 1))),
        compiler_params=pltpu.CompilerParams(
            dimension_semantics=("arbitrary",),
            vmem_limit_bytes=32 * 1024 * 1024),
        # TODO(synk): add a 'parallel' grid axis (graph batch / E-tiles) to use
        # both TensorCores on v7x once shapes are no longer launch-bound.
    )(*args)


# ------------------------------------------------------------------ model ----

def init_params(key):
    keys = iter(jax.random.split(key, 128))

    def nrm(shape, scale=0.1):
        return scale * jax.random.normal(next(keys), shape, dtype=jnp.float32)

    H, A, NH = HIDDEN_DIM, NUM_ANGLE, NUM_HEADS
    params = {
        "input": {
            "mu": jnp.linspace(0.0, CUT_DIST, NUM_FLT, dtype=jnp.float32).reshape(1, NUM_FLT),
            "w": nrm((NUM_FLT, H)),
            "b": nrm((1, H)),
        }
    }
    convs = []
    for i in range(NUM_CONVS):
        atom_dim = INFEAT_DIM if i == 0 else H          # merge_b2a == 'mean'
        bond_dim = H * A                                # merge_b2b == 'cat'
        convs.append({
            # Atom2Bond weight packed along sublanes: [w_src; w_dst; w_dist]
            "a2b_w": nrm((2 * atom_dim + H, H)),
            "a2b_b": nrm((1, H)),
            # angle weights packed along the lane axis: column slab a == angle a
            "b2b_w": nrm((H, A * H)),
            "b2b_a_src": nrm((1, A * H)),
            "b2b_a_dst": nrm((1, A * H)),
            # head weights packed along the lane axis: column slab h == head h
            "b2a_w_src": nrm((bond_dim, NH * H)),
            "b2a_w_dst": nrm((atom_dim, NH * H)),
            "b2a_w_edg": nrm((H, NH * H)),
            "b2a_a_src": nrm((1, NH * H)),
            "b2a_a_edg": nrm((1, NH * H)),
            "b2a_a_dst": nrm((1, NH * H)),
        })
    params["convs"] = convs
    params["pipool"] = {"w1": nrm((A * H, H)), "b1": nrm((1, H)), "w2": nrm((H, 1))}
    dims = (H,) + DENSE_DIMS
    params["output"] = {
        "dense": [(nrm((dims[j], dims[j + 1])), nrm((1, dims[j + 1])))
                  for j in range(len(DENSE_DIMS))],
        "w_out": nrm((DENSE_DIMS[-1], 1)),
        "b_out": nrm((1, 1)),
    }
    return params


@jax.jit
def curvagn_forward(params, atom_x, dist_feat, src_oh, dst_oh,
                    b2b_adj, b2a_inc, type_oh, type_count):
    # ONE fused pallas_call: RBF dist embedding + NUM_CONVS x (a2b + b2b + b2a)
    # + pipool + sum-pool + dense stack.
    return curvagn_fused(params, atom_x, dist_feat, src_oh, dst_oh,
                         b2b_adj, b2a_inc, type_oh, type_count)


# ------------------------------------------------------------------- main ----

if __name__ == "__main__":
    key = jax.random.PRNGKey(0)
    k_param, k_x, k_d, k_src, k_dst, k_adj, k_type = jax.random.split(key, 7)

    N, E = 8, 24
    params = init_params(k_param)

    atom_x = jax.random.normal(k_x, (N, INFEAT_DIM), dtype=jnp.float32)
    dist_feat = jax.random.uniform(k_d, (E, 1), minval=1.0, maxval=CUT_DIST,
                                   dtype=jnp.float32)
    src = jax.random.randint(k_src, (E,), 0, N)
    dst = jax.random.randint(k_dst, (E,), 0, N)
    src_oh = jax.nn.one_hot(src, N, dtype=jnp.float32)                 # [E, N]
    dst_oh = jax.nn.one_hot(dst, N, dtype=jnp.float32)                 # [E, N]
    b2a_inc = jnp.transpose(dst_oh)                                    # [N, E]
    b2b_adj = jax.random.bernoulli(k_adj, 0.3, (NUM_ANGLE, E, E)).astype(jnp.float32)
    b2b_adj = b2b_adj * (1.0 - jnp.eye(E, dtype=jnp.float32))[None]    # [A, E, E]
    bond_types = jax.random.randint(k_type, (E,), 0, NUM_TYPES)
    type_oh = jnp.transpose(jax.nn.one_hot(bond_types, NUM_TYPES, dtype=jnp.float32))  # [T, E]
    type_count = jnp.sum(type_oh, axis=1, keepdims=True)               # [T, 1]

    pred_inter_mat, pred_score = curvagn_forward(
        params, atom_x, dist_feat, src_oh, dst_oh, b2b_adj, b2a_inc, type_oh, type_count)
    jax.block_until_ready((pred_inter_mat, pred_score))
    assert pred_inter_mat.shape == (1, NUM_TYPES)
    assert pred_score.shape == (1, 1)
    print("KERNEL_OK")
</pallas_src>

<mosaic_0001>
module attributes {stable_mosaic.version = 11 : i64} {
  func.func @_curvagn_kernel(%arg0: i32, %arg1: memref<8x16xf32, #tpu.memory_space<vmem>>, %arg2: memref<24x1xf32, #tpu.memory_space<vmem>>, %arg3: memref<24x8xf32, #tpu.memory_space<vmem>>, %arg4: memref<24x8xf32, #tpu.memory_space<vmem>>, %arg5: memref<4x24x24xf32, #tpu.memory_space<vmem>>, %arg6: memref<8x24xf32, #tpu.memory_space<vmem>>, %arg7: memref<8x24xf32, #tpu.memory_space<vmem>>, %arg8: memref<8x1xf32, #tpu.memory_space<vmem>>, %arg9: memref<1x8xf32, #tpu.memory_space<vmem>>, %arg10: memref<8x32xf32, #tpu.memory_space<vmem>>, %arg11: memref<1x32xf32, #tpu.memory_space<vmem>>, %arg12: memref<64x32xf32, #tpu.memory_space<vmem>>, %arg13: memref<1x32xf32, #tpu.memory_space<vmem>>, %arg14: memref<32x128xf32, #tpu.memory_space<vmem>>, %arg15: memref<1x128xf32, #tpu.memory_space<vmem>>, %arg16: memref<1x128xf32, #tpu.memory_space<vmem>>, %arg17: memref<128x128xf32, #tpu.memory_space<vmem>>, %arg18: memref<16x128xf32, #tpu.memory_space<vmem>>, %arg19: memref<32x128xf32, #tpu.memory_space<vmem>>, %arg20: memref<1x128xf32, #tpu.memory_space<vmem>>, %arg21: memref<1x128xf32, #tpu.memory_space<vmem>>, %arg22: memref<1x128xf32, #tpu.memory_space<vmem>>, %arg23: memref<96x32xf32, #tpu.memory_space<vmem>>, %arg24: memref<1x32xf32, #tpu.memory_space<vmem>>, %arg25: memref<32x128xf32, #tpu.memory_space<vmem>>, %arg26: memref<1x128xf32, #tpu.memory_space<vmem>>, %arg27: memref<1x128xf32, #tpu.memory_space<vmem>>, %arg28: memref<128x128xf32, #tpu.memory_space<vmem>>, %arg29: memref<32x128xf32, #tpu.memory_space<vmem>>, %arg30: memref<32x128xf32, #tpu.memory_space<vmem>>, %arg31: memref<1x128xf32, #tpu.memory_space<vmem>>, %arg32: memref<1x128xf32, #tpu.memory_space<vmem>>, %arg33: memref<1x128xf32, #tpu.memory_space<vmem>>, %arg34: memref<128x32xf32, #tpu.memory_space<vmem>>, %arg35: memref<1x32xf32, #tpu.memory_space<vmem>>, %arg36: memref<32x1xf32, #tpu.memory_space<vmem>>, %arg37: memref<32x32xf32, #tpu.memory_space<vmem>>, %arg38: memref<1x32xf32, #tpu.memory_space<vmem>>, %arg39: memref<32x16xf32, #tpu.memory_space<vmem>>, %arg40: memref<1x16xf32, #tpu.memory_space<vmem>>, %arg41: memref<16x1xf32, #tpu.memory_space<vmem>>, %arg42: memref<1x1xf32, #tpu.memory_space<vmem>>, %arg43: memref<1x8xf32, #tpu.memory_space<vmem>>, %arg44: memref<1x1xf32, #tpu.memory_space<vmem>>) attributes {dimension_semantics = [#tpu.dimension_semantics<arbitrary>], iteration_bounds = array<i64: 1>, scalar_prefetch = 0 : i64, scratch_operands = 0 : i64, tpu.core_type = #tpu.core_type<tc>, window_params = [{pipeline_mode = #tpu.pipeline_mode<synchronous>, transform_indices = @transform_0, window_bounds = array<i64: 8, 16>}, {pipeline_mode = #tpu.pipeline_mode<synchronous>, transform_indices = @transform_1, window_bounds = array<i64: 24, 1>}, {pipeline_mode = #tpu.pipeline_mode<synchronous>, transform_indices = @transform_2, window_bounds = array<i64: 24, 8>}, {pipeline_mode = #tpu.pipeline_mode<synchronous>, transform_indices = @transform_3, window_bounds = array<i64: 24, 8>}, {pipeline_mode = #tpu.pipeline_mode<synchronous>, transform_indices = @transform_4, window_bounds = array<i64: 4, 24, 24>}, {pipeline_mode = #tpu.pipeline_mode<synchronous>, transform_indices = @transform_5, window_bounds = array<i64: 8, 24>}, {pipeline_mode = #tpu.pipeline_mode<synchronous>, transform_indices = @transform_6, window_bounds = array<i64: 8, 24>}, {pipeline_mode = #tpu.pipeline_mode<synchronous>, transform_indices = @transform_7, window_bounds = array<i64: 8, 1>}, {pipeline_mode = #tpu.pipeline_mode<synchronous>, transform_indices = @transform_8, window_bounds = array<i64: 1, 8>}, {pipeline_mode = #tpu.pipeline_mode<synchronous>, transform_indices = @transform_9, window_bounds = array<i64: 8, 32>}, {pipeline_mode = #tpu.pipeline_mode<synchronous>, transform_indices = @transform_10, window_bounds = array<i64: 1, 32>}, {pipeline_mode = #tpu.pipeline_mode<synchronous>, transform_indices = @transform_11, window_bounds = array<i64: 64, 32>}, {pipeline_mode = #tpu.pipeline_mode<synchronous>, transform_indices = @transform_12, window_bounds = array<i64: 1, 32>}, {pipeline_mode = #tpu.pipeline_mode<synchronous>, transform_indices = @transform_13, window_bounds = array<i64: 32, 128>}, {pipeline_mode = #tpu.pipeline_mode<synchronous>, transform_indices = @transform_14, window_bounds = array<i64: 1, 128>}, {pipeline_mode = #tpu.pipeline_mode<synchronous>, transform_indices = @transform_15, window_bounds = array<i64: 1, 128>}, {pipeline_mode = #tpu.pipeline_mode<synchronous>, transform_indices = @transform_16, window_bounds = array<i64: 128, 128>}, {pipeline_mode = #tpu.pipeline_mode<synchronous>, transform_indices = @transform_17, window_bounds = array<i64: 16, 128>}, {pipeline_mode = #tpu.pipeline_mode<synchronous>, transform_indices = @transform_18, window_bounds = array<i64: 32, 128>}, {pipeline_mode = #tpu.pipeline_mode<synchronous>, transform_indices = @transform_19, window_bounds = array<i64: 1, 128>}, {pipeline_mode = #tpu.pipeline_mode<synchronous>, transform_indices = @transform_20, window_bounds = array<i64: 1, 128>}, {pipeline_mode = #tpu.pipeline_mode<synchronous>, transform_indices = @transform_21, window_bounds = array<i64: 1, 128>}, {pipeline_mode = #tpu.pipeline_mode<synchronous>, transform_indices = @transform_22, window_bounds = array<i64: 96, 32>}, {pipeline_mode = #tpu.pipeline_mode<synchronous>, transform_indices = @transform_23, window_bounds = array<i64: 1, 32>}, {pipeline_mode = #tpu.pipeline_mode<synchronous>, transform_indices = @transform_24, window_bounds = array<i64: 32, 128>}, {pipeline_mode = #tpu.pipeline_mode<synchronous>, transform_indices = @transform_25, window_bounds = array<i64: 1, 128>}, {pipeline_mode = #tpu.pipeline_mode<synchronous>, transform_indices = @transform_26, window_bounds = array<i64: 1, 128>}, {pipeline_mode = #tpu.pipeline_mode<synchronous>, transform_indices = @transform_27, window_bounds = array<i64: 128, 128>}, {pipeline_mode = #tpu.pipeline_mode<synchronous>, transform_indices = @transform_28, window_bounds = array<i64: 32, 128>}, {pipeline_mode = #tpu.pipeline_mode<synchronous>, transform_indices = @transform_29, window_bounds = array<i64: 32, 128>}, {pipeline_mode = #tpu.pipeline_mode<synchronous>, transform_indices = @transform_30, window_bounds = array<i64: 1, 128>}, {pipeline_mode = #tpu.pipeline_mode<synchronous>, transform_indices = @transform_31, window_bounds = array<i64: 1, 128>}, {pipeline_mode = #tpu.pipeline_mode<synchronous>, transform_indices = @transform_32, window_bounds = array<i64: 1, 128>}, {pipeline_mode = #tpu.pipeline_mode<synchronous>, transform_indices = @transform_33, window_bounds = array<i64: 128, 32>}, {pipeline_mode = #tpu.pipeline_mode<synchronous>, transform_indices = @transform_34, window_bounds = array<i64: 1, 32>}, {pipeline_mode = #tpu.pipeline_mode<synchronous>, transform_indices = @transform_35, window_bounds = array<i64: 32, 1>}, {pipeline_mode = #tpu.pipeline_mode<synchronous>, transform_indices = @transform_36, window_bounds = array<i64: 32, 32>}, {pipeline_mode = #tpu.pipeline_mode<synchronous>, transform_indices = @transform_37, window_bounds = array<i64: 1, 32>}, {pipeline_mode = #tpu.pipeline_mode<synchronous>, transform_indices = @transform_38, window_bounds = array<i64: 32, 16>}, {pipeline_mode = #tpu.pipeline_mode<synchronous>, transform_indices = @transform_39, window_bounds = array<i64: 1, 16>}, {pipeline_mode = #tpu.pipeline_mode<synchronous>, transform_indices = @transform_40, window_bounds = array<i64: 16, 1>}, {pipeline_mode = #tpu.pipeline_mode<synchronous>, transform_indices = @transform_41, window_bounds = array<i64: 1, 1>}, {pipeline_mode = #tpu.pipeline_mode<synchronous>, transform_indices = @transform_42, window_bounds = array<i64: 1, 8>}, {pipeline_mode = #tpu.pipeline_mode<synchronous>, transform_indices = @transform_43, window_bounds = array<i64: 1, 1>}]} {
    %c0 = arith.constant 0 : index
    %c0_0 = arith.constant 0 : index
    %0 = vector.load %arg2[%c0, %c0_0] : memref<24x1xf32, #tpu.memory_space<vmem>>, vector<24x1xf32>
    %c0_1 = arith.constant 0 : index
    %c0_2 = arith.constant 0 : index
    %1 = vector.load %arg9[%c0_1, %c0_2] : memref<1x8xf32, #tpu.memory_space<vmem>>, vector<1x8xf32>
    %2 = vector.broadcast %0 : vector<24x1xf32> to vector<24x8xf32>
    %3 = vector.broadcast %1 : vector<1x8xf32> to vector<24x8xf32>
    %4 = arith.subf %2, %3 : vector<24x8xf32>
    %5 = arith.mulf %4, %4 : vector<24x8xf32>
    %cst = arith.constant -1.000000e+01 : f32
    %6 = vector.broadcast %cst : f32 to vector<24x8xf32>
    %7 = arith.mulf %6, %5 : vector<24x8xf32>
    %8 = math.exp %7 : vector<24x8xf32>
    %c0_3 = arith.constant 0 : index
    %c0_4 = arith.constant 0 : index
    %9 = vector.load %arg10[%c0_3, %c0_4] : memref<8x32xf32, #tpu.memory_space<vmem>>, vector<8x32xf32>
    %cst_5 = arith.constant dense<0.000000e+00> : vector<24x32xf32>
    %10 = tpu.matmul %8, %9, %cst_5 {dimension_numbers = #tpu.dot_dimension_numbers<[1], [0], [0], [1], [0, 0, 1, 1], [], []>} : vector<24x8xf32>, vector<8x32xf32>, vector<24x32xf32> -> vector<24x32xf32>
    %c0_6 = arith.constant 0 : index
    %c0_7 = arith.constant 0 : index
    %11 = vector.load %arg11[%c0_6, %c0_7] : memref<1x32xf32, #tpu.memory_space<vmem>>, vector<1x32xf32>
    %12 = vector.broadcast %11 : vector<1x32xf32> to vector<24x32xf32>
    %13 = arith.addf %10, %12 : vector<24x32xf32>
    %cst_8 = arith.constant 0.000000e+00 : f32
    %14 = vector.broadcast %cst_8 : f32 to vector<24x32xf32>
    %15 = arith.maximumf %13, %14 : vector<24x32xf32>
    %c0_9 = arith.constant 0 : index
    %c0_10 = arith.constant 0 : index
    %16 = vector.load %arg3[%c0_9, %c0_10] : memref<24x8xf32, #tpu.memory_space<vmem>>, vector<24x8xf32>
    %c0_11 = arith.constant 0 : index
    %c0_12 = arith.constant 0 : index
    %17 = vector.load %arg4[%c0_11, %c0_12] : memref<24x8xf32, #tpu.memory_space<vmem>>, vector<24x8xf32>
    %c0_13 = arith.constant 0 : index
    %c0_14 = arith.constant 0 : index
    %18 = vector.load %arg6[%c0_13, %c0_14] : memref<8x24xf32, #tpu.memory_space<vmem>>, vector<8x24xf32>
    %19 = tpu.iota {dimensions = array<i32: 0>} : vector<128x4xi32>
    %20 = tpu.iota {dimensions = array<i32: 1>} : vector<128x4xi32>
    %c32_i32 = arith.constant 32 : i32
    %21 = vector.broadcast %c32_i32 : i32 to vector<128x4xi32>
    %22 = arith.muli %20, %21 : vector<128x4xi32>
    %23 = arith.cmpi sge, %19, %22 : vector<128x4xi32>
    %c1_i32 = arith.constant 1 : i32
    %24 = vector.broadcast %c1_i32 : i32 to vector<128x4xi32>
    %25 = arith.addi %20, %24 : vector<128x4xi32>
    %c32_i32_15 = arith.constant 32 : i32
    %26 = vector.broadcast %c32_i32_15 : i32 to vector<128x4xi32>
    %27 = arith.muli %25, %26 : vector<128x4xi32>
    %28 = arith.cmpi slt, %19, %27 : vector<128x4xi32>
    %29 = arith.andi %23, %28 : vector<128x4xi1>
    %30 = arith.extui %29 : vector<128x4xi1> to vector<128x4xi32>
    %31 = arith.sitofp %30 : vector<128x4xi32> to vector<128x4xf32>
    %c0_16 = arith.constant 0 : index
    %c0_17 = arith.constant 0 : index
    %32 = vector.load %arg1[%c0_16, %c0_17] : memref<8x16xf32, #tpu.memory_space<vmem>>, vector<8x16xf32>
    %cst_18 = arith.constant dense<0.000000e+00> : vector<24x16xf32>
    %33 = tpu.matmul %16, %32, %cst_18 {dimension_numbers = #tpu.dot_dimension_numbers<[1], [0], [0], [1], [0, 0, 1, 1], [], []>} : vector<24x8xf32>, vector<8x16xf32>, vector<24x16xf32> -> vector<24x16xf32>
    %cst_19 = arith.constant dense<0.000000e+00> : vector<24x16xf32>
    %34 = tpu.matmul %17, %32, %cst_19 {dimension_numbers = #tpu.dot_dimension_numbers<[1], [0], [0], [1], [0, 0, 1, 1], [], []>} : vector<24x8xf32>, vector<8x16xf32>, vector<24x16xf32> -> vector<24x16xf32>
    %35 = tpu.concatenate %33, %34, %15 in 1 : vector<24x16xf32>, vector<24x16xf32>, vector<24x32xf32> -> vector<24x64xf32>
    %c0_20 = arith.constant 0 : index
    %c0_21 = arith.constant 0 : index
    %36 = vector.load %arg12[%c0_20, %c0_21] : memref<64x32xf32, #tpu.memory_space<vmem>>, vector<64x32xf32>
    %cst_22 = arith.constant dense<0.000000e+00> : vector<24x32xf32>
    %37 = tpu.matmul %35, %36, %cst_22 {dimension_numbers = #tpu.dot_dimension_numbers<[1], [0], [0], [1], [0, 0, 1, 1], [], []>} : vector<24x64xf32>, vector<64x32xf32>, vector<24x32xf32> -> vector<24x32xf32>
    %c0_23 = arith.constant 0 : index
    %c0_24 = arith.constant 0 : index
    %38 = vector.load %arg13[%c0_23, %c0_24] : memref<1x32xf32, #tpu.memory_space<vmem>>, vector<1x32xf32>
    %39 = vector.broadcast %38 : vector<1x32xf32> to vector<24x32xf32>
    %40 = arith.addf %37, %39 : vector<24x32xf32>
    %cst_25 = arith.constant 0.000000e+00 : f32
    %41 = vector.broadcast %cst_25 : f32 to vector<24x32xf32>
    %42 = arith.maximumf %40, %41 : vector<24x32xf32>
    %c0_26 = arith.constant 0 : index
    %c0_27 = arith.constant 0 : index
    %43 = vector.load %arg14[%c0_26, %c0_27] : memref<32x128xf32, #tpu.memory_space<vmem>>, vector<32x128xf32>
    %cst_28 = arith.constant dense<0.000000e+00> : vector<24x128xf32>
    %44 = tpu.matmul %42, %43, %cst_28 {dimension_numbers = #tpu.dot_dimension_numbers<[1], [0], [0], [1], [0, 0, 1, 1], [], []>} : vector<24x32xf32>, vector<32x128xf32>, vector<24x128xf32> -> vector<24x128xf32>
    %c0_29 = arith.constant 0 : index
    %c0_30 = arith.constant 0 : index
    %45 = vector.load %arg15[%c0_29, %c0_30] : memref<1x128xf32, #tpu.memory_space<vmem>>, vector<1x128xf32>
    %46 = vector.broadcast %45 : vector<1x128xf32> to vector<24x128xf32>
    %47 = arith.mulf %44, %46 : vector<24x128xf32>
    %cst_31 = arith.constant dense<0.000000e+00> : vector<24x4xf32>
    %48 = tpu.matmul %47, %31, %cst_31 {dimension_numbers = #tpu.dot_dimension_numbers<[1], [0], [0], [1], [0, 0, 1, 1], [], []>} : vector<24x128xf32>, vector<128x4xf32>, vector<24x4xf32> -> vector<24x4xf32>
    %c0_32 = arith.constant 0 : index
    %c0_33 = arith.constant 0 : index
    %49 = vector.load %arg16[%c0_32, %c0_33] : memref<1x128xf32, #tpu.memory_space<vmem>>, vector<1x128xf32>
    %50 = vector.broadcast %49 : vector<1x128xf32> to vector<24x128xf32>
    %51 = arith.mulf %44, %50 : vector<24x128xf32>
    %cst_34 = arith.constant dense<0.000000e+00> : vector<24x4xf32>
    %52 = tpu.matmul %51, %31, %cst_34 {dimension_numbers = #tpu.dot_dimension_numbers<[1], [0], [0], [1], [0, 0, 1, 1], [], []>} : vector<24x128xf32>, vector<128x4xf32>, vector<24x4xf32> -> vector<24x4xf32>
    %53 = vector.extract_strided_slice %52 {offsets = [0, 0], sizes = [24, 1], strides = [1, 1]} : vector<24x4xf32> to vector<24x1xf32>
    %54 = vector.extract_strided_slice %48 {offsets = [0, 0], sizes = [24, 1], strides = [1, 1]} : vector<24x4xf32> to vector<24x1xf32>
    %55 = tpu.transpose %54, [1, 0] : vector<24x1xf32> -> vector<1x24xf32>
    %56 = vector.broadcast %53 : vector<24x1xf32> to vector<24x24xf32>
    %57 = vector.broadcast %55 : vector<1x24xf32> to vector<24x24xf32>
    %58 = arith.addf %56, %57 : vector<24x24xf32>
    %cst_35 = arith.constant 0.000000e+00 : f32
    %59 = vector.broadcast %cst_35 : f32 to vector<24x24xf32>
    %60 = arith.cmpf ogt, %58, %59 : vector<24x24xf32>
    %cst_36 = arith.constant 2.000000e-01 : f32
    %61 = vector.broadcast %cst_36 : f32 to vector<24x24xf32>
    %62 = arith.mulf %61, %58 : vector<24x24xf32>
    %63 = arith.select %60, %58, %62 : vector<24x24xi1>, vector<24x24xf32>
    %c0_37 = arith.constant 0 : index
    %c0_38 = arith.constant 0 : index
    %c0_39 = arith.constant 0 : index
    %64 = vector.load %arg5[%c0_37, %c0_38, %c0_39] : memref<4x24x24xf32, #tpu.memory_space<vmem>>, vector<1x24x24xf32>
    %65 = vector.shape_cast %64 : vector<1x24x24xf32> to vector<24x24xf32>
    %cst_40 = arith.constant 0.000000e+00 : f32
    %66 = vector.broadcast %cst_40 : f32 to vector<24x24xf32>
    %67 = arith.cmpf ogt, %65, %66 : vector<24x24xf32>
    %cst_41 = arith.constant -1.000000e+30 : f32
    %68 = vector.broadcast %cst_41 : f32 to vector<24x24xf32>
    %69 = arith.select %67, %63, %68 : vector<24x24xi1>, vector<24x24xf32>
    %cst_42 = arith.constant dense<0xFF800000> : vector<24xf32>
    %70 = vector.multi_reduction <maximumf>, %69, %cst_42 [1] : vector<24x24xf32> to vector<24xf32>
    %71 = vector.shape_cast %70 : vector<24xf32> to vector<24x1xf32>
    %cst_43 = arith.constant 0.000000e+00 : f32
    %72 = vector.broadcast %cst_43 : f32 to vector<24x24xf32>
    %73 = arith.cmpf ogt, %65, %72 : vector<24x24xf32>
    %74 = vector.broadcast %71 : vector<24x1xf32> to vector<24x24xf32>
    %75 = arith.subf %69, %74 : vector<24x24xf32>
    %76 = math.exp %75 : vector<24x24xf32>
    %cst_44 = arith.constant 0.000000e+00 : f32
    %77 = vector.broadcast %cst_44 : f32 to vector<24x24xf32>
    %78 = arith.select %73, %76, %77 : vector<24x24xi1>, vector<24x24xf32>
    %cst_45 = arith.constant dense<0.000000e+00> : vector<24xf32>
    %79 = vector.multi_reduction <add>, %78, %cst_45 [1] : vector<24x24xf32> to vector<24xf32>
    %80 = vector.shape_cast %79 : vector<24xf32> to vector<24x1xf32>
    %cst_46 = arith.constant 9.99999971E-10 : f32
    %81 = vector.broadcast %cst_46 : f32 to vector<24x1xf32>
    %82 = arith.maximumf %80, %81 : vector<24x1xf32>
    %83 = tpu.reciprocal %82 {approx = true} : vector<24x1xf32> -> vector<24x1xf32>
    %84 = vector.broadcast %83 : vector<24x1xf32> to vector<24x24xf32>
    %85 = arith.mulf %78, %84 : vector<24x24xf32>
    %86 = vector.extract_strided_slice %44 {offsets = [0, 0], sizes = [24, 32], strides = [1, 1]} : vector<24x128xf32> to vector<24x32xf32>
    %cst_47 = arith.constant dense<0.000000e+00> : vector<24x32xf32>
    %87 = tpu.matmul %85, %86, %cst_47 {dimension_numbers = #tpu.dot_dimension_numbers<[1], [0], [0], [1], [0, 0, 1, 1], [], []>} : vector<24x24xf32>, vector<24x32xf32>, vector<24x32xf32> -> vector<24x32xf32>
    %88 = vector.extract_strided_slice %52 {offsets = [0, 1], sizes = [24, 1], strides = [1, 1]} : vector<24x4xf32> to vector<24x1xf32>
    %89 = vector.extract_strided_slice %48 {offsets = [0, 1], sizes = [24, 1], strides = [1, 1]} : vector<24x4xf32> to vector<24x1xf32>
    %90 = tpu.transpose %89, [1, 0] : vector<24x1xf32> -> vector<1x24xf32>
    %91 = vector.broadcast %88 : vector<24x1xf32> to vector<24x24xf32>
    %92 = vector.broadcast %90 : vector<1x24xf32> to vector<24x24xf32>
    %93 = arith.addf %91, %92 : vector<24x24xf32>
    %cst_48 = arith.constant 0.000000e+00 : f32
    %94 = vector.broadcast %cst_48 : f32 to vector<24x24xf32>
    %95 = arith.cmpf ogt, %93, %94 : vector<24x24xf32>
    %cst_49 = arith.constant 2.000000e-01 : f32
    %96 = vector.broadcast %cst_49 : f32 to vector<24x24xf32>
    %97 = arith.mulf %96, %93 : vector<24x24xf32>
    %98 = arith.select %95, %93, %97 : vector<24x24xi1>, vector<24x24xf32>
    %c1 = arith.constant 1 : index
    %c0_50 = arith.constant 0 : index
    %c0_51 = arith.constant 0 : index
    %99 = vector.load %arg5[%c1, %c0_50, %c0_51] : memref<4x24x24xf32, #tpu.memory_space<vmem>>, vector<1x24x24xf32>
    %100 = vector.shape_cast %99 : vector<1x24x24xf32> to vector<24x24xf32>
    %cst_52 = arith.constant 0.000000e+00 : f32
    %101 = vector.broadcast %cst_52 : f32 to vector<24x24xf32>
    %102 = arith.cmpf ogt, %100, %101 : vector<24x24xf32>
    %cst_53 = arith.constant -1.000000e+30 : f32
    %103 = vector.broadcast %cst_53 : f32 to vector<24x24xf32>
    %104 = arith.select %102, %98, %103 : vector<24x24xi1>, vector<24x24xf32>
    %cst_54 = arith.constant dense<0xFF800000> : vector<24xf32>
    %105 = vector.multi_reduction <maximumf>, %104, %cst_54 [1] : vector<24x24xf32> to vector<24xf32>
    %106 = vector.shape_cast %105 : vector<24xf32> to vector<24x1xf32>
    %cst_55 = arith.constant 0.000000e+00 : f32
    %107 = vector.broadcast %cst_55 : f32 to vector<24x24xf32>
    %108 = arith.cmpf ogt, %100, %107 : vector<24x24xf32>
    %109 = vector.broadcast %106 : vector<24x1xf32> to vector<24x24xf32>
    %110 = arith.subf %104, %109 : vector<24x24xf32>
    %111 = math.exp %110 : vector<24x24xf32>
    %cst_56 = arith.constant 0.000000e+00 : f32
    %112 = vector.broadcast %cst_56 : f32 to vector<24x24xf32>
    %113 = arith.select %108, %111, %112 : vector<24x24xi1>, vector<24x24xf32>
    %cst_57 = arith.constant dense<0.000000e+00> : vector<24xf32>
    %114 = vector.multi_reduction <add>, %113, %cst_57 [1] : vector<24x24xf32> to vector<24xf32>
    %115 = vector.shape_cast %114 : vector<24xf32> to vector<24x1xf32>
    %cst_58 = arith.constant 9.99999971E-10 : f32
    %116 = vector.broadcast %cst_58 : f32 to vector<24x1xf32>
    %117 = arith.maximumf %115, %116 : vector<24x1xf32>
    %118 = tpu.reciprocal %117 {approx = true} : vector<24x1xf32> -> vector<24x1xf32>
    %119 = vector.broadcast %118 : vector<24x1xf32> to vector<24x24xf32>
    %120 = arith.mulf %113, %119 : vector<24x24xf32>
    %121 = vector.extract_strided_slice %44 {offsets = [0, 32], sizes = [24, 32], strides = [1, 1]} : vector<24x128xf32> to vector<24x32xf32>
    %cst_59 = arith.constant dense<0.000000e+00> : vector<24x32xf32>
    %122 = tpu.matmul %120, %121, %cst_59 {dimension_numbers = #tpu.dot_dimension_numbers<[1], [0], [0], [1], [0, 0, 1, 1], [], []>} : vector<24x24xf32>, vector<24x32xf32>, vector<24x32xf32> -> vector<24x32xf32>
    %123 = vector.extract_strided_slice %52 {offsets = [0, 2], sizes = [24, 1], strides = [1, 1]} : vector<24x4xf32> to vector<24x1xf32>
    %124 = vector.extract_strided_slice %48 {offsets = [0, 2], sizes = [24, 1], strides = [1, 1]} : vector<24x4xf32> to vector<24x1xf32>
    %125 = tpu.transpose %124, [1, 0] : vector<24x1xf32> -> vector<1x24xf32>
    %126 = vector.broadcast %123 : vector<24x1xf32> to vector<24x24xf32>
    %127 = vector.broadcast %125 : vector<1x24xf32> to vector<24x24xf32>
    %128 = arith.addf %126, %127 : vector<24x24xf32>
    %cst_60 = arith.constant 0.000000e+00 : f32
    %129 = vector.broadcast %cst_60 : f32 to vector<24x24xf32>
    %130 = arith.cmpf ogt, %128, %129 : vector<24x24xf32>
    %cst_61 = arith.constant 2.000000e-01 : f32
    %131 = vector.broadcast %cst_61 : f32 to vector<24x24xf32>
    %132 = arith.mulf %131, %128 : vector<24x24xf32>
    %133 = arith.select %130, %128, %132 : vector<24x24xi1>, vector<24x24xf32>
    %c2 = arith.constant 2 : index
    %c0_62 = arith.constant 0 : index
    %c0_63 = arith.constant 0 : index
    %134 = vector.load %arg5[%c2, %c0_62, %c0_63] : memref<4x24x24xf32, #tpu.memory_space<vmem>>, vector<1x24x24xf32>
    %135 = vector.shape_cast %134 : vector<1x24x24xf32> to vector<24x24xf32>
    %cst_64 = arith.constant 0.000000e+00 : f32
    %136 = vector.broadcast %cst_64 : f32 to vector<24x24xf32>
    %137 = arith.cmpf ogt, %135, %136 : vector<24x24xf32>
    %cst_65 = arith.constant -1.000000e+30 : f32
    %138 = vector.broadcast %cst_65 : f32 to vector<24x24xf32>
    %139 = arith.select %137, %133, %138 : vector<24x24xi1>, vector<24x24xf32>
    %cst_66 = arith.constant dense<0xFF800000> : vector<24xf32>
    %140 = vector.multi_reduction <maximumf>, %139, %cst_66 [1] : vector<24x24xf32> to vector<24xf32>
    %141 = vector.shape_cast %140 : vector<24xf32> to vector<24x1xf32>
    %cst_67 = arith.constant 0.000000e+00 : f32
    %142 = vector.broadcast %cst_67 : f32 to vector<24x24xf32>
    %143 = arith.cmpf ogt, %135, %142 : vector<24x24xf32>
    %144 = vector.broadcast %141 : vector<24x1xf32> to vector<24x24xf32>
    %145 = arith.subf %139, %144 : vector<24x24xf32>
    %146 = math.exp %145 : vector<24x24xf32>
    %cst_68 = arith.constant 0.000000e+00 : f32
    %147 = vector.broadcast %cst_68 : f32 to vector<24x24xf32>
    %148 = arith.select %143, %146, %147 : vector<24x24xi1>, vector<24x24xf32>
    %cst_69 = arith.constant dense<0.000000e+00> : vector<24xf32>
    %149 = vector.multi_reduction <add>, %148, %cst_69 [1] : vector<24x24xf32> to vector<24xf32>
    %150 = vector.shape_cast %149 : vector<24xf32> to vector<24x1xf32>
    %cst_70 = arith.constant 9.99999971E-10 : f32
    %151 = vector.broadcast %cst_70 : f32 to vector<24x1xf32>
    %152 = arith.maximumf %150, %151 : vector<24x1xf32>
    %153 = tpu.reciprocal %152 {approx = true} : vector<24x1xf32> -> vector<24x1xf32>
    %154 = vector.broadcast %153 : vector<24x1xf32> to vector<24x24xf32>
    %155 = arith.mulf %148, %154 : vector<24x24xf32>
    %156 = vector.extract_strided_slice %44 {offsets = [0, 64], sizes = [24, 32], strides = [1, 1]} : vector<24x128xf32> to vector<24x32xf32>
    %cst_71 = arith.constant dense<0.000000e+00> : vector<24x32xf32>
    %157 = tpu.matmul %155, %156, %cst_71 {dimension_numbers = #tpu.dot_dimension_numbers<[1], [0], [0], [1], [0, 0, 1, 1], [], []>} : vector<24x24xf32>, vector<24x32xf32>, vector<24x32xf32> -> vector<24x32xf32>
    %158 = vector.extract_strided_slice %52 {offsets = [0, 3], sizes = [24, 1], strides = [1, 1]} : vector<24x4xf32> to vector<24x1xf32>
    %159 = vector.extract_strided_slice %48 {offsets = [0, 3], sizes = [24, 1], strides = [1, 1]} : vector<24x4xf32> to vector<24x1xf32>
    %160 = tpu.transpose %159, [1, 0] : vector<24x1xf32> -> vector<1x24xf32>
    %161 = vector.broadcast %158 : vector<24x1xf32> to vector<24x24xf32>
    %162 = vector.broadcast %160 : vector<1x24xf32> to vector<24x24xf32>
    %163 = arith.addf %161, %162 : vector<24x24xf32>
    %cst_72 = arith.constant 0.000000e+00 : f32
    %164 = vector.broadcast %cst_72 : f32 to vector<24x24xf32>
    %165 = arith.cmpf ogt, %163, %164 : vector<24x24xf32>
    %cst_73 = arith.constant 2.000000e-01 : f32
    %166 = vector.broadcast %cst_73 : f32 to vector<24x24xf32>
    %167 = arith.mulf %166, %163 : vector<24x24xf32>
    %168 = arith.select %165, %163, %167 : vector<24x24xi1>, vector<24x24xf32>
    %c3 = arith.constant 3 : index
    %c0_74 = arith.constant 0 : index
    %c0_75 = arith.constant 0 : index
    %169 = vector.load %arg5[%c3, %c0_74, %c0_75] : memref<4x24x24xf32, #tpu.memory_space<vmem>>, vector<1x24x24xf32>
    %170 = vector.shape_cast %169 : vector<1x24x24xf32> to vector<24x24xf32>
    %cst_76 = arith.constant 0.000000e+00 : f32
    %171 = vector.broadcast %cst_76 : f32 to vector<24x24xf32>
    %172 = arith.cmpf ogt, %170, %171 : vector<24x24xf32>
    %cst_77 = arith.constant -1.000000e+30 : f32
    %173 = vector.broadcast %cst_77 : f32 to vector<24x24xf32>
    %174 = arith.select %172, %168, %173 : vector<24x24xi1>, vector<24x24xf32>
    %cst_78 = arith.constant dense<0xFF800000> : vector<24xf32>
    %175 = vector.multi_reduction <maximumf>, %174, %cst_78 [1] : vector<24x24xf32> to vector<24xf32>
    %176 = vector.shape_cast %175 : vector<24xf32> to vector<24x1xf32>
    %cst_79 = arith.constant 0.000000e+00 : f32
    %177 = vector.broadcast %cst_79 : f32 to vector<24x24xf32>
    %178 = arith.cmpf ogt, %170, %177 : vector<24x24xf32>
    %179 = vector.broadcast %176 : vector<24x1xf32> to vector<24x24xf32>
    %180 = arith.subf %174, %179 : vector<24x24xf32>
    %181 = math.exp %180 : vector<24x24xf32>
    %cst_80 = arith.constant 0.000000e+00 : f32
    %182 = vector.broadcast %cst_80 : f32 to vector<24x24xf32>
    %183 = arith.select %178, %181, %182 : vector<24x24xi1>, vector<24x24xf32>
    %cst_81 = arith.constant dense<0.000000e+00> : vector<24xf32>
    %184 = vector.multi_reduction <add>, %183, %cst_81 [1] : vector<24x24xf32> to vector<24xf32>
    %185 = vector.shape_cast %184 : vector<24xf32> to vector<24x1xf32>
    %cst_82 = arith.constant 9.99999971E-10 : f32
    %186 = vector.broadcast %cst_82 : f32 to vector<24x1xf32>
    %187 = arith.maximumf %185, %186 : vector<24x1xf32>
    %188 = tpu.reciprocal %187 {approx = true} : vector<24x1xf32> -> vector<24x1xf32>
    %189 = vector.broadcast %188 : vector<24x1xf32> to vector<24x24xf32>
    %190 = arith.mulf %183, %189 : vector<24x24xf32>
    %191 = vector.extract_strided_slice %44 {offsets = [0, 96], sizes = [24, 32], strides = [1, 1]} : vector<24x128xf32> to vector<24x32xf32>
    %cst_83 = arith.constant dense<0.000000e+00> : vector<24x32xf32>
    %192 = tpu.matmul %190, %191, %cst_83 {dimension_numbers = #tpu.dot_dimension_numbers<[1], [0], [0], [1], [0, 0, 1, 1], [], []>} : vector<24x24xf32>, vector<24x32xf32>, vector<24x32xf32> -> vector<24x32xf32>
    %193 = tpu.concatenate %87, %122, %157, %192 in 1 : vector<24x32xf32>, vector<24x32xf32>, vector<24x32xf32>, vector<24x32xf32> -> vector<24x128xf32>
    %c0_84 = arith.constant 0 : index
    %c0_85 = arith.constant 0 : index
    %194 = vector.load %arg17[%c0_84, %c0_85] : memref<128x128xf32, #tpu.memory_space<vmem>>, vector<128x128xf32>
    %cst_86 = arith.constant dense<0.000000e+00> : vector<24x128xf32>
    %195 = tpu.matmul %193, %194, %cst_86 {dimension_numbers = #tpu.dot_dimension_numbers<[1], [0], [0], [1], [0, 0, 1, 1], [], []>} : vector<24x128xf32>, vector<128x128xf32>, vector<24x128xf32> -> vector<24x128xf32>
    %c0_87 = arith.constant 0 : index
    %c0_88 = arith.constant 0 : index
    %196 = vector.load %arg19[%c0_87, %c0_88] : memref<32x128xf32, #tpu.memory_space<vmem>>, vector<32x128xf32>
    %cst_89 = arith.constant dense<0.000000e+00> : vector<24x128xf32>
    %197 = tpu.matmul %15, %196, %cst_89 {dimension_numbers = #tpu.dot_dimension_numbers<[1], [0], [0], [1], [0, 0, 1, 1], [], []>} : vector<24x32xf32>, vector<32x128xf32>, vector<24x128xf32> -> vector<24x128xf32>
    %c0_90 = arith.constant 0 : index
    %c0_91 = arith.constant 0 : index
    %198 = vector.load %arg18[%c0_90, %c0_91] : memref<16x128xf32, #tpu.memory_space<vmem>>, vector<16x128xf32>
    %cst_92 = arith.constant dense<0.000000e+00> : vector<8x128xf32>
    %199 = tpu.matmul %32, %198, %cst_92 {dimension_numbers = #tpu.dot_dimension_numbers<[1], [0], [0], [1], [0, 0, 1, 1], [], []>} : vector<8x16xf32>, vector<16x128xf32>, vector<8x128xf32> -> vector<8x128xf32>
    %200 = arith.addf %195, %197 : vector<24x128xf32>
    %c0_93 = arith.constant 0 : index
    %c0_94 = arith.constant 0 : index
    %201 = vector.load %arg20[%c0_93, %c0_94] : memref<1x128xf32, #tpu.memory_space<vmem>>, vector<1x128xf32>
    %202 = vector.broadcast %201 : vector<1x128xf32> to vector<24x128xf32>
    %203 = arith.mulf %195, %202 : vector<24x128xf32>
    %c0_95 = arith.constant 0 : index
    %c0_96 = arith.constant 0 : index
    %204 = vector.load %arg21[%c0_95, %c0_96] : memref<1x128xf32, #tpu.memory_space<vmem>>, vector<1x128xf32>
    %205 = vector.broadcast %204 : vector<1x128xf32> to vector<24x128xf32>
    %206 = arith.mulf %197, %205 : vector<24x128xf32>
    %207 = arith.addf %203, %206 : vector<24x128xf32>
    %cst_97 = arith.constant dense<0.000000e+00> : vector<24x4xf32>
    %208 = tpu.matmul %207, %31, %cst_97 {dimension_numbers = #tpu.dot_dimension_numbers<[1], [0], [0], [1], [0, 0, 1, 1], [], []>} : vector<24x128xf32>, vector<128x4xf32>, vector<24x4xf32> -> vector<24x4xf32>
    %c0_98 = arith.constant 0 : index
    %c0_99 = arith.constant 0 : index
    %209 = vector.load %arg22[%c0_98, %c0_99] : memref<1x128xf32, #tpu.memory_space<vmem>>, vector<1x128xf32>
    %210 = vector.broadcast %209 : vector<1x128xf32> to vector<8x128xf32>
    %211 = arith.mulf %199, %210 : vector<8x128xf32>
    %cst_100 = arith.constant dense<0.000000e+00> : vector<8x4xf32>
    %212 = tpu.matmul %211, %31, %cst_100 {dimension_numbers = #tpu.dot_dimension_numbers<[1], [0], [0], [1], [0, 0, 1, 1], [], []>} : vector<8x128xf32>, vector<128x4xf32>, vector<8x4xf32> -> vector<8x4xf32>
    %cst_101 = arith.constant 0.000000e+00 : f32
    %213 = vector.broadcast %cst_101 : f32 to vector<8x32xf32>
    %214 = vector.extract_strided_slice %212 {offsets = [0, 0], sizes = [8, 1], strides = [1, 1]} : vector<8x4xf32> to vector<8x1xf32>
    %215 = vector.extract_strided_slice %208 {offsets = [0, 0], sizes = [24, 1], strides = [1, 1]} : vector<24x4xf32> to vector<24x1xf32>
    %216 = tpu.transpose %215, [1, 0] : vector<24x1xf32> -> vector<1x24xf32>
    %217 = vector.broadcast %214 : vector<8x1xf32> to vector<8x24xf32>
    %218 = vector.broadcast %216 : vector<1x24xf32> to vector<8x24xf32>
    %219 = arith.addf %217, %218 : vector<8x24xf32>
    %cst_102 = arith.constant 0.000000e+00 : f32
    %220 = vector.broadcast %cst_102 : f32 to vector<8x24xf32>
    %221 = arith.cmpf ogt, %219, %220 : vector<8x24xf32>
    %cst_103 = arith.constant 2.000000e-01 : f32
    %222 = vector.broadcast %cst_103 : f32 to vector<8x24xf32>
    %223 = arith.mulf %222, %219 : vector<8x24xf32>
    %224 = arith.select %221, %219, %223 : vector<8x24xi1>, vector<8x24xf32>
    %cst_104 = arith.constant 0.000000e+00 : f32
    %225 = vector.broadcast %cst_104 : f32 to vector<8x24xf32>
    %226 = arith.cmpf ogt, %18, %225 : vector<8x24xf32>
    %cst_105 = arith.constant -1.000000e+30 : f32
    %227 = vector.broadcast %cst_105 : f32 to vector<8x24xf32>
    %228 = arith.select %226, %224, %227 : vector<8x24xi1>, vector<8x24xf32>
    %cst_106 = arith.constant dense<0xFF800000> : vector<8xf32>
    %229 = vector.multi_reduction <maximumf>, %228, %cst_106 [1] : vector<8x24xf32> to vector<8xf32>
    %230 = vector.shape_cast %229 : vector<8xf32> to vector<8x1xf32>
    %cst_107 = arith.constant 0.000000e+00 : f32
    %231 = vector.broadcast %cst_107 : f32 to vector<8x24xf32>
    %232 = arith.cmpf ogt, %18, %231 : vector<8x24xf32>
    %233 = vector.broadcast %230 : vector<8x1xf32> to vector<8x24xf32>
    %234 = arith.subf %228, %233 : vector<8x24xf32>
    %235 = math.exp %234 : vector<8x24xf32>
    %cst_108 = arith.constant 0.000000e+00 : f32
    %236 = vector.broadcast %cst_108 : f32 to vector<8x24xf32>
    %237 = arith.select %232, %235, %236 : vector<8x24xi1>, vector<8x24xf32>
    %cst_109 = arith.constant dense<0.000000e+00> : vector<8xf32>
    %238 = vector.multi_reduction <add>, %237, %cst_109 [1] : vector<8x24xf32> to vector<8xf32>
    %239 = vector.shape_cast %238 : vector<8xf32> to vector<8x1xf32>
    %cst_110 = arith.constant 9.99999971E-10 : f32
    %240 = vector.broadcast %cst_110 : f32 to vector<8x1xf32>
    %241 = arith.maximumf %239, %240 : vector<8x1xf32>
    %242 = tpu.reciprocal %241 {approx = true} : vector<8x1xf32> -> vector<8x1xf32>
    %243 = vector.broadcast %242 : vector<8x1xf32> to vector<8x24xf32>
    %244 = arith.mulf %237, %243 : vector<8x24xf32>
    %245 = vector.extract_strided_slice %200 {offsets = [0, 0], sizes = [24, 32], strides = [1, 1]} : vector<24x128xf32> to vector<24x32xf32>
    %cst_111 = arith.constant dense<0.000000e+00> : vector<8x32xf32>
    %246 = tpu.matmul %244, %245, %cst_111 {dimension_numbers = #tpu.dot_dimension_numbers<[1], [0], [0], [1], [0, 0, 1, 1], [], []>} : vector<8x24xf32>, vector<24x32xf32>, vector<8x32xf32> -> vector<8x32xf32>
    %247 = arith.addf %213, %246 : vector<8x32xf32>
    %248 = vector.extract_strided_slice %212 {offsets = [0, 1], sizes = [8, 1], strides = [1, 1]} : vector<8x4xf32> to vector<8x1xf32>
    %249 = vector.extract_strided_slice %208 {offsets = [0, 1], sizes = [24, 1], strides = [1, 1]} : vector<24x4xf32> to vector<24x1xf32>
    %250 = tpu.transpose %249, [1, 0] : vector<24x1xf32> -> vector<1x24xf32>
    %251 = vector.broadcast %248 : vector<8x1xf32> to vector<8x24xf32>
    %252 = vector.broadcast %250 : vector<1x24xf32> to vector<8x24xf32>
    %253 = arith.addf %251, %252 : vector<8x24xf32>
    %cst_112 = arith.constant 0.000000e+00 : f32
    %254 = vector.broadcast %cst_112 : f32 to vector<8x24xf32>
    %255 = arith.cmpf ogt, %253, %254 : vector<8x24xf32>
    %cst_113 = arith.constant 2.000000e-01 : f32
    %256 = vector.broadcast %cst_113 : f32 to vector<8x24xf32>
    %257 = arith.mulf %256, %253 : vector<8x24xf32>
    %258 = arith.select %255, %253, %257 : vector<8x24xi1>, vector<8x24xf32>
    %cst_114 = arith.constant 0.000000e+00 : f32
    %259 = vector.broadcast %cst_114 : f32 to vector<8x24xf32>
    %260 = arith.cmpf ogt, %18, %259 : vector<8x24xf32>
    %cst_115 = arith.constant -1.000000e+30 : f32
    %261 = vector.broadcast %cst_115 : f32 to vector<8x24xf32>
    %262 = arith.select %260, %258, %261 : vector<8x24xi1>, vector<8x24xf32>
    %cst_116 = arith.constant dense<0xFF800000> : vector<8xf32>
    %263 = vector.multi_reduction <maximumf>, %262, %cst_116 [1] : vector<8x24xf32> to vector<8xf32>
    %264 = vector.shape_cast %263 : vector<8xf32> to vector<8x1xf32>
    %cst_117 = arith.constant 0.000000e+00 : f32
    %265 = vector.broadcast %cst_117 : f32 to vector<8x24xf32>
    %266 = arith.cmpf ogt, %18, %265 : vector<8x24xf32>
    %267 = vector.broadcast %264 : vector<8x1xf32> to vector<8x24xf32>
    %268 = arith.subf %262, %267 : vector<8x24xf32>
    %269 = math.exp %268 : vector<8x24xf32>
    %cst_118 = arith.constant 0.000000e+00 : f32
    %270 = vector.broadcast %cst_118 : f32 to vector<8x24xf32>
    %271 = arith.select %266, %269, %270 : vector<8x24xi1>, vector<8x24xf32>
    %cst_119 = arith.constant dense<0.000000e+00> : vector<8xf32>
    %272 = vector.multi_reduction <add>, %271, %cst_119 [1] : vector<8x24xf32> to vector<8xf32>
    %273 = vector.shape_cast %272 : vector<8xf32> to vector<8x1xf32>
    %cst_120 = arith.constant 9.99999971E-10 : f32
    %274 = vector.broadcast %cst_120 : f32 to vector<8x1xf32>
    %275 = arith.maximumf %273, %274 : vector<8x1xf32>
    %276 = tpu.reciprocal %275 {approx = true} : vector<8x1xf32> -> vector<8x1xf32>
    %277 = vector.broadcast %276 : vector<8x1xf32> to vector<8x24xf32>
    %278 = arith.mulf %271, %277 : vector<8x24xf32>
    %279 = vector.extract_strided_slice %200 {offsets = [0, 32], sizes = [24, 32], strides = [1, 1]} : vector<24x128xf32> to vector<24x32xf32>
    %cst_121 = arith.constant dense<0.000000e+00> : vector<8x32xf32>
    %280 = tpu.matmul %278, %279, %cst_121 {dimension_numbers = #tpu.dot_dimension_numbers<[1], [0], [0], [1], [0, 0, 1, 1], [], []>} : vector<8x24xf32>, vector<24x32xf32>, vector<8x32xf32> -> vector<8x32xf32>
    %281 = arith.addf %247, %280 : vector<8x32xf32>
    %282 = vector.extract_strided_slice %212 {offsets = [0, 2], sizes = [8, 1], strides = [1, 1]} : vector<8x4xf32> to vector<8x1xf32>
    %283 = vector.extract_strided_slice %208 {offsets = [0, 2], sizes = [24, 1], strides = [1, 1]} : vector<24x4xf32> to vector<24x1xf32>
    %284 = tpu.transpose %283, [1, 0] : vector<24x1xf32> -> vector<1x24xf32>
    %285 = vector.broadcast %282 : vector<8x1xf32> to vector<8x24xf32>
    %286 = vector.broadcast %284 : vector<1x24xf32> to vector<8x24xf32>
    %287 = arith.addf %285, %286 : vector<8x24xf32>
    %cst_122 = arith.constant 0.000000e+00 : f32
    %288 = vector.broadcast %cst_122 : f32 to vector<8x24xf32>
    %289 = arith.cmpf ogt, %287, %288 : vector<8x24xf32>
    %cst_123 = arith.constant 2.000000e-01 : f32
    %290 = vector.broadcast %cst_123 : f32 to vector<8x24xf32>
    %291 = arith.mulf %290, %287 : vector<8x24xf32>
    %292 = arith.select %289, %287, %291 : vector<8x24xi1>, vector<8x24xf32>
    %cst_124 = arith.constant 0.000000e+00 : f32
    %293 = vector.broadcast %cst_124 : f32 to vector<8x24xf32>
    %294 = arith.cmpf ogt, %18, %293 : vector<8x24xf32>
    %cst_125 = arith.constant -1.000000e+30 : f32
    %295 = vector.broadcast %cst_125 : f32 to vector<8x24xf32>
    %296 = arith.select %294, %292, %295 : vector<8x24xi1>, vector<8x24xf32>
    %cst_126 = arith.constant dense<0xFF800000> : vector<8xf32>
    %297 = vector.multi_reduction <maximumf>, %296, %cst_126 [1] : vector<8x24xf32> to vector<8xf32>
    %298 = vector.shape_cast %297 : vector<8xf32> to vector<8x1xf32>
    %cst_127 = arith.constant 0.000000e+00 : f32
    %299 = vector.broadcast %cst_127 : f32 to vector<8x24xf32>
    %300 = arith.cmpf ogt, %18, %299 : vector<8x24xf32>
    %301 = vector.broadcast %298 : vector<8x1xf32> to vector<8x24xf32>
    %302 = arith.subf %296, %301 : vector<8x24xf32>
    %303 = math.exp %302 : vector<8x24xf32>
    %cst_128 = arith.constant 0.000000e+00 : f32
    %304 = vector.broadcast %cst_128 : f32 to vector<8x24xf32>
    %305 = arith.select %300, %303, %304 : vector<8x24xi1>, vector<8x24xf32>
    %cst_129 = arith.constant dense<0.000000e+00> : vector<8xf32>
    %306 = vector.multi_reduction <add>, %305, %cst_129 [1] : vector<8x24xf32> to vector<8xf32>
    %307 = vector.shape_cast %306 : vector<8xf32> to vector<8x1xf32>
    %cst_130 = arith.constant 9.99999971E-10 : f32
    %308 = vector.broadcast %cst_130 : f32 to vector<8x1xf32>
    %309 = arith.maximumf %307, %308 : vector<8x1xf32>
    %310 = tpu.reciprocal %309 {approx = true} : vector<8x1xf32> -> vector<8x1xf32>
    %311 = vector.broadcast %310 : vector<8x1xf32> to vector<8x24xf32>
    %312 = arith.mulf %305, %311 : vector<8x24xf32>
    %313 = vector.extract_strided_slice %200 {offsets = [0, 64], sizes = [24, 32], strides = [1, 1]} : vector<24x128xf32> to vector<24x32xf32>
    %cst_131 = arith.constant dense<0.000000e+00> : vector<8x32xf32>
    %314 = tpu.matmul %312, %313, %cst_131 {dimension_numbers = #tpu.dot_dimension_numbers<[1], [0], [0], [1], [0, 0, 1, 1], [], []>} : vector<8x24xf32>, vector<24x32xf32>, vector<8x32xf32> -> vector<8x32xf32>
    %315 = arith.addf %281, %314 : vector<8x32xf32>
    %316 = vector.extract_strided_slice %212 {offsets = [0, 3], sizes = [8, 1], strides = [1, 1]} : vector<8x4xf32> to vector<8x1xf32>
    %317 = vector.extract_strided_slice %208 {offsets = [0, 3], sizes = [24, 1], strides = [1, 1]} : vector<24x4xf32> to vector<24x1xf32>
    %318 = tpu.transpose %317, [1, 0] : vector<24x1xf32> -> vector<1x24xf32>
    %319 = vector.broadcast %316 : vector<8x1xf32> to vector<8x24xf32>
    %320 = vector.broadcast %318 : vector<1x24xf32> to vector<8x24xf32>
    %321 = arith.addf %319, %320 : vector<8x24xf32>
    %cst_132 = arith.constant 0.000000e+00 : f32
    %322 = vector.broadcast %cst_132 : f32 to vector<8x24xf32>
    %323 = arith.cmpf ogt, %321, %322 : vector<8x24xf32>
    %cst_133 = arith.constant 2.000000e-01 : f32
    %324 = vector.broadcast %cst_133 : f32 to vector<8x24xf32>
    %325 = arith.mulf %324, %321 : vector<8x24xf32>
    %326 = arith.select %323, %321, %325 : vector<8x24xi1>, vector<8x24xf32>
    %cst_134 = arith.constant 0.000000e+00 : f32
    %327 = vector.broadcast %cst_134 : f32 to vector<8x24xf32>
    %328 = arith.cmpf ogt, %18, %327 : vector<8x24xf32>
    %cst_135 = arith.constant -1.000000e+30 : f32
    %329 = vector.broadcast %cst_135 : f32 to vector<8x24xf32>
    %330 = arith.select %328, %326, %329 : vector<8x24xi1>, vector<8x24xf32>
    %cst_136 = arith.constant dense<0xFF800000> : vector<8xf32>
    %331 = vector.multi_reduction <maximumf>, %330, %cst_136 [1] : vector<8x24xf32> to vector<8xf32>
    %332 = vector.shape_cast %331 : vector<8xf32> to vector<8x1xf32>
    %cst_137 = arith.constant 0.000000e+00 : f32
    %333 = vector.broadcast %cst_137 : f32 to vector<8x24xf32>
    %334 = arith.cmpf ogt, %18, %333 : vector<8x24xf32>
    %335 = vector.broadcast %332 : vector<8x1xf32> to vector<8x24xf32>
    %336 = arith.subf %330, %335 : vector<8x24xf32>
    %337 = math.exp %336 : vector<8x24xf32>
    %cst_138 = arith.constant 0.000000e+00 : f32
    %338 = vector.broadcast %cst_138 : f32 to vector<8x24xf32>
    %339 = arith.select %334, %337, %338 : vector<8x24xi1>, vector<8x24xf32>
    %cst_139 = arith.constant dense<0.000000e+00> : vector<8xf32>
    %340 = vector.multi_reduction <add>, %339, %cst_139 [1] : vector<8x24xf32> to vector<8xf32>
    %341 = vector.shape_cast %340 : vector<8xf32> to vector<8x1xf32>
    %cst_140 = arith.constant 9.99999971E-10 : f32
    %342 = vector.broadcast %cst_140 : f32 to vector<8x1xf32>
    %343 = arith.maximumf %341, %342 : vector<8x1xf32>
    %344 = tpu.reciprocal %343 {approx = true} : vector<8x1xf32> -> vector<8x1xf32>
    %345 = vector.broadcast %344 : vector<8x1xf32> to vector<8x24xf32>
    %346 = arith.mulf %339, %345 : vector<8x24xf32>
    %347 = vector.extract_strided_slice %200 {offsets = [0, 96], sizes = [24, 32], strides = [1, 1]} : vector<24x128xf32> to vector<24x32xf32>
    %cst_141 = arith.constant dense<0.000000e+00> : vector<8x32xf32>
    %348 = tpu.matmul %346, %347, %cst_141 {dimension_numbers = #tpu.dot_dimension_numbers<[1], [0], [0], [1], [0, 0, 1, 1], [], []>} : vector<8x24xf32>, vector<24x32xf32>, vector<8x32xf32> -> vector<8x32xf32>
    %349 = arith.addf %315, %348 : vector<8x32xf32>
    %cst_142 = arith.constant 2.500000e-01 : f32
    %350 = vector.broadcast %cst_142 : f32 to vector<8x32xf32>
    %351 = arith.mulf %349, %350 : vector<8x32xf32>
    %cst_143 = arith.constant 0.000000e+00 : f32
    %352 = vector.broadcast %cst_143 : f32 to vector<8x32xf32>
    %353 = arith.maximumf %351, %352 : vector<8x32xf32>
    %cst_144 = arith.constant dense<0.000000e+00> : vector<24x32xf32>
    %354 = tpu.matmul %16, %353, %cst_144 {dimension_numbers = #tpu.dot_dimension_numbers<[1], [0], [0], [1], [0, 0, 1, 1], [], []>} : vector<24x8xf32>, vector<8x32xf32>, vector<24x32xf32> -> vector<24x32xf32>
    %cst_145 = arith.constant dense<0.000000e+00> : vector<24x32xf32>
    %355 = tpu.matmul %17, %353, %cst_145 {dimension_numbers = #tpu.dot_dimension_numbers<[1], [0], [0], [1], [0, 0, 1, 1], [], []>} : vector<24x8xf32>, vector<8x32xf32>, vector<24x32xf32> -> vector<24x32xf32>
    %356 = tpu.concatenate %354, %355, %15 in 1 : vector<24x32xf32>, vector<24x32xf32>, vector<24x32xf32> -> vector<24x96xf32>
    %c0_146 = arith.constant 0 : index
    %c0_147 = arith.constant 0 : index
    %357 = vector.load %arg23[%c0_146, %c0_147] : memref<96x32xf32, #tpu.memory_space<vmem>>, vector<96x32xf32>
    %cst_148 = arith.constant dense<0.000000e+00> : vector<24x32xf32>
    %358 = tpu.matmul %356, %357, %cst_148 {dimension_numbers = #tpu.dot_dimension_numbers<[1], [0], [0], [1], [0, 0, 1, 1], [], []>} : vector<24x96xf32>, vector<96x32xf32>, vector<24x32xf32> -> vector<24x32xf32>
    %c0_149 = arith.constant 0 : index
    %c0_150 = arith.constant 0 : index
    %359 = vector.load %arg24[%c0_149, %c0_150] : memref<1x32xf32, #tpu.memory_space<vmem>>, vector<1x32xf32>
    %360 = vector.broadcast %359 : vector<1x32xf32> to vector<24x32xf32>
    %361 = arith.addf %358, %360 : vector<24x32xf32>
    %cst_151 = arith.constant 0.000000e+00 : f32
    %362 = vector.broadcast %cst_151 : f32 to vector<24x32xf32>
    %363 = arith.maximumf %361, %362 : vector<24x32xf32>
    %c0_152 = arith.constant 0 : index
    %c0_153 = arith.constant 0 : index
    %364 = vector.load %arg25[%c0_152, %c0_153] : memref<32x128xf32, #tpu.memory_space<vmem>>, vector<32x128xf32>
    %cst_154 = arith.constant dense<0.000000e+00> : vector<24x128xf32>
    %365 = tpu.matmul %363, %364, %cst_154 {dimension_numbers = #tpu.dot_dimension_numbers<[1], [0], [0], [1], [0, 0, 1, 1], [], []>} : vector<24x32xf32>, vector<32x128xf32>, vector<24x128xf32> -> vector<24x128xf32>
    %c0_155 = arith.constant 0 : index
    %c0_156 = arith.constant 0 : index
    %366 = vector.load %arg26[%c0_155, %c0_156] : memref<1x128xf32, #tpu.memory_space<vmem>>, vector<1x128xf32>
    %367 = vector.broadcast %366 : vector<1x128xf32> to vector<24x128xf32>
    %368 = arith.mulf %365, %367 : vector<24x128xf32>
    %cst_157 = arith.constant dense<0.000000e+00> : vector<24x4xf32>
    %369 = tpu.matmul %368, %31, %cst_157 {dimension_numbers = #tpu.dot_dimension_numbers<[1], [0], [0], [1], [0, 0, 1, 1], [], []>} : vector<24x128xf32>, vector<128x4xf32>, vector<24x4xf32> -> vector<24x4xf32>
    %c0_158 = arith.constant 0 : index
    %c0_159 = arith.constant 0 : index
    %370 = vector.load %arg27[%c0_158, %c0_159] : memref<1x128xf32, #tpu.memory_space<vmem>>, vector<1x128xf32>
    %371 = vector.broadcast %370 : vector<1x128xf32> to vector<24x128xf32>
    %372 = arith.mulf %365, %371 : vector<24x128xf32>
    %cst_160 = arith.constant dense<0.000000e+00> : vector<24x4xf32>
    %373 = tpu.matmul %372, %31, %cst_160 {dimension_numbers = #tpu.dot_dimension_numbers<[1], [0], [0], [1], [0, 0, 1, 1], [], []>} : vector<24x128xf32>, vector<128x4xf32>, vector<24x4xf32> -> vector<24x4xf32>
    %374 = vector.extract_strided_slice %373 {offsets = [0, 0], sizes = [24, 1], strides = [1, 1]} : vector<24x4xf32> to vector<24x1xf32>
    %375 = vector.extract_strided_slice %369 {offsets = [0, 0], sizes = [24, 1], strides = [1, 1]} : vector<24x4xf32> to vector<24x1xf32>
    %376 = tpu.transpose %375, [1, 0] : vector<24x1xf32> -> vector<1x24xf32>
    %377 = vector.broadcast %374 : vector<24x1xf32> to vector<24x24xf32>
    %378 = vector.broadcast %376 : vector<1x24xf32> to vector<24x24xf32>
    %379 = arith.addf %377, %378 : vector<24x24xf32>
    %cst_161 = arith.constant 0.000000e+00 : f32
    %380 = vector.broadcast %cst_161 : f32 to vector<24x24xf32>
    %381 = arith.cmpf ogt, %379, %380 : vector<24x24xf32>
    %cst_162 = arith.constant 2.000000e-01 : f32
    %382 = vector.broadcast %cst_162 : f32 to vector<24x24xf32>
    %383 = arith.mulf %382, %379 : vector<24x24xf32>
    %384 = arith.select %381, %379, %383 : vector<24x24xi1>, vector<24x24xf32>
    %c0_163 = arith.constant 0 : index
    %c0_164 = arith.constant 0 : index
    %c0_165 = arith.constant 0 : index
    %385 = vector.load %arg5[%c0_163, %c0_164, %c0_165] : memref<4x24x24xf32, #tpu.memory_space<vmem>>, vector<1x24x24xf32>
    %386 = vector.shape_cast %385 : vector<1x24x24xf32> to vector<24x24xf32>
    %cst_166 = arith.constant 0.000000e+00 : f32
    %387 = vector.broadcast %cst_166 : f32 to vector<24x24xf32>
    %388 = arith.cmpf ogt, %386, %387 : vector<24x24xf32>
    %cst_167 = arith.constant -1.000000e+30 : f32
    %389 = vector.broadcast %cst_167 : f32 to vector<24x24xf32>
    %390 = arith.select %388, %384, %389 : vector<24x24xi1>, vector<24x24xf32>
    %cst_168 = arith.constant dense<0xFF800000> : vector<24xf32>
    %391 = vector.multi_reduction <maximumf>, %390, %cst_168 [1] : vector<24x24xf32> to vector<24xf32>
    %392 = vector.shape_cast %391 : vector<24xf32> to vector<24x1xf32>
    %cst_169 = arith.constant 0.000000e+00 : f32
    %393 = vector.broadcast %cst_169 : f32 to vector<24x24xf32>
    %394 = arith.cmpf ogt, %386, %393 : vector<24x24xf32>
    %395 = vector.broadcast %392 : vector<24x1xf32> to vector<24x24xf32>
    %396 = arith.subf %390, %395 : vector<24x24xf32>
    %397 = math.exp %396 : vector<24x24xf32>
    %cst_170 = arith.constant 0.000000e+00 : f32
    %398 = vector.broadcast %cst_170 : f32 to vector<24x24xf32>
    %399 = arith.select %394, %397, %398 : vector<24x24xi1>, vector<24x24xf32>
    %cst_171 = arith.constant dense<0.000000e+00> : vector<24xf32>
    %400 = vector.multi_reduction <add>, %399, %cst_171 [1] : vector<24x24xf32> to vector<24xf32>
    %401 = vector.shape_cast %400 : vector<24xf32> to vector<24x1xf32>
    %cst_172 = arith.constant 9.99999971E-10 : f32
    %402 = vector.broadcast %cst_172 : f32 to vector<24x1xf32>
    %403 = arith.maximumf %401, %402 : vector<24x1xf32>
    %404 = tpu.reciprocal %403 {approx = true} : vector<24x1xf32> -> vector<24x1xf32>
    %405 = vector.broadcast %404 : vector<24x1xf32> to vector<24x24xf32>
    %406 = arith.mulf %399, %405 : vector<24x24xf32>
    %407 = vector.extract_strided_slice %365 {offsets = [0, 0], sizes = [24, 32], strides = [1, 1]} : vector<24x128xf32> to vector<24x32xf32>
    %cst_173 = arith.constant dense<0.000000e+00> : vector<24x32xf32>
    %408 = tpu.matmul %406, %407, %cst_173 {dimension_numbers = #tpu.dot_dimension_numbers<[1], [0], [0], [1], [0, 0, 1, 1], [], []>} : vector<24x24xf32>, vector<24x32xf32>, vector<24x32xf32> -> vector<24x32xf32>
    %409 = vector.extract_strided_slice %373 {offsets = [0, 1], sizes = [24, 1], strides = [1, 1]} : vector<24x4xf32> to vector<24x1xf32>
    %410 = vector.extract_strided_slice %369 {offsets = [0, 1], sizes = [24, 1], strides = [1, 1]} : vector<24x4xf32> to vector<24x1xf32>
    %411 = tpu.transpose %410, [1, 0] : vector<24x1xf32> -> vector<1x24xf32>
    %412 = vector.broadcast %409 : vector<24x1xf32> to vector<24x24xf32>
    %413 = vector.broadcast %411 : vector<1x24xf32> to vector<24x24xf32>
    %414 = arith.addf %412, %413 : vector<24x24xf32>
    %cst_174 = arith.constant 0.000000e+00 : f32
    %415 = vector.broadcast %cst_174 : f32 to vector<24x24xf32>
    %416 = arith.cmpf ogt, %414, %415 : vector<24x24xf32>
    %cst_175 = arith.constant 2.000000e-01 : f32
    %417 = vector.broadcast %cst_175 : f32 to vector<24x24xf32>
    %418 = arith.mulf %417, %414 : vector<24x24xf32>
    %419 = arith.select %416, %414, %418 : vector<24x24xi1>, vector<24x24xf32>
    %c1_176 = arith.constant 1 : index
    %c0_177 = arith.constant 0 : index
    %c0_178 = arith.constant 0 : index
    %420 = vector.load %arg5[%c1_176, %c0_177, %c0_178] : memref<4x24x24xf32, #tpu.memory_space<vmem>>, vector<1x24x24xf32>
    %421 = vector.shape_cast %420 : vector<1x24x24xf32> to vector<24x24xf32>
    %cst_179 = arith.constant 0.000000e+00 : f32
    %422 = vector.broadcast %cst_179 : f32 to vector<24x24xf32>
    %423 = arith.cmpf ogt, %421, %422 : vector<24x24xf32>
    %cst_180 = arith.constant -1.000000e+30 : f32
    %424 = vector.broadcast %cst_180 : f32 to vector<24x24xf32>
    %425 = arith.select %423, %419, %424 : vector<24x24xi1>, vector<24x24xf32>
    %cst_181 = arith.constant dense<0xFF800000> : vector<24xf32>
    %426 = vector.multi_reduction <maximumf>, %425, %cst_181 [1] : vector<24x24xf32> to vector<24xf32>
    %427 = vector.shape_cast %426 : vector<24xf32> to vector<24x1xf32>
    %cst_182 = arith.constant 0.000000e+00 : f32
    %428 = vector.broadcast %cst_182 : f32 to vector<24x24xf32>
    %429 = arith.cmpf ogt, %421, %428 : vector<24x24xf32>
    %430 = vector.broadcast %427 : vector<24x1xf32> to vector<24x24xf32>
    %431 = arith.subf %425, %430 : vector<24x24xf32>
    %432 = math.exp %431 : vector<24x24xf32>
    %cst_183 = arith.constant 0.000000e+00 : f32
    %433 = vector.broadcast %cst_183 : f32 to vector<24x24xf32>
    %434 = arith.select %429, %432, %433 : vector<24x24xi1>, vector<24x24xf32>
    %cst_184 = arith.constant dense<0.000000e+00> : vector<24xf32>
    %435 = vector.multi_reduction <add>, %434, %cst_184 [1] : vector<24x24xf32> to vector<24xf32>
    %436 = vector.shape_cast %435 : vector<24xf32> to vector<24x1xf32>
    %cst_185 = arith.constant 9.99999971E-10 : f32
    %437 = vector.broadcast %cst_185 : f32 to vector<24x1xf32>
    %438 = arith.maximumf %436, %437 : vector<24x1xf32>
    %439 = tpu.reciprocal %438 {approx = true} : vector<24x1xf32> -> vector<24x1xf32>
    %440 = vector.broadcast %439 : vector<24x1xf32> to vector<24x24xf32>
    %441 = arith.mulf %434, %440 : vector<24x24xf32>
    %442 = vector.extract_strided_slice %365 {offsets = [0, 32], sizes = [24, 32], strides = [1, 1]} : vector<24x128xf32> to vector<24x32xf32>
    %cst_186 = arith.constant dense<0.000000e+00> : vector<24x32xf32>
    %443 = tpu.matmul %441, %442, %cst_186 {dimension_numbers = #tpu.dot_dimension_numbers<[1], [0], [0], [1], [0, 0, 1, 1], [], []>} : vector<24x24xf32>, vector<24x32xf32>, vector<24x32xf32> -> vector<24x32xf32>
    %444 = vector.extract_strided_slice %373 {offsets = [0, 2], sizes = [24, 1], strides = [1, 1]} : vector<24x4xf32> to vector<24x1xf32>
    %445 = vector.extract_strided_slice %369 {offsets = [0, 2], sizes = [24, 1], strides = [1, 1]} : vector<24x4xf32> to vector<24x1xf32>
    %446 = tpu.transpose %445, [1, 0] : vector<24x1xf32> -> vector<1x24xf32>
    %447 = vector.broadcast %444 : vector<24x1xf32> to vector<24x24xf32>
    %448 = vector.broadcast %446 : vector<1x24xf32> to vector<24x24xf32>
    %449 = arith.addf %447, %448 : vector<24x24xf32>
    %cst_187 = arith.constant 0.000000e+00 : f32
    %450 = vector.broadcast %cst_187 : f32 to vector<24x24xf32>
    %451 = arith.cmpf ogt, %449, %450 : vector<24x24xf32>
    %cst_188 = arith.constant 2.000000e-01 : f32
    %452 = vector.broadcast %cst_188 : f32 to vector<24x24xf32>
    %453 = arith.mulf %452, %449 : vector<24x24xf32>
    %454 = arith.select %451, %449, %453 : vector<24x24xi1>, vector<24x24xf32>
    %c2_189 = arith.constant 2 : index
    %c0_190 = arith.constant 0 : index
    %c0_191 = arith.constant 0 : index
    %455 = vector.load %arg5[%c2_189, %c0_190, %c0_191] : memref<4x24x24xf32, #tpu.memory_space<vmem>>, vector<1x24x24xf32>
    %456 = vector.shape_cast %455 : vector<1x24x24xf32> to vector<24x24xf32>
    %cst_192 = arith.constant 0.000000e+00 : f32
    %457 = vector.broadcast %cst_192 : f32 to vector<24x24xf32>
    %458 = arith.cmpf ogt, %456, %457 : vector<24x24xf32>
    %cst_193 = arith.constant -1.000000e+30 : f32
    %459 = vector.broadcast %cst_193 : f32 to vector<24x24xf32>
    %460 = arith.select %458, %454, %459 : vector<24x24xi1>, vector<24x24xf32>
    %cst_194 = arith.constant dense<0xFF800000> : vector<24xf32>
    %461 = vector.multi_reduction <maximumf>, %460, %cst_194 [1] : vector<24x24xf32> to vector<24xf32>
    %462 = vector.shape_cast %461 : vector<24xf32> to vector<24x1xf32>
    %cst_195 = arith.constant 0.000000e+00 : f32
    %463 = vector.broadcast %cst_195 : f32 to vector<24x24xf32>
    %464 = arith.cmpf ogt, %456, %463 : vector<24x24xf32>
    %465 = vector.broadcast %462 : vector<24x1xf32> to vector<24x24xf32>
    %466 = arith.subf %460, %465 : vector<24x24xf32>
    %467 = math.exp %466 : vector<24x24xf32>
    %cst_196 = arith.constant 0.000000e+00 : f32
    %468 = vector.broadcast %cst_196 : f32 to vector<24x24xf32>
    %469 = arith.select %464, %467, %468 : vector<24x24xi1>, vector<24x24xf32>
    %cst_197 = arith.constant dense<0.000000e+00> : vector<24xf32>
    %470 = vector.multi_reduction <add>, %469, %cst_197 [1] : vector<24x24xf32> to vector<24xf32>
    %471 = vector.shape_cast %470 : vector<24xf32> to vector<24x1xf32>
    %cst_198 = arith.constant 9.99999971E-10 : f32
    %472 = vector.broadcast %cst_198 : f32 to vector<24x1xf32>
    %473 = arith.maximumf %471, %472 : vector<24x1xf32>
    %474 = tpu.reciprocal %473 {approx = true} : vector<24x1xf32> -> vector<24x1xf32>
    %475 = vector.broadcast %474 : vector<24x1xf32> to vector<24x24xf32>
    %476 = arith.mulf %469, %475 : vector<24x24xf32>
    %477 = vector.extract_strided_slice %365 {offsets = [0, 64], sizes = [24, 32], strides = [1, 1]} : vector<24x128xf32> to vector<24x32xf32>
    %cst_199 = arith.constant dense<0.000000e+00> : vector<24x32xf32>
    %478 = tpu.matmul %476, %477, %cst_199 {dimension_numbers = #tpu.dot_dimension_numbers<[1], [0], [0], [1], [0, 0, 1, 1], [], []>} : vector<24x24xf32>, vector<24x32xf32>, vector<24x32xf32> -> vector<24x32xf32>
    %479 = vector.extract_strided_slice %373 {offsets = [0, 3], sizes = [24, 1], strides = [1, 1]} : vector<24x4xf32> to vector<24x1xf32>
    %480 = vector.extract_strided_slice %369 {offsets = [0, 3], sizes = [24, 1], strides = [1, 1]} : vector<24x4xf32> to vector<24x1xf32>
    %481 = tpu.transpose %480, [1, 0] : vector<24x1xf32> -> vector<1x24xf32>
    %482 = vector.broadcast %479 : vector<24x1xf32> to vector<24x24xf32>
    %483 = vector.broadcast %481 : vector<1x24xf32> to vector<24x24xf32>
    %484 = arith.addf %482, %483 : vector<24x24xf32>
    %cst_200 = arith.constant 0.000000e+00 : f32
    %485 = vector.broadcast %cst_200 : f32 to vector<24x24xf32>
    %486 = arith.cmpf ogt, %484, %485 : vector<24x24xf32>
    %cst_201 = arith.constant 2.000000e-01 : f32
    %487 = vector.broadcast %cst_201 : f32 to vector<24x24xf32>
    %488 = arith.mulf %487, %484 : vector<24x24xf32>
    %489 = arith.select %486, %484, %488 : vector<24x24xi1>, vector<24x24xf32>
    %c3_202 = arith.constant 3 : index
    %c0_203 = arith.constant 0 : index
    %c0_204 = arith.constant 0 : index
    %490 = vector.load %arg5[%c3_202, %c0_203, %c0_204] : memref<4x24x24xf32, #tpu.memory_space<vmem>>, vector<1x24x24xf32>
    %491 = vector.shape_cast %490 : vector<1x24x24xf32> to vector<24x24xf32>
    %cst_205 = arith.constant 0.000000e+00 : f32
    %492 = vector.broadcast %cst_205 : f32 to vector<24x24xf32>
    %493 = arith.cmpf ogt, %491, %492 : vector<24x24xf32>
    %cst_206 = arith.constant -1.000000e+30 : f32
    %494 = vector.broadcast %cst_206 : f32 to vector<24x24xf32>
    %495 = arith.select %493, %489, %494 : vector<24x24xi1>, vector<24x24xf32>
    %cst_207 = arith.constant dense<0xFF800000> : vector<24xf32>
    %496 = vector.multi_reduction <maximumf>, %495, %cst_207 [1] : vector<24x24xf32> to vector<24xf32>
    %497 = vector.shape_cast %496 : vector<24xf32> to vector<24x1xf32>
    %cst_208 = arith.constant 0.000000e+00 : f32
    %498 = vector.broadcast %cst_208 : f32 to vector<24x24xf32>
    %499 = arith.cmpf ogt, %491, %498 : vector<24x24xf32>
    %500 = vector.broadcast %497 : vector<24x1xf32> to vector<24x24xf32>
    %501 = arith.subf %495, %500 : vector<24x24xf32>
    %502 = math.exp %501 : vector<24x24xf32>
    %cst_209 = arith.constant 0.000000e+00 : f32
    %503 = vector.broadcast %cst_209 : f32 to vector<24x24xf32>
    %504 = arith.select %499, %502, %503 : vector<24x24xi1>, vector<24x24xf32>
    %cst_210 = arith.constant dense<0.000000e+00> : vector<24xf32>
    %505 = vector.multi_reduction <add>, %504, %cst_210 [1] : vector<24x24xf32> to vector<24xf32>
    %506 = vector.shape_cast %505 : vector<24xf32> to vector<24x1xf32>
    %cst_211 = arith.constant 9.99999971E-10 : f32
    %507 = vector.broadcast %cst_211 : f32 to vector<24x1xf32>
    %508 = arith.maximumf %506, %507 : vector<24x1xf32>
    %509 = tpu.reciprocal %508 {approx = true} : vector<24x1xf32> -> vector<24x1xf32>
    %510 = vector.broadcast %509 : vector<24x1xf32> to vector<24x24xf32>
    %511 = arith.mulf %504, %510 : vector<24x24xf32>
    %512 = vector.extract_strided_slice %365 {offsets = [0, 96], sizes = [24, 32], strides = [1, 1]} : vector<24x128xf32> to vector<24x32xf32>
    %cst_212 = arith.constant dense<0.000000e+00> : vector<24x32xf32>
    %513 = tpu.matmul %511, %512, %cst_212 {dimension_numbers = #tpu.dot_dimension_numbers<[1], [0], [0], [1], [0, 0, 1, 1], [], []>} : vector<24x24xf32>, vector<24x32xf32>, vector<24x32xf32> -> vector<24x32xf32>
    %514 = tpu.concatenate %408, %443, %478, %513 in 1 : vector<24x32xf32>, vector<24x32xf32>, vector<24x32xf32>, vector<24x32xf32> -> vector<24x128xf32>
    %c0_213 = arith.constant 0 : index
    %c0_214 = arith.constant 0 : index
    %515 = vector.load %arg28[%c0_213, %c0_214] : memref<128x128xf32, #tpu.memory_space<vmem>>, vector<128x128xf32>
    %cst_215 = arith.constant dense<0.000000e+00> : vector<24x128xf32>
    %516 = tpu.matmul %514, %515, %cst_215 {dimension_numbers = #tpu.dot_dimension_numbers<[1], [0], [0], [1], [0, 0, 1, 1], [], []>} : vector<24x128xf32>, vector<128x128xf32>, vector<24x128xf32> -> vector<24x128xf32>
    %c0_216 = arith.constant 0 : index
    %c0_217 = arith.constant 0 : index
    %517 = vector.load %arg30[%c0_216, %c0_217] : memref<32x128xf32, #tpu.memory_space<vmem>>, vector<32x128xf32>
    %cst_218 = arith.constant dense<0.000000e+00> : vector<24x128xf32>
    %518 = tpu.matmul %15, %517, %cst_218 {dimension_numbers = #tpu.dot_dimension_numbers<[1], [0], [0], [1], [0, 0, 1, 1], [], []>} : vector<24x32xf32>, vector<32x128xf32>, vector<24x128xf32> -> vector<24x128xf32>
    %c0_219 = arith.constant 0 : index
    %c0_220 = arith.constant 0 : index
    %519 = vector.load %arg29[%c0_219, %c0_220] : memref<32x128xf32, #tpu.memory_space<vmem>>, vector<32x128xf32>
    %cst_221 = arith.constant dense<0.000000e+00> : vector<8x128xf32>
    %520 = tpu.matmul %353, %519, %cst_221 {dimension_numbers = #tpu.dot_dimension_numbers<[1], [0], [0], [1], [0, 0, 1, 1], [], []>} : vector<8x32xf32>, vector<32x128xf32>, vector<8x128xf32> -> vector<8x128xf32>
    %521 = arith.addf %516, %518 : vector<24x128xf32>
    %c0_222 = arith.constant 0 : index
    %c0_223 = arith.constant 0 : index
    %522 = vector.load %arg31[%c0_222, %c0_223] : memref<1x128xf32, #tpu.memory_space<vmem>>, vector<1x128xf32>
    %523 = vector.broadcast %522 : vector<1x128xf32> to vector<24x128xf32>
    %524 = arith.mulf %516, %523 : vector<24x128xf32>
    %c0_224 = arith.constant 0 : index
    %c0_225 = arith.constant 0 : index
    %525 = vector.load %arg32[%c0_224, %c0_225] : memref<1x128xf32, #tpu.memory_space<vmem>>, vector<1x128xf32>
    %526 = vector.broadcast %525 : vector<1x128xf32> to vector<24x128xf32>
    %527 = arith.mulf %518, %526 : vector<24x128xf32>
    %528 = arith.addf %524, %527 : vector<24x128xf32>
    %cst_226 = arith.constant dense<0.000000e+00> : vector<24x4xf32>
    %529 = tpu.matmul %528, %31, %cst_226 {dimension_numbers = #tpu.dot_dimension_numbers<[1], [0], [0], [1], [0, 0, 1, 1], [], []>} : vector<24x128xf32>, vector<128x4xf32>, vector<24x4xf32> -> vector<24x4xf32>
    %c0_227 = arith.constant 0 : index
    %c0_228 = arith.constant 0 : index
    %530 = vector.load %arg33[%c0_227, %c0_228] : memref<1x128xf32, #tpu.memory_space<vmem>>, vector<1x128xf32>
    %531 = vector.broadcast %530 : vector<1x128xf32> to vector<8x128xf32>
    %532 = arith.mulf %520, %531 : vector<8x128xf32>
    %cst_229 = arith.constant dense<0.000000e+00> : vector<8x4xf32>
    %533 = tpu.matmul %532, %31, %cst_229 {dimension_numbers = #tpu.dot_dimension_numbers<[1], [0], [0], [1], [0, 0, 1, 1], [], []>} : vector<8x128xf32>, vector<128x4xf32>, vector<8x4xf32> -> vector<8x4xf32>
    %cst_230 = arith.constant 0.000000e+00 : f32
    %534 = vector.broadcast %cst_230 : f32 to vector<8x32xf32>
    %535 = vector.extract_strided_slice %533 {offsets = [0, 0], sizes = [8, 1], strides = [1, 1]} : vector<8x4xf32> to vector<8x1xf32>
    %536 = vector.extract_strided_slice %529 {offsets = [0, 0], sizes = [24, 1], strides = [1, 1]} : vector<24x4xf32> to vector<24x1xf32>
    %537 = tpu.transpose %536, [1, 0] : vector<24x1xf32> -> vector<1x24xf32>
    %538 = vector.broadcast %535 : vector<8x1xf32> to vector<8x24xf32>
    %539 = vector.broadcast %537 : vector<1x24xf32> to vector<8x24xf32>
    %540 = arith.addf %538, %539 : vector<8x24xf32>
    %cst_231 = arith.constant 0.000000e+00 : f32
    %541 = vector.broadcast %cst_231 : f32 to vector<8x24xf32>
    %542 = arith.cmpf ogt, %540, %541 : vector<8x24xf32>
    %cst_232 = arith.constant 2.000000e-01 : f32
    %543 = vector.broadcast %cst_232 : f32 to vector<8x24xf32>
    %544 = arith.mulf %543, %540 : vector<8x24xf32>
    %545 = arith.select %542, %540, %544 : vector<8x24xi1>, vector<8x24xf32>
    %cst_233 = arith.constant 0.000000e+00 : f32
    %546 = vector.broadcast %cst_233 : f32 to vector<8x24xf32>
    %547 = arith.cmpf ogt, %18, %546 : vector<8x24xf32>
    %cst_234 = arith.constant -1.000000e+30 : f32
    %548 = vector.broadcast %cst_234 : f32 to vector<8x24xf32>
    %549 = arith.select %547, %545, %548 : vector<8x24xi1>, vector<8x24xf32>
    %cst_235 = arith.constant dense<0xFF800000> : vector<8xf32>
    %550 = vector.multi_reduction <maximumf>, %549, %cst_235 [1] : vector<8x24xf32> to vector<8xf32>
    %551 = vector.shape_cast %550 : vector<8xf32> to vector<8x1xf32>
    %cst_236 = arith.constant 0.000000e+00 : f32
    %552 = vector.broadcast %cst_236 : f32 to vector<8x24xf32>
    %553 = arith.cmpf ogt, %18, %552 : vector<8x24xf32>
    %554 = vector.broadcast %551 : vector<8x1xf32> to vector<8x24xf32>
    %555 = arith.subf %549, %554 : vector<8x24xf32>
    %556 = math.exp %555 : vector<8x24xf32>
    %cst_237 = arith.constant 0.000000e+00 : f32
    %557 = vector.broadcast %cst_237 : f32 to vector<8x24xf32>
    %558 = arith.select %553, %556, %557 : vector<8x24xi1>, vector<8x24xf32>
    %cst_238 = arith.constant dense<0.000000e+00> : vector<8xf32>
    %559 = vector.multi_reduction <add>, %558, %cst_238 [1] : vector<8x24xf32> to vector<8xf32>
    %560 = vector.shape_cast %559 : vector<8xf32> to vector<8x1xf32>
    %cst_239 = arith.constant 9.99999971E-10 : f32
    %561 = vector.broadcast %cst_239 : f32 to vector<8x1xf32>
    %562 = arith.maximumf %560, %561 : vector<8x1xf32>
    %563 = tpu.reciprocal %562 {approx = true} : vector<8x1xf32> -> vector<8x1xf32>
    %564 = vector.broadcast %563 : vector<8x1xf32> to vector<8x24xf32>
    %565 = arith.mulf %558, %564 : vector<8x24xf32>
    %566 = vector.extract_strided_slice %521 {offsets = [0, 0], sizes = [24, 32], strides = [1, 1]} : vector<24x128xf32> to vector<24x32xf32>
    %cst_240 = arith.constant dense<0.000000e+00> : vector<8x32xf32>
    %567 = tpu.matmul %565, %566, %cst_240 {dimension_numbers = #tpu.dot_dimension_numbers<[1], [0], [0], [1], [0, 0, 1, 1], [], []>} : vector<8x24xf32>, vector<24x32xf32>, vector<8x32xf32> -> vector<8x32xf32>
    %568 = arith.addf %534, %567 : vector<8x32xf32>
    %569 = vector.extract_strided_slice %533 {offsets = [0, 1], sizes = [8, 1], strides = [1, 1]} : vector<8x4xf32> to vector<8x1xf32>
    %570 = vector.extract_strided_slice %529 {offsets = [0, 1], sizes = [24, 1], strides = [1, 1]} : vector<24x4xf32> to vector<24x1xf32>
    %571 = tpu.transpose %570, [1, 0] : vector<24x1xf32> -> vector<1x24xf32>
    %572 = vector.broadcast %569 : vector<8x1xf32> to vector<8x24xf32>
    %573 = vector.broadcast %571 : vector<1x24xf32> to vector<8x24xf32>
    %574 = arith.addf %572, %573 : vector<8x24xf32>
    %cst_241 = arith.constant 0.000000e+00 : f32
    %575 = vector.broadcast %cst_241 : f32 to vector<8x24xf32>
    %576 = arith.cmpf ogt, %574, %575 : vector<8x24xf32>
    %cst_242 = arith.constant 2.000000e-01 : f32
    %577 = vector.broadcast %cst_242 : f32 to vector<8x24xf32>
    %578 = arith.mulf %577, %574 : vector<8x24xf32>
    %579 = arith.select %576, %574, %578 : vector<8x24xi1>, vector<8x24xf32>
    %cst_243 = arith.constant 0.000000e+00 : f32
    %580 = vector.broadcast %cst_243 : f32 to vector<8x24xf32>
    %581 = arith.cmpf ogt, %18, %580 : vector<8x24xf32>
    %cst_244 = arith.constant -1.000000e+30 : f32
    %582 = vector.broadcast %cst_244 : f32 to vector<8x24xf32>
    %583 = arith.select %581, %579, %582 : vector<8x24xi1>, vector<8x24xf32>
    %cst_245 = arith.constant dense<0xFF800000> : vector<8xf32>
    %584 = vector.multi_reduction <maximumf>, %583, %cst_245 [1] : vector<8x24xf32> to vector<8xf32>
    %585 = vector.shape_cast %584 : vector<8xf32> to vector<8x1xf32>
    %cst_246 = arith.constant 0.000000e+00 : f32
    %586 = vector.broadcast %cst_246 : f32 to vector<8x24xf32>
    %587 = arith.cmpf ogt, %18, %586 : vector<8x24xf32>
    %588 = vector.broadcast %585 : vector<8x1xf32> to vector<8x24xf32>
    %589 = arith.subf %583, %588 : vector<8x24xf32>
    %590 = math.exp %589 : vector<8x24xf32>
    %cst_247 = arith.constant 0.000000e+00 : f32
    %591 = vector.broadcast %cst_247 : f32 to vector<8x24xf32>
    %592 = arith.select %587, %590, %591 : vector<8x24xi1>, vector<8x24xf32>
    %cst_248 = arith.constant dense<0.000000e+00> : vector<8xf32>
    %593 = vector.multi_reduction <add>, %592, %cst_248 [1] : vector<8x24xf32> to vector<8xf32>
    %594 = vector.shape_cast %593 : vector<8xf32> to vector<8x1xf32>
    %cst_249 = arith.constant 9.99999971E-10 : f32
    %595 = vector.broadcast %cst_249 : f32 to vector<8x1xf32>
    %596 = arith.maximumf %594, %595 : vector<8x1xf32>
    %597 = tpu.reciprocal %596 {approx = true} : vector<8x1xf32> -> vector<8x1xf32>
    %598 = vector.broadcast %597 : vector<8x1xf32> to vector<8x24xf32>
    %599 = arith.mulf %592, %598 : vector<8x24xf32>
    %600 = vector.extract_strided_slice %521 {offsets = [0, 32], sizes = [24, 32], strides = [1, 1]} : vector<24x128xf32> to vector<24x32xf32>
    %cst_250 = arith.constant dense<0.000000e+00> : vector<8x32xf32>
    %601 = tpu.matmul %599, %600, %cst_250 {dimension_numbers = #tpu.dot_dimension_numbers<[1], [0], [0], [1], [0, 0, 1, 1], [], []>} : vector<8x24xf32>, vector<24x32xf32>, vector<8x32xf32> -> vector<8x32xf32>
    %602 = arith.addf %568, %601 : vector<8x32xf32>
    %603 = vector.extract_strided_slice %533 {offsets = [0, 2], sizes = [8, 1], strides = [1, 1]} : vector<8x4xf32> to vector<8x1xf32>
    %604 = vector.extract_strided_slice %529 {offsets = [0, 2], sizes = [24, 1], strides = [1, 1]} : vector<24x4xf32> to vector<24x1xf32>
    %605 = tpu.transpose %604, [1, 0] : vector<24x1xf32> -> vector<1x24xf32>
    %606 = vector.broadcast %603 : vector<8x1xf32> to vector<8x24xf32>
    %607 = vector.broadcast %605 : vector<1x24xf32> to vector<8x24xf32>
    %608 = arith.addf %606, %607 : vector<8x24xf32>
    %cst_251 = arith.constant 0.000000e+00 : f32
    %609 = vector.broadcast %cst_251 : f32 to vector<8x24xf32>
    %610 = arith.cmpf ogt, %608, %609 : vector<8x24xf32>
    %cst_252 = arith.constant 2.000000e-01 : f32
    %611 = vector.broadcast %cst_252 : f32 to vector<8x24xf32>
    %612 = arith.mulf %611, %608 : vector<8x24xf32>
    %613 = arith.select %610, %608, %612 : vector<8x24xi1>, vector<8x24xf32>
    %cst_253 = arith.constant 0.000000e+00 : f32
    %614 = vector.broadcast %cst_253 : f32 to vector<8x24xf32>
    %615 = arith.cmpf ogt, %18, %614 : vector<8x24xf32>
    %cst_254 = arith.constant -1.000000e+30 : f32
    %616 = vector.broadcast %cst_254 : f32 to vector<8x24xf32>
    %617 = arith.select %615, %613, %616 : vector<8x24xi1>, vector<8x24xf32>
    %cst_255 = arith.constant dense<0xFF800000> : vector<8xf32>
    %618 = vector.multi_reduction <maximumf>, %617, %cst_255 [1] : vector<8x24xf32> to vector<8xf32>
    %619 = vector.shape_cast %618 : vector<8xf32> to vector<8x1xf32>
    %cst_256 = arith.constant 0.000000e+00 : f32
    %620 = vector.broadcast %cst_256 : f32 to vector<8x24xf32>
    %621 = arith.cmpf ogt, %18, %620 : vector<8x24xf32>
    %622 = vector.broadcast %619 : vector<8x1xf32> to vector<8x24xf32>
    %623 = arith.subf %617, %622 : vector<8x24xf32>
    %624 = math.exp %623 : vector<8x24xf32>
    %cst_257 = arith.constant 0.000000e+00 : f32
    %625 = vector.broadcast %cst_257 : f32 to vector<8x24xf32>
    %626 = arith.select %621, %624, %625 : vector<8x24xi1>, vector<8x24xf32>
    %cst_258 = arith.constant dense<0.000000e+00> : vector<8xf32>
    %627 = vector.multi_reduction <add>, %626, %cst_258 [1] : vector<8x24xf32> to vector<8xf32>
    %628 = vector.shape_cast %627 : vector<8xf32> to vector<8x1xf32>
    %cst_259 = arith.constant 9.99999971E-10 : f32
    %629 = vector.broadcast %cst_259 : f32 to vector<8x1xf32>
    %630 = arith.maximumf %628, %629 : vector<8x1xf32>
    %631 = tpu.reciprocal %630 {approx = true} : vector<8x1xf32> -> vector<8x1xf32>
    %632 = vector.broadcast %631 : vector<8x1xf32> to vector<8x24xf32>
    %633 = arith.mulf %626, %632 : vector<8x24xf32>
    %634 = vector.extract_strided_slice %521 {offsets = [0, 64], sizes = [24, 32], strides = [1, 1]} : vector<24x128xf32> to vector<24x32xf32>
    %cst_260 = arith.constant dense<0.000000e+00> : vector<8x32xf32>
    %635 = tpu.matmul %633, %634, %cst_260 {dimension_numbers = #tpu.dot_dimension_numbers<[1], [0], [0], [1], [0, 0, 1, 1], [], []>} : vector<8x24xf32>, vector<24x32xf32>, vector<8x32xf32> -> vector<8x32xf32>
    %636 = arith.addf %602, %635 : vector<8x32xf32>
    %637 = vector.extract_strided_slice %533 {offsets = [0, 3], sizes = [8, 1], strides = [1, 1]} : vector<8x4xf32> to vector<8x1xf32>
    %638 = vector.extract_strided_slice %529 {offsets = [0, 3], sizes = [24, 1], strides = [1, 1]} : vector<24x4xf32> to vector<24x1xf32>
    %639 = tpu.transpose %638, [1, 0] : vector<24x1xf32> -> vector<1x24xf32>
    %640 = vector.broadcast %637 : vector<8x1xf32> to vector<8x24xf32>
    %641 = vector.broadcast %639 : vector<1x24xf32> to vector<8x24xf32>
    %642 = arith.addf %640, %641 : vector<8x24xf32>
    %cst_261 = arith.constant 0.000000e+00 : f32
    %643 = vector.broadcast %cst_261 : f32 to vector<8x24xf32>
    %644 = arith.cmpf ogt, %642, %643 : vector<8x24xf32>
    %cst_262 = arith.constant 2.000000e-01 : f32
    %645 = vector.broadcast %cst_262 : f32 to vector<8x24xf32>
    %646 = arith.mulf %645, %642 : vector<8x24xf32>
    %647 = arith.select %644, %642, %646 : vector<8x24xi1>, vector<8x24xf32>
    %cst_263 = arith.constant 0.000000e+00 : f32
    %648 = vector.broadcast %cst_263 : f32 to vector<8x24xf32>
    %649 = arith.cmpf ogt, %18, %648 : vector<8x24xf32>
    %cst_264 = arith.constant -1.000000e+30 : f32
    %650 = vector.broadcast %cst_264 : f32 to vector<8x24xf32>
    %651 = arith.select %649, %647, %650 : vector<8x24xi1>, vector<8x24xf32>
    %cst_265 = arith.constant dense<0xFF800000> : vector<8xf32>
    %652 = vector.multi_reduction <maximumf>, %651, %cst_265 [1] : vector<8x24xf32> to vector<8xf32>
    %653 = vector.shape_cast %652 : vector<8xf32> to vector<8x1xf32>
    %cst_266 = arith.constant 0.000000e+00 : f32
    %654 = vector.broadcast %cst_266 : f32 to vector<8x24xf32>
    %655 = arith.cmpf ogt, %18, %654 : vector<8x24xf32>
    %656 = vector.broadcast %653 : vector<8x1xf32> to vector<8x24xf32>
    %657 = arith.subf %651, %656 : vector<8x24xf32>
    %658 = math.exp %657 : vector<8x24xf32>
    %cst_267 = arith.constant 0.000000e+00 : f32
    %659 = vector.broadcast %cst_267 : f32 to vector<8x24xf32>
    %660 = arith.select %655, %658, %659 : vector<8x24xi1>, vector<8x24xf32>
    %cst_268 = arith.constant dense<0.000000e+00> : vector<8xf32>
    %661 = vector.multi_reduction <add>, %660, %cst_268 [1] : vector<8x24xf32> to vector<8xf32>
    %662 = vector.shape_cast %661 : vector<8xf32> to vector<8x1xf32>
    %cst_269 = arith.constant 9.99999971E-10 : f32
    %663 = vector.broadcast %cst_269 : f32 to vector<8x1xf32>
    %664 = arith.maximumf %662, %663 : vector<8x1xf32>
    %665 = tpu.reciprocal %664 {approx = true} : vector<8x1xf32> -> vector<8x1xf32>
    %666 = vector.broadcast %665 : vector<8x1xf32> to vector<8x24xf32>
    %667 = arith.mulf %660, %666 : vector<8x24xf32>
    %668 = vector.extract_strided_slice %521 {offsets = [0, 96], sizes = [24, 32], strides = [1, 1]} : vector<24x128xf32> to vector<24x32xf32>
    %cst_270 = arith.constant dense<0.000000e+00> : vector<8x32xf32>
    %669 = tpu.matmul %667, %668, %cst_270 {dimension_numbers = #tpu.dot_dimension_numbers<[1], [0], [0], [1], [0, 0, 1, 1], [], []>} : vector<8x24xf32>, vector<24x32xf32>, vector<8x32xf32> -> vector<8x32xf32>
    %670 = arith.addf %636, %669 : vector<8x32xf32>
    %cst_271 = arith.constant 2.500000e-01 : f32
    %671 = vector.broadcast %cst_271 : f32 to vector<8x32xf32>
    %672 = arith.mulf %670, %671 : vector<8x32xf32>
    %cst_272 = arith.constant 0.000000e+00 : f32
    %673 = vector.broadcast %cst_272 : f32 to vector<8x32xf32>
    %674 = arith.maximumf %672, %673 : vector<8x32xf32>
    %c0_273 = arith.constant 0 : index
    %c0_274 = arith.constant 0 : index
    %675 = vector.load %arg7[%c0_273, %c0_274] : memref<8x24xf32, #tpu.memory_space<vmem>>, vector<8x24xf32>
    %cst_275 = arith.constant dense<0.000000e+00> : vector<8x128xf32>
    %676 = tpu.matmul %675, %514, %cst_275 {dimension_numbers = #tpu.dot_dimension_numbers<[1], [0], [0], [1], [0, 0, 1, 1], [], []>} : vector<8x24xf32>, vector<24x128xf32>, vector<8x128xf32> -> vector<8x128xf32>
    %c0_276 = arith.constant 0 : index
    %c0_277 = arith.constant 0 : index
    %677 = vector.load %arg34[%c0_276, %c0_277] : memref<128x32xf32, #tpu.memory_space<vmem>>, vector<128x32xf32>
    %cst_278 = arith.constant dense<0.000000e+00> : vector<8x32xf32>
    %678 = tpu.matmul %676, %677, %cst_278 {dimension_numbers = #tpu.dot_dimension_numbers<[1], [0], [0], [1], [0, 0, 1, 1], [], []>} : vector<8x128xf32>, vector<128x32xf32>, vector<8x32xf32> -> vector<8x32xf32>
    %c0_279 = arith.constant 0 : index
    %c0_280 = arith.constant 0 : index
    %679 = vector.load %arg35[%c0_279, %c0_280] : memref<1x32xf32, #tpu.memory_space<vmem>>, vector<1x32xf32>
    %680 = vector.broadcast %679 : vector<1x32xf32> to vector<8x32xf32>
    %681 = arith.addf %678, %680 : vector<8x32xf32>
    %cst_281 = arith.constant 0.000000e+00 : f32
    %682 = vector.broadcast %cst_281 : f32 to vector<8x32xf32>
    %683 = arith.maximumf %681, %682 : vector<8x32xf32>
    %c0_282 = arith.constant 0 : index
    %c0_283 = arith.constant 0 : index
    %684 = vector.load %arg36[%c0_282, %c0_283] : memref<32x1xf32, #tpu.memory_space<vmem>>, vector<32x1xf32>
    %cst_284 = arith.constant dense<0.000000e+00> : vector<8x1xf32>
    %685 = tpu.matmul %683, %684, %cst_284 {dimension_numbers = #tpu.dot_dimension_numbers<[1], [0], [0], [1], [0, 0, 1, 1], [], []>} : vector<8x32xf32>, vector<32x1xf32>, vector<8x1xf32> -> vector<8x1xf32>
    %c0_285 = arith.constant 0 : index
    %c0_286 = arith.constant 0 : index
    %686 = vector.load %arg8[%c0_285, %c0_286] : memref<8x1xf32, #tpu.memory_space<vmem>>, vector<8x1xf32>
    %cst_287 = arith.constant 0.000000e+00 : f32
    %687 = vector.broadcast %cst_287 : f32 to vector<8x1xf32>
    %688 = arith.cmpf ogt, %686, %687 : vector<8x1xf32>
    %689 = arith.extui %688 : vector<8x1xi1> to vector<8x1xi32>
    %690 = arith.sitofp %689 : vector<8x1xi32> to vector<8x1xf32>
    %691 = arith.mulf %685, %690 : vector<8x1xf32>
    %692 = tpu.transpose %691, [1, 0] : vector<8x1xf32> -> vector<1x8xf32>
    %c0_288 = arith.constant 0 : index
    %c0_289 = arith.constant 0 : index
    %693 = vector.load %arg43[%c0_288, %c0_289] : memref<1x8xf32, #tpu.memory_space<vmem>>, vector<1x8xf32>
    tpu.vector_store %arg43[%c0_288, %c0_289], %692 {strides = array<i32>} : memref<1x8xf32, #tpu.memory_space<vmem>>, vector<1x8xf32>,
    %cst_290 = arith.constant dense<0.000000e+00> : vector<32xf32>
    %694 = vector.multi_reduction <add>, %674, %cst_290 [0] : vector<8x32xf32> to vector<32xf32>
    %695 = vector.shape_cast %694 : vector<32xf32> to vector<1x32xf32>
    %c0_291 = arith.constant 0 : index
    %c0_292 = arith.constant 0 : index
    %696 = vector.load %arg37[%c0_291, %c0_292] : memref<32x32xf32, #tpu.memory_space<vmem>>, vector<32x32xf32>
    %cst_293 = arith.constant dense<0.000000e+00> : vector<1x32xf32>
    %697 = tpu.matmul %695, %696, %cst_293 {dimension_numbers = #tpu.dot_dimension_numbers<[1], [0], [0], [1], [0, 0, 1, 1], [], []>} : vector<1x32xf32>, vector<32x32xf32>, vector<1x32xf32> -> vector<1x32xf32>
    %c0_294 = arith.constant 0 : index
    %c0_295 = arith.constant 0 : index
    %698 = vector.load %arg38[%c0_294, %c0_295] : memref<1x32xf32, #tpu.memory_space<vmem>>, vector<1x32xf32>
    %699 = arith.addf %697, %698 : vector<1x32xf32>
    %cst_296 = arith.constant 0.000000e+00 : f32
    %700 = vector.broadcast %cst_296 : f32 to vector<1x32xf32>
    %701 = arith.maximumf %699, %700 : vector<1x32xf32>
    %c0_297 = arith.constant 0 : index
    %c0_298 = arith.constant 0 : index
    %702 = vector.load %arg39[%c0_297, %c0_298] : memref<32x16xf32, #tpu.memory_space<vmem>>, vector<32x16xf32>
    %cst_299 = arith.constant dense<0.000000e+00> : vector<1x16xf32>
    %703 = tpu.matmul %701, %702, %cst_299 {dimension_numbers = #tpu.dot_dimension_numbers<[1], [0], [0], [1], [0, 0, 1, 1], [], []>} : vector<1x32xf32>, vector<32x16xf32>, vector<1x16xf32> -> vector<1x16xf32>
    %c0_300 = arith.constant 0 : index
    %c0_301 = arith.constant 0 : index
    %704 = vector.load %arg40[%c0_300, %c0_301] : memref<1x16xf32, #tpu.memory_space<vmem>>, vector<1x16xf32>
    %705 = arith.addf %703, %704 : vector<1x16xf32>
    %cst_302 = arith.constant 0.000000e+00 : f32
    %706 = vector.broadcast %cst_302 : f32 to vector<1x16xf32>
    %707 = arith.maximumf %705, %706 : vector<1x16xf32>
    %c0_303 = arith.constant 0 : index
    %c0_304 = arith.constant 0 : index
    %708 = vector.load %arg41[%c0_303, %c0_304] : memref<16x1xf32, #tpu.memory_space<vmem>>, vector<16x1xf32>
    %cst_305 = arith.constant dense<0.000000e+00> : vector<1x1xf32>
    %709 = tpu.matmul %707, %708, %cst_305 {dimension_numbers = #tpu.dot_dimension_numbers<[1], [0], [0], [1], [0, 0, 1, 1], [], []>} : vector<1x16xf32>, vector<16x1xf32>, vector<1x1xf32> -> vector<1x1xf32>
    %c0_306 = arith.constant 0 : index
    %c0_307 = arith.constant 0 : index
    %710 = vector.load %arg42[%c0_306, %c0_307] : memref<1x1xf32, #tpu.memory_space<vmem>>, vector<1x1xf32>
    %711 = arith.addf %709, %710 : vector<1x1xf32>
    %c0_308 = arith.constant 0 : index
    %c0_309 = arith.constant 0 : index
    %712 = vector.load %arg44[%c0_308, %c0_309] : memref<1x1xf32, #tpu.memory_space<vmem>>, vector<1x1xf32>
    tpu.vector_store %arg44[%c0_308, %c0_309], %711 {strides = array<i32>} : memref<1x1xf32, #tpu.memory_space<vmem>>, vector<1x1xf32>,
    return
  }
  func.func @transform_0(%arg0: i32) -> (i32, i32) {
    %c0_i32 = arith.constant 0 : i32
    %c0_i32_0 = arith.constant 0 : i32
    %c0_i32_1 = arith.constant 0 : i32
    return %c0_i32, %c0_i32_0 : i32, i32
  }
  func.func @transform_1(%arg0: i32) -> (i32, i32) {
    %c0_i32 = arith.constant 0 : i32
    %c0_i32_0 = arith.constant 0 : i32
    %c0_i32_1 = arith.constant 0 : i32
    return %c0_i32, %c0_i32_0 : i32, i32
  }
  func.func @transform_2(%arg0: i32) -> (i32, i32) {
    %c0_i32 = arith.constant 0 : i32
    %c0_i32_0 = arith.constant 0 : i32
    %c0_i32_1 = arith.constant 0 : i32
    return %c0_i32, %c0_i32_0 : i32, i32
  }
  func.func @transform_3(%arg0: i32) -> (i32, i32) {
    %c0_i32 = arith.constant 0 : i32
    %c0_i32_0 = arith.constant 0 : i32
    %c0_i32_1 = arith.constant 0 : i32
    return %c0_i32, %c0_i32_0 : i32, i32
  }
  func.func @transform_4(%arg0: i32) -> (i32, i32, i32) {
    %c0_i32 = arith.constant 0 : i32
    %c0_i32_0 = arith.constant 0 : i32
    %c0_i32_1 = arith.constant 0 : i32
    %c0_i32_2 = arith.constant 0 : i32
    return %c0_i32, %c0_i32_0, %c0_i32_1 : i32, i32, i32
  }
  func.func @transform_5(%arg0: i32) -> (i32, i32) {
    %c0_i32 = arith.constant 0 : i32
    %c0_i32_0 = arith.constant 0 : i32
    %c0_i32_1 = arith.constant 0 : i32
    return %c0_i32, %c0_i32_0 : i32, i32
  }
  func.func @transform_6(%arg0: i32) -> (i32, i32) {
    %c0_i32 = arith.constant 0 : i32
    %c0_i32_0 = arith.constant 0 : i32
    %c0_i32_1 = arith.constant 0 : i32
    return %c0_i32, %c0_i32_0 : i32, i32
  }
  func.func @transform_7(%arg0: i32) -> (i32, i32) {
    %c0_i32 = arith.constant 0 : i32
    %c0_i32_0 = arith.constant 0 : i32
    %c0_i32_1 = arith.constant 0 : i32
    return %c0_i32, %c0_i32_0 : i32, i32
  }
  func.func @transform_8(%arg0: i32) -> (i32, i32) {
    %c0_i32 = arith.constant 0 : i32
    %c0_i32_0 = arith.constant 0 : i32
    %c0_i32_1 = arith.constant 0 : i32
    return %c0_i32, %c0_i32_0 : i32, i32
  }
  func.func @transform_9(%arg0: i32) -> (i32, i32) {
    %c0_i32 = arith.constant 0 : i32
    %c0_i32_0 = arith.constant 0 : i32
    %c0_i32_1 = arith.constant 0 : i32
    return %c0_i32, %c0_i32_0 : i32, i32
  }
  func.func @transform_10(%arg0: i32) -> (i32, i32) {
    %c0_i32 = arith.constant 0 : i32
    %c0_i32_0 = arith.constant 0 : i32
    %c0_i32_1 = arith.constant 0 : i32
    return %c0_i32, %c0_i32_0 : i32, i32
  }
  func.func @transform_11(%arg0: i32) -> (i32, i32) {
    %c0_i32 = arith.constant 0 : i32
    %c0_i32_0 = arith.constant 0 : i32
    %c0_i32_1 = arith.constant 0 : i32
    return %c0_i32, %c0_i32_0 : i32, i32
  }
  func.func @transform_12(%arg0: i32) -> (i32, i32) {
    %c0_i32 = arith.constant 0 : i32
    %c0_i32_0 = arith.constant 0 : i32
    %c0_i32_1 = arith.constant 0 : i32
    return %c0_i32, %c0_i32_0 : i32, i32
  }
  func.func @transform_13(%arg0: i32) -> (i32, i32) {
    %c0_i32 = arith.constant 0 : i32
    %c0_i32_0 = arith.constant 0 : i32
    %c0_i32_1 = arith.constant 0 : i32
    return %c0_i32, %c0_i32_0 : i32, i32
  }
  func.func @transform_14(%arg0: i32) -> (i32, i32) {
    %c0_i32 = arith.constant 0 : i32
    %c0_i32_0 = arith.constant 0 : i32
    %c0_i32_1 = arith.constant 0 : i32
    return %c0_i32, %c0_i32_0 : i32, i32
  }
  func.func @transform_15(%arg0: i32) -> (i32, i32) {
    %c0_i32 = arith.constant 0 : i32
    %c0_i32_0 = arith.constant 0 : i32
    %c0_i32_1 = arith.constant 0 : i32
    return %c0_i32, %c0_i32_0 : i32, i32
  }
  func.func @transform_16(%arg0: i32) -> (i32, i32) {
    %c0_i32 = arith.constant 0 : i32
    %c0_i32_0 = arith.constant 0 : i32
    %c0_i32_1 = arith.constant 0 : i32
    return %c0_i32, %c0_i32_0 : i32, i32
  }
  func.func @transform_17(%arg0: i32) -> (i32, i32) {
    %c0_i32 = arith.constant 0 : i32
    %c0_i32_0 = arith.constant 0 : i32
    %c0_i32_1 = arith.constant 0 : i32
    return %c0_i32, %c0_i32_0 : i32, i32
  }
  func.func @transform_18(%arg0: i32) -> (i32, i32) {
    %c0_i32 = arith.constant 0 : i32
    %c0_i32_0 = arith.constant 0 : i32
    %c0_i32_1 = arith.constant 0 : i32
    return %c0_i32, %c0_i32_0 : i32, i32
  }
  func.func @transform_19(%arg0: i32) -> (i32, i32) {
    %c0_i32 = arith.constant 0 : i32
    %c0_i32_0 = arith.constant 0 : i32
    %c0_i32_1 = arith.constant 0 : i32
    return %c0_i32, %c0_i32_0 : i32, i32
  }
  func.func @transform_20(%arg0: i32) -> (i32, i32) {
    %c0_i32 = arith.constant 0 : i32
    %c0_i32_0 = arith.constant 0 : i32
    %c0_i32_1 = arith.constant 0 : i32
    return %c0_i32, %c0_i32_0 : i32, i32
  }
  func.func @transform_21(%arg0: i32) -> (i32, i32) {
    %c0_i32 = arith.constant 0 : i32
    %c0_i32_0 = arith.constant 0 : i32
    %c0_i32_1 = arith.constant 0 : i32
    return %c0_i32, %c0_i32_0 : i32, i32
  }
  func.func @transform_22(%arg0: i32) -> (i32, i32) {
    %c0_i32 = arith.constant 0 : i32
    %c0_i32_0 = arith.constant 0 : i32
    %c0_i32_1 = arith.constant 0 : i32
    return %c0_i32, %c0_i32_0 : i32, i32
  }
  func.func @transform_23(%arg0: i32) -> (i32, i32) {
    %c0_i32 = arith.constant 0 : i32
    %c0_i32_0 = arith.constant 0 : i32
    %c0_i32_1 = arith.constant 0 : i32
    return %c0_i32, %c0_i32_0 : i32, i32
  }
  func.func @transform_24(%arg0: i32) -> (i32, i32) {
    %c0_i32 = arith.constant 0 : i32
    %c0_i32_0 = arith.constant 0 : i32
    %c0_i32_1 = arith.constant 0 : i32
    return %c0_i32, %c0_i32_0 : i32, i32
  }
  func.func @transform_25(%arg0: i32) -> (i32, i32) {
    %c0_i32 = arith.constant 0 : i32
    %c0_i32_0 = arith.constant 0 : i32
    %c0_i32_1 = arith.constant 0 : i32
    return %c0_i32, %c0_i32_0 : i32, i32
  }
  func.func @transform_26(%arg0: i32) -> (i32, i32) {
    %c0_i32 = arith.constant 0 : i32
    %c0_i32_0 = arith.constant 0 : i32
    %c0_i32_1 = arith.constant 0 : i32
    return %c0_i32, %c0_i32_0 : i32, i32
  }
  func.func @transform_27(%arg0: i32) -> (i32, i32) {
    %c0_i32 = arith.constant 0 : i32
    %c0_i32_0 = arith.constant 0 : i32
    %c0_i32_1 = arith.constant 0 : i32
    return %c0_i32, %c0_i32_0 : i32, i32
  }
  func.func @transform_28(%arg0: i32) -> (i32, i32) {
    %c0_i32 = arith.constant 0 : i32
    %c0_i32_0 = arith.constant 0 : i32
    %c0_i32_1 = arith.constant 0 : i32
    return %c0_i32, %c0_i32_0 : i32, i32
  }
  func.func @transform_29(%arg0: i32) -> (i32, i32) {
    %c0_i32 = arith.constant 0 : i32
    %c0_i32_0 = arith.constant 0 : i32
    %c0_i32_1 = arith.constant 0 : i32
    return %c0_i32, %c0_i32_0 : i32, i32
  }
  func.func @transform_30(%arg0: i32) -> (i32, i32) {
    %c0_i32 = arith.constant 0 : i32
    %c0_i32_0 = arith.constant 0 : i32
    %c0_i32_1 = arith.constant 0 : i32
    return %c0_i32, %c0_i32_0 : i32, i32
  }
  func.func @transform_31(%arg0: i32) -> (i32, i32) {
    %c0_i32 = arith.constant 0 : i32
    %c0_i32_0 = arith.constant 0 : i32
    %c0_i32_1 = arith.constant 0 : i32
    return %c0_i32, %c0_i32_0 : i32, i32
  }
  func.func @transform_32(%arg0: i32) -> (i32, i32) {
    %c0_i32 = arith.constant 0 : i32
    %c0_i32_0 = arith.constant 0 : i32
    %c0_i32_1 = arith.constant 0 : i32
    return %c0_i32, %c0_i32_0 : i32, i32
  }
  func.func @transform_33(%arg0: i32) -> (i32, i32) {
    %c0_i32 = arith.constant 0 : i32
    %c0_i32_0 = arith.constant 0 : i32
    %c0_i32_1 = arith.constant 0 : i32
    return %c0_i32, %c0_i32_0 : i32, i32
  }
  func.func @transform_34(%arg0: i32) -> (i32, i32) {
    %c0_i32 = arith.constant 0 : i32
    %c0_i32_0 = arith.constant 0 : i32
    %c0_i32_1 = arith.constant 0 : i32
    return %c0_i32, %c0_i32_0 : i32, i32
  }
  func.func @transform_35(%arg0: i32) -> (i32, i32) {
    %c0_i32 = arith.constant 0 : i32
    %c0_i32_0 = arith.constant 0 : i32
    %c0_i32_1 = arith.constant 0 : i32
    return %c0_i32, %c0_i32_0 : i32, i32
  }
  func.func @transform_36(%arg0: i32) -> (i32, i32) {
    %c0_i32 = arith.constant 0 : i32
    %c0_i32_0 = arith.constant 0 : i32
    %c0_i32_1 = arith.constant 0 : i32
    return %c0_i32, %c0_i32_0 : i32, i32
  }
  func.func @transform_37(%arg0: i32) -> (i32, i32) {
    %c0_i32 = arith.constant 0 : i32
    %c0_i32_0 = arith.constant 0 : i32
    %c0_i32_1 = arith.constant 0 : i32
    return %c0_i32, %c0_i32_0 : i32, i32
  }
  func.func @transform_38(%arg0: i32) -> (i32, i32) {
    %c0_i32 = arith.constant 0 : i32
    %c0_i32_0 = arith.constant 0 : i32
    %c0_i32_1 = arith.constant 0 : i32
    return %c0_i32, %c0_i32_0 : i32, i32
  }
  func.func @transform_39(%arg0: i32) -> (i32, i32) {
    %c0_i32 = arith.constant 0 : i32
    %c0_i32_0 = arith.constant 0 : i32
    %c0_i32_1 = arith.constant 0 : i32
    return %c0_i32, %c0_i32_0 : i32, i32
  }
  func.func @transform_40(%arg0: i32) -> (i32, i32) {
    %c0_i32 = arith.constant 0 : i32
    %c0_i32_0 = arith.constant 0 : i32
    %c0_i32_1 = arith.constant 0 : i32
    return %c0_i32, %c0_i32_0 : i32, i32
  }
  func.func @transform_41(%arg0: i32) -> (i32, i32) {
    %c0_i32 = arith.constant 0 : i32
    %c0_i32_0 = arith.constant 0 : i32
    %c0_i32_1 = arith.constant 0 : i32
    return %c0_i32, %c0_i32_0 : i32, i32
  }
  func.func @transform_42(%arg0: i32) -> (i32, i32) {
    %c0_i32 = arith.constant 0 : i32
    %c0_i32_0 = arith.constant 0 : i32
    %c0_i32_1 = arith.constant 0 : i32
    return %c0_i32, %c0_i32_0 : i32, i32
  }
  func.func @transform_43(%arg0: i32) -> (i32, i32) {
    %c0_i32 = arith.constant 0 : i32
    %c0_i32_0 = arith.constant 0 : i32
    %c0_i32_1 = arith.constant 0 : i32
    return %c0_i32, %c0_i32_0 : i32, i32
  }
}

</mosaic_0001>

<llo_original>
// kernel: curvagn_forward.1
$region0: #{curvagn_forward.1}
  #allocation0 [shape = 'u32[]', space=smem, size = 0x4, offset = 0x4, fixed_abs, tag = 'smem constant byte address 0x4 - core index']
  #allocation1 [shape = 'u32[72,128]{1,0:T(1,128)}', space=vmem, size = 0x9000, scoped, tag = 'internal scratch']
  #allocation2 [shape = 'f32[1,1]{1,0:T(1,128)S(1)}', space=vmem, size = 0x200, scoped, tag = 'scoped memory for curvagn_forward.1']
  %s0 = inlined_call_operand.smem [shape: u32[44], index: -1, kind: input, shape index: {}]
  %s1 = sld [smem:[%s0]]
  %s2 = scalar_lea.smem %s0, 1
  %s3 = sld [smem:[%s2]]
  %s4 = scalar_lea.smem %s0, 2
  %s5 = sld [smem:[%s4]]
  %s6 = scalar_lea.smem %s0, 3
  %s7 = sld [smem:[%s6]]
  %s8 = scalar_lea.smem %s0, 4
  %s9 = sld [smem:[%s8]]
  %s10 = scalar_lea.smem %s0, 5
  %s11 = sld [smem:[%s10]]
  %s12 = scalar_lea.smem %s0, 6
  %s13 = sld [smem:[%s12]]
  %s14 = scalar_lea.smem %s0, 7
  %s15 = sld [smem:[%s14]]
  %s16 = scalar_lea.smem %s0, 8
  %s17 = sld [smem:[%s16]]
  %s18 = scalar_lea.smem %s0, 9
  %s19 = sld [smem:[%s18]]
  %s20 = scalar_lea.smem %s0, 10
  %s21 = sld [smem:[%s20]]
  %s22 = scalar_lea.smem %s0, 11
  %s23 = sld [smem:[%s22]]
  %s24 = scalar_lea.smem %s0, 12
  %s25 = sld [smem:[%s24]]
  %s26 = scalar_lea.smem %s0, 13
  %s27 = sld [smem:[%s26]]
  %s28 = scalar_lea.smem %s0, 14
  %s29 = sld [smem:[%s28]]
  %s30 = scalar_lea.smem %s0, 15
  %s31 = sld [smem:[%s30]]
  %s32 = scalar_lea.smem %s0, 16
  %s33 = sld [smem:[%s32]]
  %s34 = scalar_lea.smem %s0, 17
  %s35 = sld [smem:[%s34]]
  %s36 = scalar_lea.smem %s0, 18
  %s37 = sld [smem:[%s36]]
  %s38 = scalar_lea.smem %s0, 19
  %s39 = sld [smem:[%s38]]
  %s40 = scalar_lea.smem %s0, 20
  %s41 = sld [smem:[%s40]]
  %s42 = scalar_lea.smem %s0, 21
  %s43 = sld [smem:[%s42]]
  %s44 = scalar_lea.smem %s0, 22
  %s45 = sld [smem:[%s44]]
  %s46 = scalar_lea.smem %s0, 23
  %s47 = sld [smem:[%s46]]
  %s48 = scalar_lea.smem %s0, 24
  %s49 = sld [smem:[%s48]]
  %s50 = scalar_lea.smem %s0, 25
  %s51 = sld [smem:[%s50]]
  %s52 = scalar_lea.smem %s0, 26
  %s53 = sld [smem:[%s52]]
  %s54 = scalar_lea.smem %s0, 27
  %s55 = sld [smem:[%s54]]
  %s56 = scalar_lea.smem %s0, 28
  %s57 = sld [smem:[%s56]]
  %s58 = scalar_lea.smem %s0, 29
  %s59 = sld [smem:[%s58]]
  %s60 = scalar_lea.smem %s0, 30
  %s61 = sld [smem:[%s60]]
  %s62 = scalar_lea.smem %s0, 31
  %s63 = sld [smem:[%s62]]
  %s64 = scalar_lea.smem %s0, 32
  %s65 = sld [smem:[%s64]]
  %s66 = scalar_lea.smem %s0, 33
  %s67 = sld [smem:[%s66]]
  %s68 = scalar_lea.smem %s0, 34
  %s69 = sld [smem:[%s68]]
  %s70 = scalar_lea.smem %s0, 35
  %s71 = sld [smem:[%s70]]
  %s72 = scalar_lea.smem %s0, 36
  %s73 = sld [smem:[%s72]]
  %s74 = scalar_lea.smem %s0, 37
  %s75 = sld [smem:[%s74]]
  %s76 = scalar_lea.smem %s0, 38
  %s77 = sld [smem:[%s76]]
  %s78 = scalar_lea.smem %s0, 39
  %s79 = sld [smem:[%s78]]
  %s80 = scalar_lea.smem %s0, 40
  %s81 = sld [smem:[%s80]]
  %s82 = scalar_lea.smem %s0, 41
  %s83 = sld [smem:[%s82]]
  %s84 = scalar_lea.smem %s0, 42
  %s85 = sld [smem:[%s84]]
  %s86 = scalar_lea.smem %s0, 43
  %s87 = sld [smem:[%s86]]
  %88 = xla_tuple %s85, %s87
  %s89 = sld [smem:[#allocation0]]
  $region242: #{curvagn_forward.1} parent=0
    _
  %s91 = ssub.s32 1, %s89
  %s92 = scalar_select 0, %s91, %s89
  %v93 = vstv %s83
  %94 = vst [vmem:[#allocation2] sm:$0x1] %v93
  $region1: #{curvagn_forward.1} parent=0
    #allocation3 [shape = 'u8[512]{0}', space=vmem, size = 0x400, scoped, tag = 'input window, operand 12, single buffered']
    #allocation4 [shape = 's32[1]{0}', space=sflag, size = 0x4, scoped, tag = 'scoped memory for curvagn_forward.1']
    #allocation5 [shape = 's32[1]{0}', space=sflag, size = 0x4, scoped, tag = 'scoped memory for curvagn_forward.1']
    #allocation6 [shape = 'u8[512]{0}', space=vmem, size = 0x400, scoped, tag = 'input window, operand 19, single buffered']
    #allocation7 [shape = 's32[1]{0}', space=sflag, size = 0x4, scoped, tag = 'scoped memory for curvagn_forward.1']
    #allocation8 [shape = 'u8[512]{0}', space=vmem, size = 0x400, scoped, tag = 'input window, operand 20, single buffered']
    #allocation9 [shape = 'u8[512]{0}', space=vmem, size = 0x400, scoped, tag = 'input window, operand 21, single buffered']
    #allocation10 [shape = 's32[1]{0}', space=sflag, size = 0x4, scoped, tag = 'scoped memory for curvagn_forward.1']
    #allocation11 [shape = 'u8[512]{0}', space=vmem, size = 0x400, scoped, tag = 'input window, operand 23, single buffered']
    #allocation12 [shape = 'u8[16384]{0}', space=vmem, size = 0x4000, scoped, tag = 'input window, operand 24, single buffered']
    #allocation13 [shape = 's32[1]{0}', space=sflag, size = 0x4, scoped, tag = 'scoped memory for curvagn_forward.1']
    #allocation14 [shape = 'u8[512]{0}', space=vmem, size = 0x400, scoped, tag = 'input window, operand 25, single buffered']
    #allocation15 [shape = 'u8[512]{0}', space=vmem, size = 0x400, scoped, tag = 'input window, operand 26, single buffered']
    #allocation16 [shape = 's32[1]{0}', space=sflag, size = 0x4, scoped, tag = 'scoped memory for curvagn_forward.1']
    #allocation17 [shape = 'u8[16384]{0}', space=vmem, size = 0x4000, scoped, tag = 'input window, operand 28, single buffered']
    #allocation18 [shape = 'u8[16384]{0}', space=vmem, size = 0x4000, scoped, tag = 'input window, operand 29, single buffered']
    #allocation19 [shape = 's32[1]{0}', space=sflag, size = 0x4, scoped, tag = 'scoped memory for curvagn_forward.1']
    #allocation20 [shape = 'u8[512]{0}', space=vmem, size = 0x400, scoped, tag = 'input window, operand 30, single buffered']
    #allocation21 [shape = 'u8[512]{0}', space=vmem, size = 0x400, scoped, tag = 'input window, operand 31, single buffered']
    #allocation22 [shape = 's32[1]{0}', space=sflag, size = 0x4, scoped, tag = 'scoped memory for curvagn_forward.1']
    #allocation23 [shape = 'u8[512]{0}', space=vmem, size = 0x400, scoped, tag = 'input window, operand 32, single buffered']
    #allocation24 [shape = 'u8[16384]{0}', space=vmem, size = 0x4000, scoped, tag = 'input window, operand 36, single buffered']
    #allocation25 [shape = 's32[1]{0}', space=sflag, size = 0x4, scoped, tag = 'scoped memory for curvagn_forward.1']
    #allocation26 [shape = 'u8[512]{0}', space=vmem, size = 0x400, scoped, tag = 'output window, operand 0, single buffered']
    #allocation27 [shape = 'u8[512]{0}', space=vmem, size = 0x400, scoped, tag = 'output window, operand 1, single buffered']
    #allocation28 [shape = 's32[1]{0}', space=sflag, size = 0x4, scoped, tag = 'scoped memory for curvagn_forward.1']
    %95 = vsyncpa [#allocation4], 0
    %96 = vsyncpa [#allocation7], 0
    %97 = vsyncpa [#allocation10], 0
    %98 = vsyncpa [#allocation13], 0
    %99 = vsyncpa [#allocation16], 0
    %100 = vsyncpa [#allocation19], 0
    %101 = vsyncpa [#allocation22], 0
    %102 = vsyncpa [#allocation25], 0
    %103 = vsyncpa [#allocation5], 0
    %104 = vsyncpa [#allocation28], 0
    // Predicated region
    $region2: #{curvagn_forward.1} parent=1 // pred_check
      _
    $region3: #{curvagn_forward.1} parent=1 // pred_check_branch
      %106 = sbr.rel (0) target = $region5
    $region4: #{curvagn_forward.1} parent=1 // pred_region
      _
    $region5: #{curvagn_forward.1} parent=1 // pred_fallthru
      _
    // Predicated region
    $region6: #{curvagn_forward.1} parent=1 // pred_check
      _
    $region7: #{curvagn_forward.1} parent=1 // pred_check_branch
      %108 = sbr.rel (0) target = $region9
    $region8: #{curvagn_forward.1} parent=1 // pred_region
      _
    $region9: #{curvagn_forward.1} parent=1 // pred_fallthru
      _
    // Predicated region
    $region10: #{curvagn_forward.1} parent=1 // pred_check
      _
    $region11: #{curvagn_forward.1} parent=1 // pred_check_branch
      %110 = sbr.rel (0) target = $region13
    $region12: #{curvagn_forward.1} parent=1 // pred_region
      _
    $region13: #{curvagn_forward.1} parent=1 // pred_fallthru
      _
    // Predicated region
    $region14: #{curvagn_forward.1} parent=1 // pred_check
      _
    $region15: #{curvagn_forward.1} parent=1 // pred_check_branch
      %112 = sbr.rel (0) target = $region17
    $region16: #{curvagn_forward.1} parent=1 // pred_region
      _
    $region17: #{curvagn_forward.1} parent=1 // pred_fallthru
      _
    // Predicated region
    $region18: #{curvagn_forward.1} parent=1 // pred_check
      _
    $region19: #{curvagn_forward.1} parent=1 // pred_check_branch
      %114 = sbr.rel (0) target = $region21
    $region20: #{curvagn_forward.1} parent=1 // pred_region
      _
    $region21: #{curvagn_forward.1} parent=1 // pred_fallthru
      _
    // Predicated region
    $region22: #{curvagn_forward.1} parent=1 // pred_check
      _
    $region23: #{curvagn_forward.1} parent=1 // pred_check_branch
      %116 = sbr.rel (0) target = $region25
    $region24: #{curvagn_forward.1} parent=1 // pred_region
      _
    $region25: #{curvagn_forward.1} parent=1 // pred_fallthru
      _
    // Predicated region
    $region26: #{curvagn_forward.1} parent=1 // pred_check
      _
    $region27: #{curvagn_forward.1} parent=1 // pred_check_branch
      %118 = sbr.rel (0) target = $region29
    $region28: #{curvagn_forward.1} parent=1 // pred_region
      _
    $region29: #{curvagn_forward.1} parent=1 // pred_fallthru
      _
    // Predicated region
    $region30: #{curvagn_forward.1} parent=1 // pred_check
      _
    $region31: #{curvagn_forward.1} parent=1 // pred_check_branch
      %120 = sbr.rel (0) target = $region33
    $region32: #{curvagn_forward.1} parent=1 // pred_region
      _
    $region33: #{curvagn_forward.1} parent=1 // pred_fallthru
      _
    // Predicated region
    $region34: #{curvagn_forward.1} parent=1 // pred_check
      _
    $region35: #{curvagn_forward.1} parent=1 // pred_check_branch
      %122 = sbr.rel (0) target = $region37
    $region36: #{curvagn_forward.1} parent=1 // pred_region
      _
    $region37: #{curvagn_forward.1} parent=1 // pred_fallthru
      _
    // Predicated region
    $region38: #{curvagn_forward.1} parent=1 // pred_check
      _
    $region39: #{curvagn_forward.1} parent=1 // pred_check_branch
      %124 = sbr.rel (0) target = $region41
    $region40: #{curvagn_forward.1} parent=1 // pred_region
      _
    $region41: #{curvagn_forward.1} parent=1 // pred_fallthru
      _
    // Predicated region
    $region42: #{curvagn_forward.1} parent=1 // pred_check
      _
    $region43: #{curvagn_forward.1} parent=1 // pred_check_branch
      %126 = sbr.rel (0) target = $region45
    $region44: #{curvagn_forward.1} parent=1 // pred_region
      _
    $region45: #{curvagn_forward.1} parent=1 // pred_fallthru
      _
    // Predicated region
    $region46: #{curvagn_forward.1} parent=1 // pred_check
      _
    $region47: #{curvagn_forward.1} parent=1 // pred_check_branch
      %128 = sbr.rel (0) target = $region49
    $region48: #{curvagn_forward.1} parent=1 // pred_region
      _
    $region49: #{curvagn_forward.1} parent=1 // pred_fallthru
      _
    // Predicated region
    $region50: #{curvagn_forward.1} parent=1 // pred_check
      _
    $region51: #{curvagn_forward.1} parent=1 // pred_check_branch
      %130 = sbr.rel (0) target = $region53
    $region52: #{curvagn_forward.1} parent=1 // pred_region
      %132 = vsyncadd [#allocation4], 0
      %s134 = sshll.u32 %s25, 4
      %s135 = int_to_ptr.hbm [resolvable:$true] %s134
      %s136 = sshll.u32 [#allocation3], 4
      %s137 = int_to_ptr.vmem [resolvable:$true] %s136
      %139 = dma.hbm_to_vmem [thread:$0]  %s135, 16, %s137, [#allocation4]
    $region53: #{curvagn_forward.1} parent=1 // pred_fallthru
      _
    // Predicated region
    $region54: #{curvagn_forward.1} parent=1 // pred_check
      _
    $region55: #{curvagn_forward.1} parent=1 // pred_check_branch
      %141 = sbr.rel (0) target = $region57
    $region56: #{curvagn_forward.1} parent=1 // pred_region
      _
    $region57: #{curvagn_forward.1} parent=1 // pred_fallthru
      _
    // Predicated region
    $region58: #{curvagn_forward.1} parent=1 // pred_check
      _
    $region59: #{curvagn_forward.1} parent=1 // pred_check_branch
      %143 = sbr.rel (0) target = $region61
    $region60: #{curvagn_forward.1} parent=1 // pred_region
      _
    $region61: #{curvagn_forward.1} parent=1 // pred_fallthru
      _
    // Predicated region
    $region62: #{curvagn_forward.1} parent=1 // pred_check
      _
    $region63: #{curvagn_forward.1} parent=1 // pred_check_branch
      %145 = sbr.rel (0) target = $region65
    $region64: #{curvagn_forward.1} parent=1 // pred_region
      _
    $region65: #{curvagn_forward.1} parent=1 // pred_fallthru
      _
    // Predicated region
    $region66: #{curvagn_forward.1} parent=1 // pred_check
      _
    $region67: #{curvagn_forward.1} parent=1 // pred_check_branch
      %147 = sbr.rel (0) target = $region69
    $region68: #{curvagn_forward.1} parent=1 // pred_region
      _
    $region69: #{curvagn_forward.1} parent=1 // pred_fallthru
      _
    // Predicated region
    $region70: #{curvagn_forward.1} parent=1 // pred_check
      _
    $region71: #{curvagn_forward.1} parent=1 // pred_check_branch
      %149 = sbr.rel (0) target = $region73
    $region72: #{curvagn_forward.1} parent=1 // pred_region
      _
    $region73: #{curvagn_forward.1} parent=1 // pred_fallthru
      _
    // Predicated region
    $region74: #{curvagn_forward.1} parent=1 // pred_check
      _
    $region75: #{curvagn_forward.1} parent=1 // pred_check_branch
      %151 = sbr.rel (0) target = $region77
    $region76: #{curvagn_forward.1} parent=1 // pred_region
      _
    $region77: #{curvagn_forward.1} parent=1 // pred_fallthru
      _
    // Predicated region
    $region78: #{curvagn_forward.1} parent=1 // pred_check
      _
    $region79: #{curvagn_forward.1} parent=1 // pred_check_branch
      %153 = sbr.rel (0) target = $region81
    $region80: #{curvagn_forward.1} parent=1 // pred_region
      %155 = vsyncadd [#allocation7], 0
      %s157 = sshll.u32 %s39, 4
      %s158 = int_to_ptr.hbm [resolvable:$true] %s157
      %s159 = sshll.u32 [#allocation6], 4
      %s160 = int_to_ptr.vmem [resolvable:$true] %s159
      %162 = dma.hbm_to_vmem [thread:$0]  %s158, 16, %s160, [#allocation7]
    $region81: #{curvagn_forward.1} parent=1 // pred_fallthru
      _
    // Predicated region
    $region82: #{curvagn_forward.1} parent=1 // pred_check
      _
    $region83: #{curvagn_forward.1} parent=1 // pred_check_branch
      %164 = sbr.rel (0) target = $region85
    $region84: #{curvagn_forward.1} parent=1 // pred_region
      %166 = vsyncadd [#allocation7], 0
      %s168 = sshll.u32 %s41, 4
      %s169 = int_to_ptr.hbm [resolvable:$true] %s168
      %s170 = sshll.u32 [#allocation8], 4
      %s171 = int_to_ptr.vmem [resolvable:$true] %s170
      %173 = dma.hbm_to_vmem [thread:$0]  %s169, 16, %s171, [#allocation7]
    $region85: #{curvagn_forward.1} parent=1 // pred_fallthru
      _
    // Predicated region
    $region86: #{curvagn_forward.1} parent=1 // pred_check
      _
    $region87: #{curvagn_forward.1} parent=1 // pred_check_branch
      %175 = sbr.rel (0) target = $region89
    $region88: #{curvagn_forward.1} parent=1 // pred_region
      %177 = vsyncadd [#allocation10], 0
      %s179 = sshll.u32 %s43, 4
      %s180 = int_to_ptr.hbm [resolvable:$true] %s179
      %s181 = sshll.u32 [#allocation9], 4
      %s182 = int_to_ptr.vmem [resolvable:$true] %s181
      %184 = dma.hbm_to_vmem [thread:$0]  %s180, 16, %s182, [#allocation10]
    $region89: #{curvagn_forward.1} parent=1 // pred_fallthru
      _
    // Predicated region
    $region90: #{curvagn_forward.1} parent=1 // pred_check
      _
    $region91: #{curvagn_forward.1} parent=1 // pred_check_branch
      %186 = sbr.rel (0) target = $region93
    $region92: #{curvagn_forward.1} parent=1 // pred_region
      _
    $region93: #{curvagn_forward.1} parent=1 // pred_fallthru
      _
    // Predicated region
    $region94: #{curvagn_forward.1} parent=1 // pred_check
      _
    $region95: #{curvagn_forward.1} parent=1 // pred_check_branch
      %188 = sbr.rel (0) target = $region97
    $region96: #{curvagn_forward.1} parent=1 // pred_region
      %190 = vsyncadd [#allocation10], 0
      %s192 = sshll.u32 %s47, 4
      %s193 = int_to_ptr.hbm [resolvable:$true] %s192
      %s194 = sshll.u32 [#allocation11], 4
      %s195 = int_to_ptr.vmem [resolvable:$true] %s194
      %197 = dma.hbm_to_vmem [thread:$0]  %s193, 16, %s195, [#allocation10]
    $region97: #{curvagn_forward.1} parent=1 // pred_fallthru
      _
    // Predicated region
    $region98: #{curvagn_forward.1} parent=1 // pred_check
      _
    $region99: #{curvagn_forward.1} parent=1 // pred_check_branch
      %199 = sbr.rel (0) target = $region101
    $region100: #{curvagn_forward.1} parent=1 // pred_region
      %201 = vsyncadd [#allocation13], 0
      %s202 = sshll.u32 %s49, 4
      %s203 = int_to_ptr.hbm [resolvable:$true] %s202
      %s204 = sshll.u32 [#allocation12], 4
      %s205 = int_to_ptr.vmem [resolvable:$true] %s204
      %210 = dma.hbm_to_vmem [thread:$0]  %s203, 512, %s205, [#allocation13], 128, 128, 8
    $region101: #{curvagn_forward.1} parent=1 // pred_fallthru
      _
    // Predicated region
    $region102: #{curvagn_forward.1} parent=1 // pred_check
      _
    $region103: #{curvagn_forward.1} parent=1 // pred_check_branch
      %212 = sbr.rel (0) target = $region105
    $region104: #{curvagn_forward.1} parent=1 // pred_region
      %214 = vsyncadd [#allocation13], 0
      %s216 = sshll.u32 %s51, 4
      %s217 = int_to_ptr.hbm [resolvable:$true] %s216
      %s218 = sshll.u32 [#allocation14], 4
      %s219 = int_to_ptr.vmem [resolvable:$true] %s218
      %221 = dma.hbm_to_vmem [thread:$0]  %s217, 16, %s219, [#allocation13]
    $region105: #{curvagn_forward.1} parent=1 // pred_fallthru
      _
    // Predicated region
    $region106: #{curvagn_forward.1} parent=1 // pred_check
      _
    $region107: #{curvagn_forward.1} parent=1 // pred_check_branch
      %223 = sbr.rel (0) target = $region109
    $region108: #{curvagn_forward.1} parent=1 // pred_region
      %225 = vsyncadd [#allocation16], 0
      %s227 = sshll.u32 %s53, 4
      %s228 = int_to_ptr.hbm [resolvable:$true] %s227
      %s229 = sshll.u32 [#allocation15], 4
      %s230 = int_to_ptr.vmem [resolvable:$true] %s229
      %232 = dma.hbm_to_vmem [thread:$0]  %s228, 16, %s230, [#allocation16]
    $region109: #{curvagn_forward.1} parent=1 // pred_fallthru
      _
    // Predicated region
    $region110: #{curvagn_forward.1} parent=1 // pred_check
      _
    $region111: #{curvagn_forward.1} parent=1 // pred_check_branch
      %234 = sbr.rel (0) target = $region113
    $region112: #{curvagn_forward.1} parent=1 // pred_region
      _
    $region113: #{curvagn_forward.1} parent=1 // pred_fallthru
      _
    // Predicated region
    $region114: #{curvagn_forward.1} parent=1 // pred_check
      _
    $region115: #{curvagn_forward.1} parent=1 // pred_check_branch
      %236 = sbr.rel (0) target = $region117
    $region116: #{curvagn_forward.1} parent=1 // pred_region
      %238 = vsyncadd [#allocation16], 0
      %s239 = sshll.u32 %s57, 4
      %s240 = int_to_ptr.hbm [resolvable:$true] %s239
      %s241 = sshll.u32 [#allocation17], 4
      %s242 = int_to_ptr.vmem [resolvable:$true] %s241
      %247 = dma.hbm_to_vmem [thread:$0]  %s240, 512, %s242, [#allocation16], 128, 128, 8
    $region117: #{curvagn_forward.1} parent=1 // pred_fallthru
      _
    // Predicated region
    $region118: #{curvagn_forward.1} parent=1 // pred_check
      _
    $region119: #{curvagn_forward.1} parent=1 // pred_check_branch
      %249 = sbr.rel (0) target = $region121
    $region120: #{curvagn_forward.1} parent=1 // pred_region
      %251 = vsyncadd [#allocation19], 0
      %s252 = sshll.u32 %s59, 4
      %s253 = int_to_ptr.hbm [resolvable:$true] %s252
      %s254 = sshll.u32 [#allocation18], 4
      %s255 = int_to_ptr.vmem [resolvable:$true] %s254
      %260 = dma.hbm_to_vmem [thread:$0]  %s253, 512, %s255, [#allocation19], 128, 128, 8
    $region121: #{curvagn_forward.1} parent=1 // pred_fallthru
      _
    // Predicated region
    $region122: #{curvagn_forward.1} parent=1 // pred_check
      _
    $region123: #{curvagn_forward.1} parent=1 // pred_check_branch
      %262 = sbr.rel (0) target = $region125
    $region124: #{curvagn_forward.1} parent=1 // pred_region
      %264 = vsyncadd [#allocation19], 0
      %s266 = sshll.u32 %s61, 4
      %s267 = int_to_ptr.hbm [resolvable:$true] %s266
      %s268 = sshll.u32 [#allocation20], 4
      %s269 = int_to_ptr.vmem [resolvable:$true] %s268
      %271 = dma.hbm_to_vmem [thread:$0]  %s267, 16, %s269, [#allocation19]
    $region125: #{curvagn_forward.1} parent=1 // pred_fallthru
      _
    // Predicated region
    $region126: #{curvagn_forward.1} parent=1 // pred_check
      _
    $region127: #{curvagn_forward.1} parent=1 // pred_check_branch
      %273 = sbr.rel (0) target = $region129
    $region128: #{curvagn_forward.1} parent=1 // pred_region
      %275 = vsyncadd [#allocation22], 0
      %s277 = sshll.u32 %s63, 4
      %s278 = int_to_ptr.hbm [resolvable:$true] %s277
      %s279 = sshll.u32 [#allocation21], 4
      %s280 = int_to_ptr.vmem [resolvable:$true] %s279
      %282 = dma.hbm_to_vmem [thread:$0]  %s278, 16, %s280, [#allocation22]
    $region129: #{curvagn_forward.1} parent=1 // pred_fallthru
      _
    // Predicated region
    $region130: #{curvagn_forward.1} parent=1 // pred_check
      _
    $region131: #{curvagn_forward.1} parent=1 // pred_check_branch
      %284 = sbr.rel (0) target = $region133
    $region132: #{curvagn_forward.1} parent=1 // pred_region
      %286 = vsyncadd [#allocation22], 0
      %s288 = sshll.u32 %s65, 4
      %s289 = int_to_ptr.hbm [resolvable:$true] %s288
      %s290 = sshll.u32 [#allocation23], 4
      %s291 = int_to_ptr.vmem [resolvable:$true] %s290
      %293 = dma.hbm_to_vmem [thread:$0]  %s289, 16, %s291, [#allocation22]
    $region133: #{curvagn_forward.1} parent=1 // pred_fallthru
      _
    // Predicated region
    $region134: #{curvagn_forward.1} parent=1 // pred_check
      _
    $region135: #{curvagn_forward.1} parent=1 // pred_check_branch
      %295 = sbr.rel (0) target = $region137
    $region136: #{curvagn_forward.1} parent=1 // pred_region
      _
    $region137: #{curvagn_forward.1} parent=1 // pred_fallthru
      _
    // Predicated region
    $region138: #{curvagn_forward.1} parent=1 // pred_check
      _
    $region139: #{curvagn_forward.1} parent=1 // pred_check_branch
      %297 = sbr.rel (0) target = $region141
    $region140: #{curvagn_forward.1} parent=1 // pred_region
      _
    $region141: #{curvagn_forward.1} parent=1 // pred_fallthru
      _
    // Predicated region
    $region142: #{curvagn_forward.1} parent=1 // pred_check
      _
    $region143: #{curvagn_forward.1} parent=1 // pred_check_branch
      %299 = sbr.rel (0) target = $region145
    $region144: #{curvagn_forward.1} parent=1 // pred_region
      _
    $region145: #{curvagn_forward.1} parent=1 // pred_fallthru
      _
    // Predicated region
    $region146: #{curvagn_forward.1} parent=1 // pred_check
      _
    $region147: #{curvagn_forward.1} parent=1 // pred_check_branch
      %301 = sbr.rel (0) target = $region149
    $region148: #{curvagn_forward.1} parent=1 // pred_region
      %303 = vsyncadd [#allocation25], 0
      %s304 = sshll.u32 %s73, 4
      %s305 = int_to_ptr.hbm [resolvable:$true] %s304
      %s306 = sshll.u32 [#allocation24], 4
      %s307 = int_to_ptr.vmem [resolvable:$true] %s306
      %312 = dma.hbm_to_vmem [thread:$0]  %s305, 512, %s307, [#allocation25], 128, 128, 8
    $region149: #{curvagn_forward.1} parent=1 // pred_fallthru
      _
    // Predicated region
    $region150: #{curvagn_forward.1} parent=1 // pred_check
      _
    $region151: #{curvagn_forward.1} parent=1 // pred_check_branch
      %314 = sbr.rel (0) target = $region153
    $region152: #{curvagn_forward.1} parent=1 // pred_region
      _
    $region153: #{curvagn_forward.1} parent=1 // pred_fallthru
      _
    // Predicated region
    $region154: #{curvagn_forward.1} parent=1 // pred_check
      _
    $region155: #{curvagn_forward.1} parent=1 // pred_check_branch
      %316 = sbr.rel (0) target = $region157
    $region156: #{curvagn_forward.1} parent=1 // pred_region
      _
    $region157: #{curvagn_forward.1} parent=1 // pred_fallthru
      _
    // Predicated region
    $region158: #{curvagn_forward.1} parent=1 // pred_check
      _
    $region159: #{curvagn_forward.1} parent=1 // pred_check_branch
      %318 = sbr.rel (0) target = $region161
    $region160: #{curvagn_forward.1} parent=1 // pred_region
      _
    $region161: #{curvagn_forward.1} parent=1 // pred_fallthru
      _
    // Predicated region
    $region162: #{curvagn_forward.1} parent=1 // pred_check
      _
    $region163: #{curvagn_forward.1} parent=1 // pred_check_branch
      %320 = sbr.rel (0) target = $region165
    $region164: #{curvagn_forward.1} parent=1 // pred_region
      _
    $region165: #{curvagn_forward.1} parent=1 // pred_fallthru
      _
    // Predicated region
    $region166: #{curvagn_forward.1} parent=1 // pred_check
      _
    $region167: #{curvagn_forward.1} parent=1 // pred_check_branch
      %322 = sbr.rel (0) target = $region169
    $region168: #{curvagn_forward.1} parent=1 // pred_region
      _
    $region169: #{curvagn_forward.1} parent=1 // pred_fallthru
      _
    // Predicated region
    $region170: #{curvagn_forward.1} parent=1 // pred_check
      _
    $region171: #{curvagn_forward.1} parent=1 // pred_check_branch
      %324 = sbr.rel (0) target = $region173
    $region172: #{curvagn_forward.1} parent=1 // pred_region
      %326 = dma.done [#allocation4], 16
    $region173: #{curvagn_forward.1} parent=1 // pred_fallthru
      _
    // Predicated region
    $region174: #{curvagn_forward.1} parent=1 // pred_check
      _
    $region175: #{curvagn_forward.1} parent=1 // pred_check_branch
      %328 = sbr.rel (0) target = $region177
    $region176: #{curvagn_forward.1} parent=1 // pred_region
      %330 = dma.done [#allocation7], 16
    $region177: #{curvagn_forward.1} parent=1 // pred_fallthru
      _
    // Predicated region
    $region178: #{curvagn_forward.1} parent=1 // pred_check
      _
    $region179: #{curvagn_forward.1} parent=1 // pred_check_branch
      %332 = sbr.rel (0) target = $region181
    $region180: #{curvagn_forward.1} parent=1 // pred_region
      %334 = dma.done [#allocation7], 16
    $region181: #{curvagn_forward.1} parent=1 // pred_fallthru
      _
    // Predicated region
    $region182: #{curvagn_forward.1} parent=1 // pred_check
      _
    $region183: #{curvagn_forward.1} parent=1 // pred_check_branch
      %336 = sbr.rel (0) target = $region185
    $region184: #{curvagn_forward.1} parent=1 // pred_region
      %338 = dma.done [#allocation10], 16
    $region185: #{curvagn_forward.1} parent=1 // pred_fallthru
      _
    // Predicated region
    $region186: #{curvagn_forward.1} parent=1 // pred_check
      _
    $region187: #{curvagn_forward.1} parent=1 // pred_check_branch
      %340 = sbr.rel (0) target = $region189
    $region188: #{curvagn_forward.1} parent=1 // pred_region
      %342 = dma.done [#allocation10], 16
    $region189: #{curvagn_forward.1} parent=1 // pred_fallthru
      _
    // Predicated region
    $region190: #{curvagn_forward.1} parent=1 // pred_check
      _
    $region191: #{curvagn_forward.1} parent=1 // pred_check_branch
      %344 = sbr.rel (0) target = $region193
    $region192: #{curvagn_forward.1} parent=1 // pred_region
      %346 = dma.done [#allocation13], 512
    $region193: #{curvagn_forward.1} parent=1 // pred_fallthru
      _
    // Predicated region
    $region194: #{curvagn_forward.1} parent=1 // pred_check
      _
    $region195: #{curvagn_forward.1} parent=1 // pred_check_branch
      %348 = sbr.rel (0) target = $region197
    $region196: #{curvagn_forward.1} parent=1 // pred_region
      %350 = dma.done [#allocation13], 16
    $region197: #{curvagn_forward.1} parent=1 // pred_fallthru
      _
    // Predicated region
    $region198: #{curvagn_forward.1} parent=1 // pred_check
      _
    $region199: #{curvagn_forward.1} parent=1 // pred_check_branch
      %352 = sbr.rel (0) target = $region201
    $region200: #{curvagn_forward.1} parent=1 // pred_region
      %354 = dma.done [#allocation16], 16
    $region201: #{curvagn_forward.1} parent=1 // pred_fallthru
      _
    // Predicated region
    $region202: #{curvagn_forward.1} parent=1 // pred_check
      _
    $region203: #{curvagn_forward.1} parent=1 // pred_check_branch
      %356 = sbr.rel (0) target = $region205
    $region204: #{curvagn_forward.1} parent=1 // pred_region
      %358 = dma.done [#allocation16], 512
    $region205: #{curvagn_forward.1} parent=1 // pred_fallthru
      _
    // Predicated region
    $region206: #{curvagn_forward.1} parent=1 // pred_check
      _
    $region207: #{curvagn_forward.1} parent=1 // pred_check_branch
      %360 = sbr.rel (0) target = $region209
    $region208: #{curvagn_forward.1} parent=1 // pred_region
      %362 = dma.done [#allocation19], 512
    $region209: #{curvagn_forward.1} parent=1 // pred_fallthru
      _
    // Predicated region
    $region210: #{curvagn_forward.1} parent=1 // pred_check
      _
    $region211: #{curvagn_forward.1} parent=1 // pred_check_branch
      %364 = sbr.rel (0) target = $region213
    $region212: #{curvagn_forward.1} parent=1 // pred_region
      %366 = dma.done [#allocation19], 16
    $region213: #{curvagn_forward.1} parent=1 // pred_fallthru
      _
    // Predicated region
    $region214: #{curvagn_forward.1} parent=1 // pred_check
      _
    $region215: #{curvagn_forward.1} parent=1 // pred_check_branch
      %368 = sbr.rel (0) target = $region217
    $region216: #{curvagn_forward.1} parent=1 // pred_region
      %370 = dma.done [#allocation22], 16
    $region217: #{curvagn_forward.1} parent=1 // pred_fallthru
      _
    // Predicated region
    $region218: #{curvagn_forward.1} parent=1 // pred_check
      _
    $region219: #{curvagn_forward.1} parent=1 // pred_check_branch
      %372 = sbr.rel (0) target = $region221
    $region220: #{curvagn_forward.1} parent=1 // pred_region
      %374 = dma.done [#allocation22], 16
    $region221: #{curvagn_forward.1} parent=1 // pred_fallthru
      _
    // Predicated region
    $region222: #{curvagn_forward.1} parent=1 // pred_check
      _
    $region223: #{curvagn_forward.1} parent=1 // pred_check_branch
      %376 = sbr.rel (0) target = $region225
    $region224: #{curvagn_forward.1} parent=1 // pred_region
      %378 = dma.done [#allocation25], 512
    $region225: #{curvagn_forward.1} parent=1 // pred_fallthru
      _
    %v379 = vld [vmem:[%s3] sm:$0xff]
    %v380 = vld [vmem:[%s3 + $0x8] sm:$0xff]
    %v381 = vld [vmem:[%s3 + $0x10] sm:$0xff]
    %v382 = vld [vmem:[%s17] sm:$0x1]
    %384 = vset.pattern.permute.xlu0 0
    %385 = vperm.xlu0 %384, %v379
    %v386 = vpop.permute.xlu0 %385
    %389 = vset.pattern.permute.xlu0 0
    %390 = vperm.xlu0 %389, %v380
    %v391 = vpop.permute.xlu0 %390
    %394 = vset.pattern.permute.xlu0 0
    %395 = vperm.xlu0 %394, %v381
    %v396 = vpop.permute.xlu0 %395
    %v399 = vperm.slane %v382, 0
    %v401 = vsub.f32 %v386, %v399
    %v402 = vsub.f32 %v391, %v399
    %v403 = vsub.f32 %v396, %v399
    %v404 = vmul.f32 %v401, %v401
    %v405 = vmul.f32 %v402, %v402
    %v406 = vmul.f32 %v403, %v403
    %v407 = vmul.f32 %v404, -10.0
    %v408 = vmul.f32 %v405, -10.0
    %v409 = vmul.f32 %v406, -10.0
    %v410 = vmul.f32 %v407, 1.442695
    %v411 = vpow.pop %v410
    %v412 = vmul.f32 %v408, 1.442695
    %v413 = vpow.pop %v412
    %v414 = vmul.f32 %v409, 1.442695
    %v415 = vpow.pop %v414
    %v416 = vld [vmem:[%s19] sm:$0xff]
    %v417 = vld [vmem:[%s21] sm:$0x1]
    %v419 = vperm.slane %v417, 0
    %vm421 = vcmask 64512
    %v423 = vsel %vm421, %v411, 0
    %v426 = vsel %vm421, %v413, 0
    %v429 = vsel %vm421, %v415, 0
    %431 = vmatpush.msra.mxu0 0.0
    %432 = vmatpush.msra.mxu0 0.0
    %433 = vmatpush.msra.mxu0 0.0
    %434 = vmatpush.msra.mxu0 0.0
    %435 = vmatpush.msra.mxu0 0.0
    %436 = vmatpush.msra.mxu0 0.0
    %437 = vmatpush.msra.mxu0 0.0
    %438 = vmatpush.msra.mxu0 0.0
    %439 = vmatpush.msra.mxu0 0.0
    %440 = vmatpush.msra.mxu0 0.0
    %441 = vmatpush.msra.mxu0 0.0
    %442 = vmatpush.msra.mxu0 0.0
    %443 = vmatpush.msra.mxu0 0.0
    %444 = vmatpush.msra.mxu0 0.0
    %445 = vmatpush.msra.mxu0 0.0
    %446 = vmatpush.msra.mxu0 %v416
    %447 = vmatmul.f32.gmra.mxu0 %v423
    %v448 = vpop.f32.mrf.mxu0
    %v449 = vadd.f32 %v419, %v448
    %450 = vmatmul.f32.gmra.mxu0 %v426
    %v451 = vpop.f32.mrf.mxu0
    %v452 = vadd.f32 %v419, %v451
    %453 = vmatmul.f32.gmra.mxu0 %v429
    %v454 = vpop.f32.mrf.mxu0
    %v455 = vadd.f32 %v419, %v454
    %456 = vdwg.mxu0
    %v457 = vmax.f32 %v449, 0.0
    %v458 = vmax.f32 %v452, 0.0
    %v459 = vmax.f32 %v455, 0.0
    %v460 = vld [vmem:[%s5] sm:$0xff]
    %v461 = vld [vmem:[%s5 + $0x8] sm:$0xff]
    %v462 = vld [vmem:[%s5 + $0x10] sm:$0xff]
    %v463 = vld [vmem:[%s7] sm:$0xff]
    %v464 = vld [vmem:[%s7 + $0x8] sm:$0xff]
    %v465 = vld [vmem:[%s7 + $0x10] sm:$0xff]
    %v466 = vld [vmem:[%s11] sm:$0xff]
    %v467 = vlaneseq
    %v468 = vshrl.u32 %v467, 7
    %v469 = vadd.s32 %v468, 8
    %v470 = vadd.s32 %v468, 16
    %v471 = vadd.s32 %v468, 24
    %v472 = vadd.s32 %v468, 32
    %v473 = vadd.s32 %v468, 40
    %v474 = vadd.s32 %v468, 48
    %v475 = vadd.s32 %v468, 56
    %v476 = vadd.s32 %v468, 64
    %v477 = vadd.s32 %v468, 72
    %v478 = vadd.s32 %v468, 80
    %v479 = vadd.s32 %v468, 88
    %v480 = vadd.s32 %v468, 96
    %v481 = vadd.s32 %v468, 104
    %v482 = vadd.s32 %v468, 112
    %v483 = vadd.s32 %v468, 120
    %v484 = vlaneseq
    %v485 = vand.u32 %v484, 127
    %v486 = vmul.u32 %v485, 32
    %vm487 = vcmp.ge.s32.totalorder %v468, %v486
    %vm488 = vcmp.ge.s32.totalorder %v469, %v486
    %vm489 = vcmp.ge.s32.totalorder %v470, %v486
    %vm490 = vcmp.ge.s32.totalorder %v471, %v486
    %vm491 = vcmp.ge.s32.totalorder %v472, %v486
    %vm492 = vcmp.ge.s32.totalorder %v473, %v486
    %vm493 = vcmp.ge.s32.totalorder %v474, %v486
    %vm494 = vcmp.ge.s32.totalorder %v475, %v486
    %vm495 = vcmp.ge.s32.totalorder %v476, %v486
    %vm496 = vcmp.ge.s32.totalorder %v477, %v486
    %vm497 = vcmp.ge.s32.totalorder %v478, %v486
    %vm498 = vcmp.ge.s32.totalorder %v479, %v486
    %vm499 = vcmp.ge.s32.totalorder %v480, %v486
    %vm500 = vcmp.ge.s32.totalorder %v481, %v486
    %vm501 = vcmp.ge.s32.totalorder %v482, %v486
    %vm502 = vcmp.ge.s32.totalorder %v483, %v486
    %v503 = vadd.s32 %v485, 1
    %v504 = vmul.u32 %v503, 32
    %vm505 = vcmp.lt.s32.totalorder %v468, %v504
    %vm506 = vcmp.lt.s32.totalorder %v469, %v504
    %vm507 = vcmp.lt.s32.totalorder %v470, %v504
    %vm508 = vcmp.lt.s32.totalorder %v471, %v504
    %vm509 = vcmp.lt.s32.totalorder %v472, %v504
    %vm510 = vcmp.lt.s32.totalorder %v473, %v504
    %vm511 = vcmp.lt.s32.totalorder %v474, %v504
    %vm512 = vcmp.lt.s32.totalorder %v475, %v504
    %vm513 = vcmp.lt.s32.totalorder %v476, %v504
    %vm514 = vcmp.lt.s32.totalorder %v477, %v504
    %vm515 = vcmp.lt.s32.totalorder %v478, %v504
    %vm516 = vcmp.lt.s32.totalorder %v479, %v504
    %vm517 = vcmp.lt.s32.totalorder %v480, %v504
    %vm518 = vcmp.lt.s32.totalorder %v481, %v504
    %vm519 = vcmp.lt.s32.totalorder %v482, %v504
    %vm520 = vcmp.lt.s32.totalorder %v483, %v504
    %vm521 = vmand %vm487, %vm505
    %vm522 = vmand %vm488, %vm506
    %vm523 = vmand %vm489, %vm507
    %vm524 = vmand %vm490, %vm508
    %vm525 = vmand %vm491, %vm509
    %vm526 = vmand %vm492, %vm510
    %vm527 = vmand %vm493, %vm511
    %vm528 = vmand %vm494, %vm512
    %vm529 = vmand %vm495, %vm513
    %vm530 = vmand %vm496, %vm514
    %vm531 = vmand %vm497, %vm515
    %vm532 = vmand %vm498, %vm516
    %vm533 = vmand %vm499, %vm517
    %vm534 = vmand %vm500, %vm518
    %vm535 = vmand %vm501, %vm519
    %vm536 = vmand %vm502, %vm520
    %v537 = vsel %vm521, 1, 0
    %v538 = vsel %vm522, 1, 0
    %v539 = vsel %vm523, 1, 0
    %v540 = vsel %vm524, 1, 0
    %v541 = vsel %vm525, 1, 0
    %v542 = vsel %vm526, 1, 0
    %v543 = vsel %vm527, 1, 0
    %v544 = vsel %vm528, 1, 0
    %v545 = vsel %vm529, 1, 0
    %v546 = vsel %vm530, 1, 0
    %v547 = vsel %vm531, 1, 0
    %v548 = vsel %vm532, 1, 0
    %v549 = vsel %vm533, 1, 0
    %v550 = vsel %vm534, 1, 0
    %v551 = vsel %vm535, 1, 0
    %v552 = vsel %vm536, 1, 0
    %v553 = vcvt.s32.f32 %v537
    %v554 = vcvt.s32.f32 %v538
    %v555 = vcvt.s32.f32 %v539
    %v556 = vcvt.s32.f32 %v540
    %v557 = vcvt.s32.f32 %v541
    %v558 = vcvt.s32.f32 %v542
    %v559 = vcvt.s32.f32 %v543
    %v560 = vcvt.s32.f32 %v544
    %v561 = vcvt.s32.f32 %v545
    %v562 = vcvt.s32.f32 %v546
    %v563 = vcvt.s32.f32 %v547
    %v564 = vcvt.s32.f32 %v548
    %v565 = vcvt.s32.f32 %v549
    %v566 = vcvt.s32.f32 %v550
    %v567 = vcvt.s32.f32 %v551
    %v568 = vcvt.s32.f32 %v552
    %v569 = vld [vmem:[%s1] sm:$0xff]
    %v571 = vsel %vm421, %v460, 0
    %v574 = vsel %vm421, %v461, 0
    %v577 = vsel %vm421, %v462, 0
    %579 = vmatpush.msra.mxu0 0.0
    %580 = vmatpush.msra.mxu0 0.0
    %581 = vmatpush.msra.mxu0 0.0
    %582 = vmatpush.msra.mxu0 0.0
    %583 = vmatpush.msra.mxu0 0.0
    %584 = vmatpush.msra.mxu0 0.0
    %585 = vmatpush.msra.mxu0 0.0
    %586 = vmatpush.msra.mxu0 0.0
    %587 = vmatpush.msra.mxu0 0.0
    %588 = vmatpush.msra.mxu0 0.0
    %589 = vmatpush.msra.mxu0 0.0
    %590 = vmatpush.msra.mxu0 0.0
    %591 = vmatpush.msra.mxu0 0.0
    %592 = vmatpush.msra.mxu0 0.0
    %593 = vmatpush.msra.mxu0 0.0
    %594 = vmatpush.msra.mxu0 %v569
    %595 = vmatmul.f32.gmra.mxu0 %v571
    %v596 = vpop.f32.mrf.mxu0
    %v597 = vadd.f32 0.0, %v596
    %598 = vmatmul.f32.gmra.mxu0 %v574
    %v599 = vpop.f32.mrf.mxu0
    %v600 = vadd.f32 0.0, %v599
    %601 = vmatmul.f32.gmra.mxu0 %v577
    %v602 = vpop.f32.mrf.mxu0
    %v603 = vadd.f32 0.0, %v602
    %604 = vdwg.mxu0
    %v606 = vsel %vm421, %v463, 0
    %v609 = vsel %vm421, %v464, 0
    %v612 = vsel %vm421, %v465, 0
    %614 = vmatpush.msra.mxu0 0.0
    %615 = vmatpush.msra.mxu0 0.0
    %616 = vmatpush.msra.mxu0 0.0
    %617 = vmatpush.msra.mxu0 0.0
    %618 = vmatpush.msra.mxu0 0.0
    %619 = vmatpush.msra.mxu0 0.0
    %620 = vmatpush.msra.mxu0 0.0
    %621 = vmatpush.msra.mxu0 0.0
    %622 = vmatpush.msra.mxu0 0.0
    %623 = vmatpush.msra.mxu0 0.0
    %624 = vmatpush.msra.mxu0 0.0
    %625 = vmatpush.msra.mxu0 0.0
    %626 = vmatpush.msra.mxu0 0.0
    %627 = vmatpush.msra.mxu0 0.0
    %628 = vmatpush.msra.mxu0 0.0
    %629 = vmatpush.msra.mxu0 %v569
    %630 = vmatmul.f32.gmra.mxu0 %v606
    %v631 = vpop.f32.mrf.mxu0
    %v632 = vadd.f32 0.0, %v631
    %633 = vmatmul.f32.gmra.mxu0 %v609
    %v634 = vpop.f32.mrf.mxu0
    %v635 = vadd.f32 0.0, %v634
    %636 = vmatmul.f32.gmra.mxu0 %v612
    %v637 = vpop.f32.mrf.mxu0
    %v638 = vadd.f32 0.0, %v637
    %639 = vdwg.mxu0
    %643 = vrot.lane.b32.xlu0 %v632, 16
    %v644 = vpop.permute.xlu0 %643
    %645 = vrot.lane.b32.xlu0 %v635, 16
    %v646 = vpop.permute.xlu0 %645
    %647 = vrot.lane.b32.xlu0 %v638, 16
    %v648 = vpop.permute.xlu0 %647
    %655 = vrot.lane.b32.xlu0 %v457, 32
    %v656 = vpop.permute.xlu0 %655
    %657 = vrot.lane.b32.xlu0 %v458, 32
    %v658 = vpop.permute.xlu0 %657
    %659 = vrot.lane.b32.xlu0 %v459, 32
    %v660 = vpop.permute.xlu0 %659
    %vm664 = vcmask 130048
    %v665 = vsel %vm664, %v597, %v644
    %v666 = vsel %vm664, %v600, %v646
    %v667 = vsel %vm664, %v603, %v648
    %vm668 = vcmask 261120
    %v669 = vsel %vm668, %v665, %v656
    %v670 = vsel %vm668, %v666, %v658
    %v671 = vsel %vm668, %v667, %v660
    %v672 = vld [vmem:[%s23] sm:$0xff]
    %v673 = vld [vmem:[%s23 + $0x8] sm:$0xff]
    %v674 = vld [vmem:[%s23 + $0x10] sm:$0xff]
    %v675 = vld [vmem:[%s23 + $0x18] sm:$0xff]
    %v676 = vld [vmem:[%s23 + $0x20] sm:$0xff]
    %v677 = vld [vmem:[%s23 + $0x28] sm:$0xff]
    %v678 = vld [vmem:[%s23 + $0x30] sm:$0xff]
    %v679 = vld [vmem:[%s23 + $0x38] sm:$0xff]
    %v680 = vld [vmem:[#allocation3] sm:$0x1]
    %v682 = vperm.slane %v680, 0
    %vm684 = vcmask 523264
    %v686 = vsel %vm684, %v669, 0
    %v689 = vsel %vm684, %v670, 0
    %v692 = vsel %vm684, %v671, 0
    %694 = vmatpush.msra.mxu0 0.0
    %695 = vmatpush.msra.mxu0 0.0
    %696 = vmatpush.msra.mxu0 0.0
    %697 = vmatpush.msra.mxu0 0.0
    %698 = vmatpush.msra.mxu0 0.0
    %699 = vmatpush.msra.mxu0 0.0
    %700 = vmatpush.msra.mxu0 0.0
    %701 = vmatpush.msra.mxu0 0.0
    %702 = vmatpush.msra.mxu0 %v679
    %703 = vmatpush.msra.mxu0 %v678
    %704 = vmatpush.msra.mxu0 %v677
    %705 = vmatpush.msra.mxu0 %v676
    %706 = vmatpush.msra.mxu0 %v675
    %707 = vmatpush.msra.mxu0 %v674
    %708 = vmatpush.msra.mxu0 %v673
    %709 = vmatpush.msra.mxu0 %v672
    %710 = vmatmul.f32.gmra.mxu0 %v686
    %v711 = vpop.f32.mrf.mxu0
    %v712 = vadd.f32 %v682, %v711
    %713 = vmatmul.f32.gmra.mxu0 %v689
    %v714 = vpop.f32.mrf.mxu0
    %v715 = vadd.f32 %v682, %v714
    %716 = vmatmul.f32.gmra.mxu0 %v692
    %v717 = vpop.f32.mrf.mxu0
    %v718 = vadd.f32 %v682, %v717
    %719 = vdwg.mxu0
    %v720 = vmax.f32 %v712, 0.0
    %v721 = vmax.f32 %v715, 0.0
    %v722 = vmax.f32 %v718, 0.0
    %v723 = vld [vmem:[%s27] sm:$0xff]
    %v724 = vld [vmem:[%s27 + $0x8] sm:$0xff]
    %v725 = vld [vmem:[%s27 + $0x10] sm:$0xff]
    %v726 = vld [vmem:[%s27 + $0x18] sm:$0xff]
    %v728 = vsel %vm668, %v720, 0
    %v731 = vsel %vm668, %v721, 0
    %v734 = vsel %vm668, %v722, 0
    %736 = vmatpush.msra.mxu0 0.0
    %737 = vmatpush.msra.mxu0 0.0
    %738 = vmatpush.msra.mxu0 0.0
    %739 = vmatpush.msra.mxu0 0.0
    %740 = vmatpush.msra.mxu0 0.0
    %741 = vmatpush.msra.mxu0 0.0
    %742 = vmatpush.msra.mxu0 0.0
    %743 = vmatpush.msra.mxu0 0.0
    %744 = vmatpush.msra.mxu0 0.0
    %745 = vmatpush.msra.mxu0 0.0
    %746 = vmatpush.msra.mxu0 0.0
    %747 = vmatpush.msra.mxu0 0.0
    %748 = vmatpush.msra.mxu0 %v726
    %749 = vmatpush.msra.mxu0 %v725
    %750 = vmatpush.msra.mxu0 %v724
    %751 = vmatpush.msra.mxu0 %v723
    %752 = vmatmul.f32.gmra.mxu0 %v728
    %v753 = vpop.f32.mrf.mxu0
    %v754 = vadd.f32 0.0, %v753
    %755 = vmatmul.f32.gmra.mxu0 %v731
    %v756 = vpop.f32.mrf.mxu0
    %v757 = vadd.f32 0.0, %v756
    %758 = vmatmul.f32.gmra.mxu0 %v734
    %v759 = vpop.f32.mrf.mxu0
    %v760 = vadd.f32 0.0, %v759
    %761 = vdwg.mxu0
    %v762 = vld [vmem:[%s29] sm:$0x1]
    %v764 = vperm.slane %v762, 0
    %v766 = vmul.f32 %v754, %v764
    %v767 = vmul.f32 %v757, %v764
    %v768 = vmul.f32 %v760, %v764
    %769 = vmatpush.msra.mxu0 %v568
    %770 = vmatpush.msra.mxu0 %v567
    %771 = vmatpush.msra.mxu0 %v566
    %772 = vmatpush.msra.mxu0 %v565
    %773 = vmatpush.msra.mxu0 %v564
    %774 = vmatpush.msra.mxu0 %v563
    %775 = vmatpush.msra.mxu0 %v562
    %776 = vmatpush.msra.mxu0 %v561
    %777 = vmatpush.msra.mxu0 %v560
    %778 = vmatpush.msra.mxu0 %v559
    %779 = vmatpush.msra.mxu0 %v558
    %780 = vmatpush.msra.mxu0 %v557
    %781 = vmatpush.msra.mxu0 %v556
    %782 = vmatpush.msra.mxu0 %v555
    %783 = vmatpush.msra.mxu0 %v554
    %784 = vmatpush.msra.mxu0 %v553
    %785 = vmatmul.f32.gmra.mxu0 %v766
    %v786 = vpop.f32.mrf.mxu0
    %v787 = vadd.f32 0.0, %v786
    %788 = vmatmul.f32.gmra.mxu0 %v767
    %v789 = vpop.f32.mrf.mxu0
    %v790 = vadd.f32 0.0, %v789
    %791 = vmatmul.f32.gmra.mxu0 %v768
    %v792 = vpop.f32.mrf.mxu0
    %v793 = vadd.f32 0.0, %v792
    %794 = vdwg.mxu0
    %v795 = vld [vmem:[%s31] sm:$0x1]
    %v797 = vperm.slane %v795, 0
    %v799 = vmul.f32 %v754, %v797
    %v800 = vmul.f32 %v757, %v797
    %v801 = vmul.f32 %v760, %v797
    %802 = vmatpush.msra.mxu0 %v568
    %803 = vmatpush.msra.mxu0 %v567
    %804 = vmatpush.msra.mxu0 %v566
    %805 = vmatpush.msra.mxu0 %v565
    %806 = vmatpush.msra.mxu0 %v564
    %807 = vmatpush.msra.mxu0 %v563
    %808 = vmatpush.msra.mxu0 %v562
    %809 = vmatpush.msra.mxu0 %v561
    %810 = vmatpush.msra.mxu0 %v560
    %811 = vmatpush.msra.mxu0 %v559
    %812 = vmatpush.msra.mxu0 %v558
    %813 = vmatpush.msra.mxu0 %v557
    %814 = vmatpush.msra.mxu0 %v556
    %815 = vmatpush.msra.mxu0 %v555
    %816 = vmatpush.msra.mxu0 %v554
    %817 = vmatpush.msra.mxu0 %v553
    %818 = vmatmul.f32.gmra.mxu0 %v799
    %v819 = vpop.f32.mrf.mxu0
    %v820 = vadd.f32 0.0, %v819
    %821 = vmatmul.f32.gmra.mxu0 %v800
    %v822 = vpop.f32.mrf.mxu0
    %v823 = vadd.f32 0.0, %v822
    %824 = vmatmul.f32.gmra.mxu0 %v801
    %v825 = vpop.f32.mrf.mxu0
    %v826 = vadd.f32 0.0, %v825
    %827 = vdwg.mxu0
    %828 = vxpose.xlu0.b32.start [1/16] %v787, 128
    %829 = vxpose.xlu0.b32.cont [2/16] %v790, 128
    %830 = vxpose.xlu0.b32.cont [3/16] %v793, 128
    %831 = vxpose.xlu0.b32.cont [4/16] 0.0, 128
    %832 = vxpose.xlu0.b32.cont [5/16] 0.0, 128
    %833 = vxpose.xlu0.b32.cont [6/16] 0.0, 128
    %834 = vxpose.xlu0.b32.cont [7/16] 0.0, 128
    %835 = vxpose.xlu0.b32.cont [8/16] 0.0, 128
    %836 = vxpose.xlu0.b32.cont [9/16] 0.0, 128
    %837 = vxpose.xlu0.b32.cont [10/16] 0.0, 128
    %838 = vxpose.xlu0.b32.cont [11/16] 0.0, 128
    %839 = vxpose.xlu0.b32.cont [12/16] 0.0, 128
    %840 = vxpose.xlu0.b32.cont [13/16] 0.0, 128
    %841 = vxpose.xlu0.b32.cont [14/16] 0.0, 128
    %842 = vxpose.xlu0.b32.cont [15/16] 0.0, 128
    %843 = vxpose.xlu0.b32.end [16/16] 0.0, 128
    %v844 = vpop.trf.xlu0
    %v845 = vpop.trf.xlu0
    %v846 = vpop.trf.xlu0
    %v847 = vpop.trf.xlu0
    %v848 = vpop.trf.xlu0
    %v849 = vpop.trf.xlu0
    %v850 = vpop.trf.xlu0
    %v851 = vpop.trf.xlu0
    %v852 = vpop.trf.xlu0
    %v853 = vpop.trf.xlu0
    %v854 = vpop.trf.xlu0
    %v855 = vpop.trf.xlu0
    %v856 = vpop.trf.xlu0
    %v857 = vpop.trf.xlu0
    %v858 = vpop.trf.xlu0
    %v859 = vpop.trf.xlu0
    %861 = vset.pattern.permute.xlu0 0
    %862 = vperm.xlu0 %861, %v820
    %v863 = vpop.permute.xlu0 %862
    %866 = vset.pattern.permute.xlu0 0
    %867 = vperm.xlu0 %866, %v823
    %v868 = vpop.permute.xlu0 %867
    %871 = vset.pattern.permute.xlu0 0
    %872 = vperm.xlu0 %871, %v826
    %v873 = vpop.permute.xlu0 %872
    %v875 = vperm.slane %v844, 0
    %v876 = vadd.f32 %v863, %v875
    %v877 = vadd.f32 %v868, %v875
    %v878 = vadd.f32 %v873, %v875
    %vm879 = vcmp.gt.f32.partialorder %v876, 0.0
    %vm880 = vcmp.gt.f32.partialorder %v877, 0.0
    %vm881 = vcmp.gt.f32.partialorder %v878, 0.0
    %v882 = vmul.f32 %v876, 0.2
    %v883 = vmul.f32 %v877, 0.2
    %v884 = vmul.f32 %v878, 0.2
    %v885 = vsel %vm879, %v876, %v882
    %v886 = vsel %vm880, %v877, %v883
    %v887 = vsel %vm881, %v878, %v884
    %v888 = vld [vmem:[%s9] sm:$0xff]
    %v889 = vld [vmem:[%s9 + $0x8] sm:$0xff]
    %v890 = vld [vmem:[%s9 + $0x10] sm:$0xff]
    %vm891 = vcmp.gt.f32.partialorder %v888, 0.0
    %vm892 = vcmp.gt.f32.partialorder %v889, 0.0
    %vm893 = vcmp.gt.f32.partialorder %v890, 0.0
    %v894 = vsel %vm891, %v885, -1e+30
    %v895 = vsel %vm892, %v886, -1e+30
    %v896 = vsel %vm893, %v887, -1e+30
    %vm897 = vcmask 195584
    %v898 = vsel %vm897, %v894, -inf
    %899 = vmax.xlane.f32.xlu0 %v898
    %v900 = vpop.xlane.xlu0 %899
    %v901 = vsel %vm897, %v895, -inf
    %902 = vmax.xlane.f32.xlu0 %v901
    %v903 = vpop.xlane.xlu0 %902
    %v904 = vsel %vm897, %v896, -inf
    %905 = vmax.xlane.f32.xlu0 %v904
    %v906 = vpop.xlane.xlu0 %905
    %v907 = vsub.f32 %v894, %v900
    %v908 = vsub.f32 %v895, %v903
    %v909 = vsub.f32 %v896, %v906
    %v910 = vmul.f32 %v907, 1.442695
    %v911 = vpow.pop %v910
    %v912 = vmul.f32 %v908, 1.442695
    %v913 = vpow.pop %v912
    %v914 = vmul.f32 %v909, 1.442695
    %v915 = vpow.pop %v914
    %v916 = vsel %vm891, %v911, 0.0
    %v917 = vsel %vm892, %v913, 0.0
    %v918 = vsel %vm893, %v915, 0.0
    %v919 = vsel %vm897, %v916, 0.0
    %920 = vadd.xlane.f32.xlu0 %v919
    %v921 = vpop.xlane.xlu0 %920
    %v922 = vsel %vm897, %v917, 0.0
    %923 = vadd.xlane.f32.xlu0 %v922
    %v924 = vpop.xlane.xlu0 %923
    %v925 = vsel %vm897, %v918, 0.0
    %926 = vadd.xlane.f32.xlu0 %v925
    %v927 = vpop.xlane.xlu0 %926
    %v928 = vmax.f32 %v921, 1e-09
    %v929 = vmax.f32 %v924, 1e-09
    %v930 = vmax.f32 %v927, 1e-09
    %v931 = vrcp.pop %v928
    %v932 = vrcp.pop %v929
    %v933 = vrcp.pop %v930
    %v934 = vmul.f32 %v916, %v931
    %v935 = vmul.f32 %v917, %v932
    %v936 = vmul.f32 %v918, %v933
    %v938 = vsel %vm897, %v934, 0
    %v941 = vsel %vm897, %v935, 0
    %v944 = vsel %vm897, %v936, 0
    %946 = vmatpush.msra.mxu0 0.0
    %947 = vmatpush.msra.mxu0 0.0
    %948 = vmatpush.msra.mxu0 0.0
    %949 = vmatpush.msra.mxu0 0.0
    %950 = vmatpush.msra.mxu0 0.0
    %951 = vmatpush.msra.mxu0 0.0
    %952 = vmatpush.msra.mxu0 0.0
    %953 = vmatpush.msra.mxu0 0.0
    %954 = vmatpush.msra.mxu0 0.0
    %955 = vmatpush.msra.mxu0 0.0
    %956 = vmatpush.msra.mxu0 0.0
    %957 = vmatpush.msra.mxu0 0.0
    %958 = vmatpush.msra.mxu0 0.0
    %959 = vmatpush.msra.mxu0 %v760
    %960 = vmatpush.msra.mxu0 %v757
    %961 = vmatpush.msra.mxu0 %v754
    %962 = vmatmul.f32.gmra.mxu0 %v938
    %v963 = vpop.f32.mrf.mxu0
    %v964 = vadd.f32 0.0, %v963
    %965 = vmatmul.f32.gmra.mxu0 %v941
    %v966 = vpop.f32.mrf.mxu0
    %v967 = vadd.f32 0.0, %v966
    %968 = vmatmul.f32.gmra.mxu0 %v944
    %v969 = vpop.f32.mrf.mxu0
    %v970 = vadd.f32 0.0, %v969
    %971 = vdwg.mxu0
    %975 = vrot.lane.b32.xlu0 %v787, 127
    %v976 = vpop.permute.xlu0 %975
    %977 = vrot.lane.b32.xlu0 %v790, 127
    %v978 = vpop.permute.xlu0 %977
    %979 = vrot.lane.b32.xlu0 %v793, 127
    %v980 = vpop.permute.xlu0 %979
    %984 = vxpose.xlu0.b32.start [1/16] %v976, 128
    %985 = vxpose.xlu0.b32.cont [2/16] %v978, 128
    %986 = vxpose.xlu0.b32.cont [3/16] %v980, 128
    %987 = vxpose.xlu0.b32.cont [4/16] 0.0, 128
    %988 = vxpose.xlu0.b32.cont [5/16] 0.0, 128
    %989 = vxpose.xlu0.b32.cont [6/16] 0.0, 128
    %990 = vxpose.xlu0.b32.cont [7/16] 0.0, 128
    %991 = vxpose.xlu0.b32.cont [8/16] 0.0, 128
    %992 = vxpose.xlu0.b32.cont [9/16] 0.0, 128
    %993 = vxpose.xlu0.b32.cont [10/16] 0.0, 128
    %994 = vxpose.xlu0.b32.cont [11/16] 0.0, 128
    %995 = vxpose.xlu0.b32.cont [12/16] 0.0, 128
    %996 = vxpose.xlu0.b32.cont [13/16] 0.0, 128
    %997 = vxpose.xlu0.b32.cont [14/16] 0.0, 128
    %998 = vxpose.xlu0.b32.cont [15/16] 0.0, 128
    %999 = vxpose.xlu0.b32.end [16/16] 0.0, 128
    %v1000 = vpop.trf.xlu0
    %v1001 = vpop.trf.xlu0
    %v1002 = vpop.trf.xlu0
    %v1003 = vpop.trf.xlu0
    %v1004 = vpop.trf.xlu0
    %v1005 = vpop.trf.xlu0
    %v1006 = vpop.trf.xlu0
    %v1007 = vpop.trf.xlu0
    %v1008 = vpop.trf.xlu0
    %v1009 = vpop.trf.xlu0
    %v1010 = vpop.trf.xlu0
    %v1011 = vpop.trf.xlu0
    %v1012 = vpop.trf.xlu0
    %v1013 = vpop.trf.xlu0
    %v1014 = vpop.trf.xlu0
    %v1015 = vpop.trf.xlu0
    %1016 = vset.pattern.permute.xlu0 1
    %1017 = vperm.xlu0 %1016, %v820
    %v1018 = vpop.permute.xlu0 %1017
    %1020 = vset.pattern.permute.xlu0 1
    %1021 = vperm.xlu0 %1020, %v823
    %v1022 = vpop.permute.xlu0 %1021
    %1024 = vset.pattern.permute.xlu0 1
    %1025 = vperm.xlu0 %1024, %v826
    %v1026 = vpop.permute.xlu0 %1025
    %v1028 = vperm.slane %v1000, 0
    %v1029 = vadd.f32 %v1018, %v1028
    %v1030 = vadd.f32 %v1022, %v1028
    %v1031 = vadd.f32 %v1026, %v1028
    %vm1032 = vcmp.gt.f32.partialorder %v1029, 0.0
    %vm1033 = vcmp.gt.f32.partialorder %v1030, 0.0
    %vm1034 = vcmp.gt.f32.partialorder %v1031, 0.0
    %v1035 = vmul.f32 %v1029, 0.2
    %v1036 = vmul.f32 %v1030, 0.2
    %v1037 = vmul.f32 %v1031, 0.2
    %v1038 = vsel %vm1032, %v1029, %v1035
    %v1039 = vsel %vm1033, %v1030, %v1036
    %v1040 = vsel %vm1034, %v1031, %v1037
    %s1041 = scalar_lea.vmem %s9, 24
    %v1042 = vld [vmem:[%s1041] sm:$0xff]
    %v1043 = vld [vmem:[%s1041 + $0x8] sm:$0xff]
    %v1044 = vld [vmem:[%s1041 + $0x10] sm:$0xff]
    %vm1045 = vcmp.gt.f32.partialorder %v1042, 0.0
    %vm1046 = vcmp.gt.f32.partialorder %v1043, 0.0
    %vm1047 = vcmp.gt.f32.partialorder %v1044, 0.0
    %v1048 = vsel %vm1045, %v1038, -1e+30
    %v1049 = vsel %vm1046, %v1039, -1e+30
    %v1050 = vsel %vm1047, %v1040, -1e+30
    %v1051 = vsel %vm897, %v1048, -inf
    %1052 = vmax.xlane.f32.xlu0 %v1051
    %v1053 = vpop.xlane.xlu0 %1052
    %v1054 = vsel %vm897, %v1049, -inf
    %1055 = vmax.xlane.f32.xlu0 %v1054
    %v1056 = vpop.xlane.xlu0 %1055
    %v1057 = vsel %vm897, %v1050, -inf
    %1058 = vmax.xlane.f32.xlu0 %v1057
    %v1059 = vpop.xlane.xlu0 %1058
    %v1060 = vsub.f32 %v1048, %v1053
    %v1061 = vsub.f32 %v1049, %v1056
    %v1062 = vsub.f32 %v1050, %v1059
    %v1063 = vmul.f32 %v1060, 1.442695
    %v1064 = vpow.pop %v1063
    %v1065 = vmul.f32 %v1061, 1.442695
    %v1066 = vpow.pop %v1065
    %v1067 = vmul.f32 %v1062, 1.442695
    %v1068 = vpow.pop %v1067
    %v1069 = vsel %vm1045, %v1064, 0.0
    %v1070 = vsel %vm1046, %v1066, 0.0
    %v1071 = vsel %vm1047, %v1068, 0.0
    %v1072 = vsel %vm897, %v1069, 0.0
    %1073 = vadd.xlane.f32.xlu0 %v1072
    %v1074 = vpop.xlane.xlu0 %1073
    %v1075 = vsel %vm897, %v1070, 0.0
    %1076 = vadd.xlane.f32.xlu0 %v1075
    %v1077 = vpop.xlane.xlu0 %1076
    %v1078 = vsel %vm897, %v1071, 0.0
    %1079 = vadd.xlane.f32.xlu0 %v1078
    %v1080 = vpop.xlane.xlu0 %1079
    %v1081 = vmax.f32 %v1074, 1e-09
    %v1082 = vmax.f32 %v1077, 1e-09
    %v1083 = vmax.f32 %v1080, 1e-09
    %v1084 = vrcp.pop %v1081
    %v1085 = vrcp.pop %v1082
    %v1086 = vrcp.pop %v1083
    %v1087 = vmul.f32 %v1069, %v1084
    %v1088 = vmul.f32 %v1070, %v1085
    %v1089 = vmul.f32 %v1071, %v1086
    %1093 = vrot.lane.b32.xlu0 %v754, 96
    %v1094 = vpop.permute.xlu0 %1093
    %1095 = vrot.lane.b32.xlu0 %v757, 96
    %v1096 = vpop.permute.xlu0 %1095
    %1097 = vrot.lane.b32.xlu0 %v760, 96
    %v1098 = vpop.permute.xlu0 %1097
    %v1103 = vsel %vm897, %v1087, 0
    %v1106 = vsel %vm897, %v1088, 0
    %v1109 = vsel %vm897, %v1089, 0
    %1111 = vmatpush.msra.mxu0 0.0
    %1112 = vmatpush.msra.mxu0 0.0
    %1113 = vmatpush.msra.mxu0 0.0
    %1114 = vmatpush.msra.mxu0 0.0
    %1115 = vmatpush.msra.mxu0 0.0
    %1116 = vmatpush.msra.mxu0 0.0
    %1117 = vmatpush.msra.mxu0 0.0
    %1118 = vmatpush.msra.mxu0 0.0
    %1119 = vmatpush.msra.mxu0 0.0
    %1120 = vmatpush.msra.mxu0 0.0
    %1121 = vmatpush.msra.mxu0 0.0
    %1122 = vmatpush.msra.mxu0 0.0
    %1123 = vmatpush.msra.mxu0 0.0
    %1124 = vmatpush.msra.mxu0 %v1098
    %1125 = vmatpush.msra.mxu0 %v1096
    %1126 = vmatpush.msra.mxu0 %v1094
    %1127 = vmatmul.f32.gmra.mxu0 %v1103
    %v1128 = vpop.f32.mrf.mxu0
    %v1129 = vadd.f32 0.0, %v1128
    %1130 = vmatmul.f32.gmra.mxu0 %v1106
    %v1131 = vpop.f32.mrf.mxu0
    %v1132 = vadd.f32 0.0, %v1131
    %1133 = vmatmul.f32.gmra.mxu0 %v1109
    %v1134 = vpop.f32.mrf.mxu0
    %v1135 = vadd.f32 0.0, %v1134
    %1136 = vdwg.mxu0
    %1137 = vrot.lane.b32.xlu0 %v787, 126
    %v1138 = vpop.permute.xlu0 %1137
    %1139 = vrot.lane.b32.xlu0 %v790, 126
    %v1140 = vpop.permute.xlu0 %1139
    %1141 = vrot.lane.b32.xlu0 %v793, 126
    %v1142 = vpop.permute.xlu0 %1141
    %1146 = vxpose.xlu0.b32.start [1/16] %v1138, 128
    %1147 = vxpose.xlu0.b32.cont [2/16] %v1140, 128
    %1148 = vxpose.xlu0.b32.cont [3/16] %v1142, 128
    %1149 = vxpose.xlu0.b32.cont [4/16] 0.0, 128
    %1150 = vxpose.xlu0.b32.cont [5/16] 0.0, 128
    %1151 = vxpose.xlu0.b32.cont [6/16] 0.0, 128
    %1152 = vxpose.xlu0.b32.cont [7/16] 0.0, 128
    %1153 = vxpose.xlu0.b32.cont [8/16] 0.0, 128
    %1154 = vxpose.xlu0.b32.cont [9/16] 0.0, 128
    %1155 = vxpose.xlu0.b32.cont [10/16] 0.0, 128
    %1156 = vxpose.xlu0.b32.cont [11/16] 0.0, 128
    %1157 = vxpose.xlu0.b32.cont [12/16] 0.0, 128
    %1158 = vxpose.xlu0.b32.cont [13/16] 0.0, 128
    %1159 = vxpose.xlu0.b32.cont [14/16] 0.0, 128
    %1160 = vxpose.xlu0.b32.cont [15/16] 0.0, 128
    %1161 = vxpose.xlu0.b32.end [16/16] 0.0, 128
    %v1162 = vpop.trf.xlu0
    %v1163 = vpop.trf.xlu0
    %v1164 = vpop.trf.xlu0
    %v1165 = vpop.trf.xlu0
    %v1166 = vpop.trf.xlu0
    %v1167 = vpop.trf.xlu0
    %v1168 = vpop.trf.xlu0
    %v1169 = vpop.trf.xlu0
    %v1170 = vpop.trf.xlu0
    %v1171 = vpop.trf.xlu0
    %v1172 = vpop.trf.xlu0
    %v1173 = vpop.trf.xlu0
    %v1174 = vpop.trf.xlu0
    %v1175 = vpop.trf.xlu0
    %v1176 = vpop.trf.xlu0
    %v1177 = vpop.trf.xlu0
    %1178 = vset.pattern.permute.xlu0 2
    %1179 = vperm.xlu0 %1178, %v820
    %v1180 = vpop.permute.xlu0 %1179
    %1182 = vset.pattern.permute.xlu0 2
    %1183 = vperm.xlu0 %1182, %v823
    %v1184 = vpop.permute.xlu0 %1183
    %1186 = vset.pattern.permute.xlu0 2
    %1187 = vperm.xlu0 %1186, %v826
    %v1188 = vpop.permute.xlu0 %1187
    %v1190 = vperm.slane %v1162, 0
    %v1191 = vadd.f32 %v1180, %v1190
    %v1192 = vadd.f32 %v1184, %v1190
    %v1193 = vadd.f32 %v1188, %v1190
    %vm1194 = vcmp.gt.f32.partialorder %v1191, 0.0
    %vm1195 = vcmp.gt.f32.partialorder %v1192, 0.0
    %vm1196 = vcmp.gt.f32.partialorder %v1193, 0.0
    %v1197 = vmul.f32 %v1191, 0.2
    %v1198 = vmul.f32 %v1192, 0.2
    %v1199 = vmul.f32 %v1193, 0.2
    %v1200 = vsel %vm1194, %v1191, %v1197
    %v1201 = vsel %vm1195, %v1192, %v1198
    %v1202 = vsel %vm1196, %v1193, %v1199
    %s1203 = scalar_lea.vmem %s9, 48
    %v1204 = vld [vmem:[%s1203] sm:$0xff]
    %v1205 = vld [vmem:[%s1203 + $0x8] sm:$0xff]
    %v1206 = vld [vmem:[%s1203 + $0x10] sm:$0xff]
    %vm1207 = vcmp.gt.f32.partialorder %v1204, 0.0
    %vm1208 = vcmp.gt.f32.partialorder %v1205, 0.0
    %vm1209 = vcmp.gt.f32.partialorder %v1206, 0.0
    %v1210 = vsel %vm1207, %v1200, -1e+30
    %v1211 = vsel %vm1208, %v1201, -1e+30
    %v1212 = vsel %vm1209, %v1202, -1e+30
    %v1213 = vsel %vm897, %v1210, -inf
    %1214 = vmax.xlane.f32.xlu0 %v1213
    %v1215 = vpop.xlane.xlu0 %1214
    %v1216 = vsel %vm897, %v1211, -inf
    %1217 = vmax.xlane.f32.xlu0 %v1216
    %v1218 = vpop.xlane.xlu0 %1217
    %v1219 = vsel %vm897, %v1212, -inf
    %1220 = vmax.xlane.f32.xlu0 %v1219
    %v1221 = vpop.xlane.xlu0 %1220
    %v1222 = vsub.f32 %v1210, %v1215
    %v1223 = vsub.f32 %v1211, %v1218
    %v1224 = vsub.f32 %v1212, %v1221
    %v1225 = vmul.f32 %v1222, 1.442695
    %v1226 = vpow.pop %v1225
    %v1227 = vmul.f32 %v1223, 1.442695
    %v1228 = vpow.pop %v1227
    %v1229 = vmul.f32 %v1224, 1.442695
    %v1230 = vpow.pop %v1229
    %v1231 = vsel %vm1207, %v1226, 0.0
    %v1232 = vsel %vm1208, %v1228, 0.0
    %v1233 = vsel %vm1209, %v1230, 0.0
    %v1234 = vsel %vm897, %v1231, 0.0
    %1235 = vadd.xlane.f32.xlu0 %v1234
    %v1236 = vpop.xlane.xlu0 %1235
    %v1237 = vsel %vm897, %v1232, 0.0
    %1238 = vadd.xlane.f32.xlu0 %v1237
    %v1239 = vpop.xlane.xlu0 %1238
    %v1240 = vsel %vm897, %v1233, 0.0
    %1241 = vadd.xlane.f32.xlu0 %v1240
    %v1242 = vpop.xlane.xlu0 %1241
    %v1243 = vmax.f32 %v1236, 1e-09
    %v1244 = vmax.f32 %v1239, 1e-09
    %v1245 = vmax.f32 %v1242, 1e-09
    %v1246 = vrcp.pop %v1243
    %v1247 = vrcp.pop %v1244
    %v1248 = vrcp.pop %v1245
    %v1249 = vmul.f32 %v1231, %v1246
    %v1250 = vmul.f32 %v1232, %v1247
    %v1251 = vmul.f32 %v1233, %v1248
    %1252 = vrot.lane.b32.xlu0 %v754, 64
    %v1253 = vpop.permute.xlu0 %1252
    %1254 = vrot.lane.b32.xlu0 %v757, 64
    %v1255 = vpop.permute.xlu0 %1254
    %1256 = vrot.lane.b32.xlu0 %v760, 64
    %v1257 = vpop.permute.xlu0 %1256
    %v1262 = vsel %vm897, %v1249, 0
    %v1265 = vsel %vm897, %v1250, 0
    %v1268 = vsel %vm897, %v1251, 0
    %1270 = vmatpush.msra.mxu0 0.0
    %1271 = vmatpush.msra.mxu0 0.0
    %1272 = vmatpush.msra.mxu0 0.0
    %1273 = vmatpush.msra.mxu0 0.0
    %1274 = vmatpush.msra.mxu0 0.0
    %1275 = vmatpush.msra.mxu0 0.0
    %1276 = vmatpush.msra.mxu0 0.0
    %1277 = vmatpush.msra.mxu0 0.0
    %1278 = vmatpush.msra.mxu0 0.0
    %1279 = vmatpush.msra.mxu0 0.0
    %1280 = vmatpush.msra.mxu0 0.0
    %1281 = vmatpush.msra.mxu0 0.0
    %1282 = vmatpush.msra.mxu0 0.0
    %1283 = vmatpush.msra.mxu0 %v1257
    %1284 = vmatpush.msra.mxu0 %v1255
    %1285 = vmatpush.msra.mxu0 %v1253
    %1286 = vmatmul.f32.gmra.mxu0 %v1262
    %v1287 = vpop.f32.mrf.mxu0
    %v1288 = vadd.f32 0.0, %v1287
    %1289 = vmatmul.f32.gmra.mxu0 %v1265
    %v1290 = vpop.f32.mrf.mxu0
    %v1291 = vadd.f32 0.0, %v1290
    %1292 = vmatmul.f32.gmra.mxu0 %v1268
    %v1293 = vpop.f32.mrf.mxu0
    %v1294 = vadd.f32 0.0, %v1293
    %1295 = vdwg.mxu0
    %1296 = vrot.lane.b32.xlu0 %v787, 125
    %v1297 = vpop.permute.xlu0 %1296
    %1298 = vrot.lane.b32.xlu0 %v790, 125
    %v1299 = vpop.permute.xlu0 %1298
    %1300 = vrot.lane.b32.xlu0 %v793, 125
    %v1301 = vpop.permute.xlu0 %1300
    %1305 = vxpose.xlu0.b32.start [1/16] %v1297, 128
    %1306 = vxpose.xlu0.b32.cont [2/16] %v1299, 128
    %1307 = vxpose.xlu0.b32.cont [3/16] %v1301, 128
    %1308 = vxpose.xlu0.b32.cont [4/16] 0.0, 128
    %1309 = vxpose.xlu0.b32.cont [5/16] 0.0, 128
    %1310 = vxpose.xlu0.b32.cont [6/16] 0.0, 128
    %1311 = vxpose.xlu0.b32.cont [7/16] 0.0, 128
    %1312 = vxpose.xlu0.b32.cont [8/16] 0.0, 128
    %1313 = vxpose.xlu0.b32.cont [9/16] 0.0, 128
    %1314 = vxpose.xlu0.b32.cont [10/16] 0.0, 128
    %1315 = vxpose.xlu0.b32.cont [11/16] 0.0, 128
    %1316 = vxpose.xlu0.b32.cont [12/16] 0.0, 128
    %1317 = vxpose.xlu0.b32.cont [13/16] 0.0, 128
    %1318 = vxpose.xlu0.b32.cont [14/16] 0.0, 128
    %1319 = vxpose.xlu0.b32.cont [15/16] 0.0, 128
    %1320 = vxpose.xlu0.b32.end [16/16] 0.0, 128
    %v1321 = vpop.trf.xlu0
    %v1322 = vpop.trf.xlu0
    %v1323 = vpop.trf.xlu0
    %v1324 = vpop.trf.xlu0
    %v1325 = vpop.trf.xlu0
    %v1326 = vpop.trf.xlu0
    %v1327 = vpop.trf.xlu0
    %v1328 = vpop.trf.xlu0
    %v1329 = vpop.trf.xlu0
    %v1330 = vpop.trf.xlu0
    %v1331 = vpop.trf.xlu0
    %v1332 = vpop.trf.xlu0
    %v1333 = vpop.trf.xlu0
    %v1334 = vpop.trf.xlu0
    %v1335 = vpop.trf.xlu0
    %v1336 = vpop.trf.xlu0
    %1337 = vset.pattern.permute.xlu0 3
    %1338 = vperm.xlu0 %1337, %v820
    %v1339 = vpop.permute.xlu0 %1338
    %1341 = vset.pattern.permute.xlu0 3
    %1342 = vperm.xlu0 %1341, %v823
    %v1343 = vpop.permute.xlu0 %1342
    %1345 = vset.pattern.permute.xlu0 3
    %1346 = vperm.xlu0 %1345, %v826
    %v1347 = vpop.permute.xlu0 %1346
    %v1349 = vperm.slane %v1321, 0
    %v1350 = vadd.f32 %v1339, %v1349
    %v1351 = vadd.f32 %v1343, %v1349
    %v1352 = vadd.f32 %v1347, %v1349
    %vm1353 = vcmp.gt.f32.partialorder %v1350, 0.0
    %vm1354 = vcmp.gt.f32.partialorder %v1351, 0.0
    %vm1355 = vcmp.gt.f32.partialorder %v1352, 0.0
    %v1356 = vmul.f32 %v1350, 0.2
    %v1357 = vmul.f32 %v1351, 0.2
    %v1358 = vmul.f32 %v1352, 0.2
    %v1359 = vsel %vm1353, %v1350, %v1356
    %v1360 = vsel %vm1354, %v1351, %v1357
    %v1361 = vsel %vm1355, %v1352, %v1358
    %s1362 = scalar_lea.vmem %s9, 72
    %v1363 = vld [vmem:[%s1362] sm:$0xff]
    %v1364 = vld [vmem:[%s1362 + $0x8] sm:$0xff]
    %v1365 = vld [vmem:[%s1362 + $0x10] sm:$0xff]
    %vm1366 = vcmp.gt.f32.partialorder %v1363, 0.0
    %vm1367 = vcmp.gt.f32.partialorder %v1364, 0.0
    %vm1368 = vcmp.gt.f32.partialorder %v1365, 0.0
    %v1369 = vsel %vm1366, %v1359, -1e+30
    %v1370 = vsel %vm1367, %v1360, -1e+30
    %v1371 = vsel %vm1368, %v1361, -1e+30
    %v1372 = vsel %vm897, %v1369, -inf
    %1373 = vmax.xlane.f32.xlu0 %v1372
    %v1374 = vpop.xlane.xlu0 %1373
    %v1375 = vsel %vm897, %v1370, -inf
    %1376 = vmax.xlane.f32.xlu0 %v1375
    %v1377 = vpop.xlane.xlu0 %1376
    %v1378 = vsel %vm897, %v1371, -inf
    %1379 = vmax.xlane.f32.xlu0 %v1378
    %v1380 = vpop.xlane.xlu0 %1379
    %v1381 = vsub.f32 %v1369, %v1374
    %v1382 = vsub.f32 %v1370, %v1377
    %v1383 = vsub.f32 %v1371, %v1380
    %v1384 = vmul.f32 %v1381, 1.442695
    %v1385 = vpow.pop %v1384
    %v1386 = vmul.f32 %v1382, 1.442695
    %v1387 = vpow.pop %v1386
    %v1388 = vmul.f32 %v1383, 1.442695
    %v1389 = vpow.pop %v1388
    %v1390 = vsel %vm1366, %v1385, 0.0
    %v1391 = vsel %vm1367, %v1387, 0.0
    %v1392 = vsel %vm1368, %v1389, 0.0
    %v1393 = vsel %vm897, %v1390, 0.0
    %1394 = vadd.xlane.f32.xlu0 %v1393
    %v1395 = vpop.xlane.xlu0 %1394
    %v1396 = vsel %vm897, %v1391, 0.0
    %1397 = vadd.xlane.f32.xlu0 %v1396
    %v1398 = vpop.xlane.xlu0 %1397
    %v1399 = vsel %vm897, %v1392, 0.0
    %1400 = vadd.xlane.f32.xlu0 %v1399
    %v1401 = vpop.xlane.xlu0 %1400
    %v1402 = vmax.f32 %v1395, 1e-09
    %v1403 = vmax.f32 %v1398, 1e-09
    %v1404 = vmax.f32 %v1401, 1e-09
    %v1405 = vrcp.pop %v1402
    %v1406 = vrcp.pop %v1403
    %v1407 = vrcp.pop %v1404
    %v1408 = vmul.f32 %v1390, %v1405
    %v1409 = vmul.f32 %v1391, %v1406
    %v1410 = vmul.f32 %v1392, %v1407
    %1411 = vrot.lane.b32.xlu0 %v754, 32
    %v1412 = vpop.permute.xlu0 %1411
    %1413 = vrot.lane.b32.xlu0 %v757, 32
    %v1414 = vpop.permute.xlu0 %1413
    %1415 = vrot.lane.b32.xlu0 %v760, 32
    %v1416 = vpop.permute.xlu0 %1415
    %v1421 = vsel %vm897, %v1408, 0
    %v1424 = vsel %vm897, %v1409, 0
    %v1427 = vsel %vm897, %v1410, 0
    %1429 = vmatpush.msra.mxu0 0.0
    %1430 = vmatpush.msra.mxu0 0.0
    %1431 = vmatpush.msra.mxu0 0.0
    %1432 = vmatpush.msra.mxu0 0.0
    %1433 = vmatpush.msra.mxu0 0.0
    %1434 = vmatpush.msra.mxu0 0.0
    %1435 = vmatpush.msra.mxu0 0.0
    %1436 = vmatpush.msra.mxu0 0.0
    %1437 = vmatpush.msra.mxu0 0.0
    %1438 = vmatpush.msra.mxu0 0.0
    %1439 = vmatpush.msra.mxu0 0.0
    %1440 = vmatpush.msra.mxu0 0.0
    %1441 = vmatpush.msra.mxu0 0.0
    %1442 = vmatpush.msra.mxu0 %v1416
    %1443 = vmatpush.msra.mxu0 %v1414
    %1444 = vmatpush.msra.mxu0 %v1412
    %1445 = vmatmul.f32.gmra.mxu0 %v1421
    %v1446 = vpop.f32.mrf.mxu0
    %v1447 = vadd.f32 0.0, %v1446
    %1448 = vmatmul.f32.gmra.mxu0 %v1424
    %v1449 = vpop.f32.mrf.mxu0
    %v1450 = vadd.f32 0.0, %v1449
    %1451 = vmatmul.f32.gmra.mxu0 %v1427
    %v1452 = vpop.f32.mrf.mxu0
    %v1453 = vadd.f32 0.0, %v1452
    %1454 = vdwg.mxu0
    %1458 = vrot.lane.b32.xlu0 %v1129, 32
    %v1459 = vpop.permute.xlu0 %1458
    %1460 = vrot.lane.b32.xlu0 %v1132, 32
    %v1461 = vpop.permute.xlu0 %1460
    %1462 = vrot.lane.b32.xlu0 %v1135, 32
    %v1463 = vpop.permute.xlu0 %1462
    %1470 = vrot.lane.b32.xlu0 %v1288, 64
    %v1471 = vpop.permute.xlu0 %1470
    %1472 = vrot.lane.b32.xlu0 %v1291, 64
    %v1473 = vpop.permute.xlu0 %1472
    %1474 = vrot.lane.b32.xlu0 %v1294, 64
    %v1475 = vpop.permute.xlu0 %1474
    %1482 = vrot.lane.b32.xlu0 %v1447, 96
    %v1483 = vpop.permute.xlu0 %1482
    %1484 = vrot.lane.b32.xlu0 %v1450, 96
    %v1485 = vpop.permute.xlu0 %1484
    %1486 = vrot.lane.b32.xlu0 %v1453, 96
    %v1487 = vpop.permute.xlu0 %1486
    %v1491 = vsel %vm668, %v964, %v1459
    %v1492 = vsel %vm668, %v967, %v1461
    %v1493 = vsel %vm668, %v970, %v1463
    %v1494 = vsel %vm684, %v1491, %v1471
    %v1495 = vsel %vm684, %v1492, %v1473
    %v1496 = vsel %vm684, %v1493, %v1475
    %vm1497 = vcmask 785408
    %v1498 = vsel %vm1497, %v1494, %v1483
    %v1499 = vsel %vm1497, %v1495, %v1485
    %v1500 = vsel %vm1497, %v1496, %v1487
    %v1501 = vld [vmem:[%s33] sm:$0xff]
    %v1502 = vld [vmem:[%s33 + $0x8] sm:$0xff]
    %v1503 = vld [vmem:[%s33 + $0x10] sm:$0xff]
    %v1504 = vld [vmem:[%s33 + $0x18] sm:$0xff]
    %v1505 = vld [vmem:[%s33 + $0x20] sm:$0xff]
    %v1506 = vld [vmem:[%s33 + $0x28] sm:$0xff]
    %v1507 = vld [vmem:[%s33 + $0x30] sm:$0xff]
    %v1508 = vld [vmem:[%s33 + $0x38] sm:$0xff]
    %v1509 = vld [vmem:[%s33 + $0x40] sm:$0xff]
    %v1510 = vld [vmem:[%s33 + $0x48] sm:$0xff]
    %v1511 = vld [vmem:[%s33 + $0x50] sm:$0xff]
    %v1512 = vld [vmem:[%s33 + $0x58] sm:$0xff]
    %v1513 = vld [vmem:[%s33 + $0x60] sm:$0xff]
    %v1514 = vld [vmem:[%s33 + $0x68] sm:$0xff]
    %v1515 = vld [vmem:[%s33 + $0x70] sm:$0xff]
    %v1516 = vld [vmem:[%s33 + $0x78] sm:$0xff]
    %1517 = vmatpush.msra.mxu0 %v1516
    %1518 = vmatpush.msra.mxu0 %v1515
    %1519 = vmatpush.msra.mxu0 %v1514
    %1520 = vmatpush.msra.mxu0 %v1513
    %1521 = vmatpush.msra.mxu0 %v1512
    %1522 = vmatpush.msra.mxu0 %v1511
    %1523 = vmatpush.msra.mxu0 %v1510
    %1524 = vmatpush.msra.mxu0 %v1509
    %1525 = vmatpush.msra.mxu0 %v1508
    %1526 = vmatpush.msra.mxu0 %v1507
    %1527 = vmatpush.msra.mxu0 %v1506
    %1528 = vmatpush.msra.mxu0 %v1505
    %1529 = vmatpush.msra.mxu0 %v1504
    %1530 = vmatpush.msra.mxu0 %v1503
    %1531 = vmatpush.msra.mxu0 %v1502
    %1532 = vmatpush.msra.mxu0 %v1501
    %1533 = vmatmul.f32.gmra.mxu0 %v1498
    %v1534 = vpop.f32.mrf.mxu0
    %v1535 = vadd.f32 0.0, %v1534
    %1536 = vmatmul.f32.gmra.mxu0 %v1499
    %v1537 = vpop.f32.mrf.mxu0
    %v1538 = vadd.f32 0.0, %v1537
    %1539 = vmatmul.f32.gmra.mxu0 %v1500
    %v1540 = vpop.f32.mrf.mxu0
    %v1541 = vadd.f32 0.0, %v1540
    %1542 = vdwg.mxu0
    %v1543 = vld [vmem:[%s37] sm:$0xff]
    %v1544 = vld [vmem:[%s37 + $0x8] sm:$0xff]
    %v1545 = vld [vmem:[%s37 + $0x10] sm:$0xff]
    %v1546 = vld [vmem:[%s37 + $0x18] sm:$0xff]
    %v1547 = vsel %vm668, %v457, 0
    %v1549 = vsel %vm668, %v458, 0
    %v1551 = vsel %vm668, %v459, 0
    %1553 = vmatpush.msra.mxu0 0.0
    %1554 = vmatpush.msra.mxu0 0.0
    %1555 = vmatpush.msra.mxu0 0.0
    %1556 = vmatpush.msra.mxu0 0.0
    %1557 = vmatpush.msra.mxu0 0.0
    %1558 = vmatpush.msra.mxu0 0.0
    %1559 = vmatpush.msra.mxu0 0.0
    %1560 = vmatpush.msra.mxu0 0.0
    %1561 = vmatpush.msra.mxu0 0.0
    %1562 = vmatpush.msra.mxu0 0.0
    %1563 = vmatpush.msra.mxu0 0.0
    %1564 = vmatpush.msra.mxu0 0.0
    %1565 = vmatpush.msra.mxu0 %v1546
    %1566 = vmatpush.msra.mxu0 %v1545
    %1567 = vmatpush.msra.mxu0 %v1544
    %1568 = vmatpush.msra.mxu0 %v1543
    %1569 = vmatmul.f32.gmra.mxu0 %v1547
    %v1570 = vpop.f32.mrf.mxu0
    %v1571 = vadd.f32 0.0, %v1570
    %1572 = vmatmul.f32.gmra.mxu0 %v1549
    %v1573 = vpop.f32.mrf.mxu0
    %v1574 = vadd.f32 0.0, %v1573
    %1575 = vmatmul.f32.gmra.mxu0 %v1551
    %v1576 = vpop.f32.mrf.mxu0
    %v1577 = vadd.f32 0.0, %v1576
    %1578 = vdwg.mxu0
    %v1579 = vld [vmem:[%s35] sm:$0xff]
    %v1580 = vld [vmem:[%s35 + $0x8] sm:$0xff]
    %v1582 = vsel %vm664, %v569, 0
    %1584 = vmatpush.msra.mxu0 0.0
    %1585 = vmatpush.msra.mxu0 0.0
    %1586 = vmatpush.msra.mxu0 0.0
    %1587 = vmatpush.msra.mxu0 0.0
    %1588 = vmatpush.msra.mxu0 0.0
    %1589 = vmatpush.msra.mxu0 0.0
    %1590 = vmatpush.msra.mxu0 0.0
    %1591 = vmatpush.msra.mxu0 0.0
    %1592 = vmatpush.msra.mxu0 0.0
    %1593 = vmatpush.msra.mxu0 0.0
    %1594 = vmatpush.msra.mxu0 0.0
    %1595 = vmatpush.msra.mxu0 0.0
    %1596 = vmatpush.msra.mxu0 0.0
    %1597 = vmatpush.msra.mxu0 0.0
    %1598 = vmatpush.msra.mxu0 %v1580
    %1599 = vmatpush.msra.mxu0 %v1579
    %1600 = vmatmul.f32.gmra.mxu0 %v1582
    %v1601 = vpop.f32.mrf.mxu0
    %v1602 = vadd.f32 0.0, %v1601
    %1603 = vdwg.mxu0
    %v1604 = vadd.f32 %v1535, %v1571
    %v1605 = vadd.f32 %v1538, %v1574
    %v1606 = vadd.f32 %v1541, %v1577
    %v1607 = vld [vmem:[#allocation6] sm:$0x1]
    %v1609 = vperm.slane %v1607, 0
    %v1611 = vmul.f32 %v1535, %v1609
    %v1612 = vmul.f32 %v1538, %v1609
    %v1613 = vmul.f32 %v1541, %v1609
    %v1614 = vld [vmem:[#allocation8] sm:$0x1]
    %v1616 = vperm.slane %v1614, 0
    %v1618 = vmul.f32 %v1571, %v1616
    %v1619 = vmul.f32 %v1574, %v1616
    %v1620 = vmul.f32 %v1577, %v1616
    %v1621 = vadd.f32 %v1611, %v1618
    %v1622 = vadd.f32 %v1612, %v1619
    %v1623 = vadd.f32 %v1613, %v1620
    %1624 = vmatpush.msra.mxu0 %v568
    %1625 = vmatpush.msra.mxu0 %v567
    %1626 = vmatpush.msra.mxu0 %v566
    %1627 = vmatpush.msra.mxu0 %v565
    %1628 = vmatpush.msra.mxu0 %v564
    %1629 = vmatpush.msra.mxu0 %v563
    %1630 = vmatpush.msra.mxu0 %v562
    %1631 = vmatpush.msra.mxu0 %v561
    %1632 = vmatpush.msra.mxu0 %v560
    %1633 = vmatpush.msra.mxu0 %v559
    %1634 = vmatpush.msra.mxu0 %v558
    %1635 = vmatpush.msra.mxu0 %v557
    %1636 = vmatpush.msra.mxu0 %v556
    %1637 = vmatpush.msra.mxu0 %v555
    %1638 = vmatpush.msra.mxu0 %v554
    %1639 = vmatpush.msra.mxu0 %v553
    %1640 = vmatmul.f32.gmra.mxu0 %v1621
    %v1641 = vpop.f32.mrf.mxu0
    %v1642 = vadd.f32 0.0, %v1641
    %1643 = vmatmul.f32.gmra.mxu0 %v1622
    %v1644 = vpop.f32.mrf.mxu0
    %v1645 = vadd.f32 0.0, %v1644
    %1646 = vmatmul.f32.gmra.mxu0 %v1623
    %v1647 = vpop.f32.mrf.mxu0
    %v1648 = vadd.f32 0.0, %v1647
    %1649 = vdwg.mxu0
    %v1650 = vld [vmem:[#allocation9] sm:$0x1]
    %v1652 = vperm.slane %v1650, 0
    %v1654 = vmul.f32 %v1602, %v1652
    %1655 = vmatpush.msra.mxu0 %v568
    %1656 = vmatpush.msra.mxu0 %v567
    %1657 = vmatpush.msra.mxu0 %v566
    %1658 = vmatpush.msra.mxu0 %v565
    %1659 = vmatpush.msra.mxu0 %v564
    %1660 = vmatpush.msra.mxu0 %v563
    %1661 = vmatpush.msra.mxu0 %v562
    %1662 = vmatpush.msra.mxu0 %v561
    %1663 = vmatpush.msra.mxu0 %v560
    %1664 = vmatpush.msra.mxu0 %v559
    %1665 = vmatpush.msra.mxu0 %v558
    %1666 = vmatpush.msra.mxu0 %v557
    %1667 = vmatpush.msra.mxu0 %v556
    %1668 = vmatpush.msra.mxu0 %v555
    %1669 = vmatpush.msra.mxu0 %v554
    %1670 = vmatpush.msra.mxu0 %v553
    %1671 = vmatmul.f32.gmra.mxu0 %v1654
    %v1672 = vpop.f32.mrf.mxu0
    %v1673 = vadd.f32 0.0, %v1672
    %1674 = vdwg.mxu0
    %1675 = vxpose.xlu0.b32.start [1/16] %v1642, 128
    %1676 = vxpose.xlu0.b32.cont [2/16] %v1645, 128
    %1677 = vxpose.xlu0.b32.cont [3/16] %v1648, 128
    %1678 = vxpose.xlu0.b32.cont [4/16] 0.0, 128
    %1679 = vxpose.xlu0.b32.cont [5/16] 0.0, 128
    %1680 = vxpose.xlu0.b32.cont [6/16] 0.0, 128
    %1681 = vxpose.xlu0.b32.cont [7/16] 0.0, 128
    %1682 = vxpose.xlu0.b32.cont [8/16] 0.0, 128
    %1683 = vxpose.xlu0.b32.cont [9/16] 0.0, 128
    %1684 = vxpose.xlu0.b32.cont [10/16] 0.0, 128
    %1685 = vxpose.xlu0.b32.cont [11/16] 0.0, 128
    %1686 = vxpose.xlu0.b32.cont [12/16] 0.0, 128
    %1687 = vxpose.xlu0.b32.cont [13/16] 0.0, 128
    %1688 = vxpose.xlu0.b32.cont [14/16] 0.0, 128
    %1689 = vxpose.xlu0.b32.cont [15/16] 0.0, 128
    %1690 = vxpose.xlu0.b32.end [16/16] 0.0, 128
    %v1691 = vpop.trf.xlu0
    %v1692 = vpop.trf.xlu0
    %v1693 = vpop.trf.xlu0
    %v1694 = vpop.trf.xlu0
    %v1695 = vpop.trf.xlu0
    %v1696 = vpop.trf.xlu0
    %v1697 = vpop.trf.xlu0
    %v1698 = vpop.trf.xlu0
    %v1699 = vpop.trf.xlu0
    %v1700 = vpop.trf.xlu0
    %v1701 = vpop.trf.xlu0
    %v1702 = vpop.trf.xlu0
    %v1703 = vpop.trf.xlu0
    %v1704 = vpop.trf.xlu0
    %v1705 = vpop.trf.xlu0
    %v1706 = vpop.trf.xlu0
    %1708 = vset.pattern.permute.xlu0 0
    %1709 = vperm.xlu0 %1708, %v1673
    %v1710 = vpop.permute.xlu0 %1709
    %v1712 = vperm.slane %v1691, 0
    %v1713 = vadd.f32 %v1710, %v1712
    %vm1714 = vcmp.gt.f32.partialorder %v1713, 0.0
    %v1715 = vmul.f32 %v1713, 0.2
    %v1716 = vsel %vm1714, %v1713, %v1715
    %vm1717 = vcmp.gt.f32.partialorder %v466, 0.0
    %v1718 = vsel %vm1717, %v1716, -1e+30
    %v1719 = vsel %vm897, %v1718, -inf
    %1720 = vmax.xlane.f32.xlu0 %v1719
    %v1721 = vpop.xlane.xlu0 %1720
    %v1722 = vsub.f32 %v1718, %v1721
    %v1723 = vmul.f32 %v1722, 1.442695
    %v1724 = vpow.pop %v1723
    %v1725 = vsel %vm1717, %v1724, 0.0
    %v1726 = vsel %vm897, %v1725, 0.0
    %1727 = vadd.xlane.f32.xlu0 %v1726
    %v1728 = vpop.xlane.xlu0 %1727
    %v1729 = vmax.f32 %v1728, 1e-09
    %v1730 = vrcp.pop %v1729
    %v1731 = vmul.f32 %v1725, %v1730
    %1735 = vrot.lane.b32.xlu0 %v1642, 127
    %v1736 = vpop.permute.xlu0 %1735
    %1737 = vrot.lane.b32.xlu0 %v1645, 127
    %v1738 = vpop.permute.xlu0 %1737
    %1739 = vrot.lane.b32.xlu0 %v1648, 127
    %v1740 = vpop.permute.xlu0 %1739
    %1744 = vxpose.xlu0.b32.start [1/16] %v1736, 128
    %1745 = vxpose.xlu0.b32.cont [2/16] %v1738, 128
    %1746 = vxpose.xlu0.b32.cont [3/16] %v1740, 128
    %1747 = vxpose.xlu0.b32.cont [4/16] 0.0, 128
    %1748 = vxpose.xlu0.b32.cont [5/16] 0.0, 128
    %1749 = vxpose.xlu0.b32.cont [6/16] 0.0, 128
    %1750 = vxpose.xlu0.b32.cont [7/16] 0.0, 128
    %1751 = vxpose.xlu0.b32.cont [8/16] 0.0, 128
    %1752 = vxpose.xlu0.b32.cont [9/16] 0.0, 128
    %1753 = vxpose.xlu0.b32.cont [10/16] 0.0, 128
    %1754 = vxpose.xlu0.b32.cont [11/16] 0.0, 128
    %1755 = vxpose.xlu0.b32.cont [12/16] 0.0, 128
    %1756 = vxpose.xlu0.b32.cont [13/16] 0.0, 128
    %1757 = vxpose.xlu0.b32.cont [14/16] 0.0, 128
    %1758 = vxpose.xlu0.b32.cont [15/16] 0.0, 128
    %1759 = vxpose.xlu0.b32.end [16/16] 0.0, 128
    %v1760 = vpop.trf.xlu0
    %v1761 = vpop.trf.xlu0
    %v1762 = vpop.trf.xlu0
    %v1763 = vpop.trf.xlu0
    %v1764 = vpop.trf.xlu0
    %v1765 = vpop.trf.xlu0
    %v1766 = vpop.trf.xlu0
    %v1767 = vpop.trf.xlu0
    %v1768 = vpop.trf.xlu0
    %v1769 = vpop.trf.xlu0
    %v1770 = vpop.trf.xlu0
    %v1771 = vpop.trf.xlu0
    %v1772 = vpop.trf.xlu0
    %v1773 = vpop.trf.xlu0
    %v1774 = vpop.trf.xlu0
    %v1775 = vpop.trf.xlu0
    %1776 = vset.pattern.permute.xlu0 1
    %1777 = vperm.xlu0 %1776, %v1673
    %v1778 = vpop.permute.xlu0 %1777
    %v1780 = vperm.slane %v1760, 0
    %v1781 = vadd.f32 %v1778, %v1780
    %vm1782 = vcmp.gt.f32.partialorder %v1781, 0.0
    %v1783 = vmul.f32 %v1781, 0.2
    %v1784 = vsel %vm1782, %v1781, %v1783
    %v1785 = vsel %vm1717, %v1784, -1e+30
    %v1786 = vsel %vm897, %v1785, -inf
    %1787 = vmax.xlane.f32.xlu0 %v1786
    %v1788 = vpop.xlane.xlu0 %1787
    %v1789 = vsub.f32 %v1785, %v1788
    %v1790 = vmul.f32 %v1789, 1.442695
    %v1791 = vpow.pop %v1790
    %v1792 = vsel %vm1717, %v1791, 0.0
    %v1793 = vsel %vm897, %v1792, 0.0
    %1794 = vadd.xlane.f32.xlu0 %v1793
    %v1795 = vpop.xlane.xlu0 %1794
    %v1796 = vmax.f32 %v1795, 1e-09
    %v1797 = vrcp.pop %v1796
    %v1798 = vmul.f32 %v1792, %v1797
    %1802 = vrot.lane.b32.xlu0 %v1604, 96
    %v1803 = vpop.permute.xlu0 %1802
    %1804 = vrot.lane.b32.xlu0 %v1605, 96
    %v1805 = vpop.permute.xlu0 %1804
    %1806 = vrot.lane.b32.xlu0 %v1606, 96
    %v1807 = vpop.permute.xlu0 %1806
    %v1812 = vsel %vm897, %v1798, 0
    %1814 = vmatpush.msra.mxu0 0.0
    %1815 = vmatpush.msra.mxu0 0.0
    %1816 = vmatpush.msra.mxu0 0.0
    %1817 = vmatpush.msra.mxu0 0.0
    %1818 = vmatpush.msra.mxu0 0.0
    %1819 = vmatpush.msra.mxu0 0.0
    %1820 = vmatpush.msra.mxu0 0.0
    %1821 = vmatpush.msra.mxu0 0.0
    %1822 = vmatpush.msra.mxu0 0.0
    %1823 = vmatpush.msra.mxu0 0.0
    %1824 = vmatpush.msra.mxu0 0.0
    %1825 = vmatpush.msra.mxu0 0.0
    %1826 = vmatpush.msra.mxu0 0.0
    %1827 = vmatpush.msra.mxu0 %v1807
    %1828 = vmatpush.msra.mxu0 %v1805
    %1829 = vmatpush.msra.mxu0 %v1803
    %1830 = vmatmul.f32.gmra.mxu0 %v1812
    %v1831 = vpop.f32.mrf.mxu0
    %v1832 = vadd.f32 0.0, %v1831
    %1833 = vdwg.mxu0
    %v1835 = vsel %vm897, %v1731, 0
    %1837 = vmatpush.msra.mxu0 0.0
    %1838 = vmatpush.msra.mxu0 0.0
    %1839 = vmatpush.msra.mxu0 0.0
    %1840 = vmatpush.msra.mxu0 0.0
    %1841 = vmatpush.msra.mxu0 0.0
    %1842 = vmatpush.msra.mxu0 0.0
    %1843 = vmatpush.msra.mxu0 0.0
    %1844 = vmatpush.msra.mxu0 0.0
    %1845 = vmatpush.msra.mxu0 0.0
    %1846 = vmatpush.msra.mxu0 0.0
    %1847 = vmatpush.msra.mxu0 0.0
    %1848 = vmatpush.msra.mxu0 0.0
    %1849 = vmatpush.msra.mxu0 0.0
    %1850 = vmatpush.msra.mxu0 %v1606
    %1851 = vmatpush.msra.mxu0 %v1605
    %1852 = vmatpush.msra.mxu0 %v1604
    %1853 = vmatmul.f32.gmra.mxu0 %v1835
    %v1854 = vpop.f32.mrf.mxu0
    %v1855 = vadd.f32 %v1832, %v1854
    %1856 = vdwg.mxu0
    %1857 = vrot.lane.b32.xlu0 %v1642, 126
    %v1858 = vpop.permute.xlu0 %1857
    %1859 = vrot.lane.b32.xlu0 %v1645, 126
    %v1860 = vpop.permute.xlu0 %1859
    %1861 = vrot.lane.b32.xlu0 %v1648, 126
    %v1862 = vpop.permute.xlu0 %1861
    %1866 = vxpose.xlu0.b32.start [1/16] %v1858, 128
    %1867 = vxpose.xlu0.b32.cont [2/16] %v1860, 128
    %1868 = vxpose.xlu0.b32.cont [3/16] %v1862, 128
    %1869 = vxpose.xlu0.b32.cont [4/16] 0.0, 128
    %1870 = vxpose.xlu0.b32.cont [5/16] 0.0, 128
    %1871 = vxpose.xlu0.b32.cont [6/16] 0.0, 128
    %1872 = vxpose.xlu0.b32.cont [7/16] 0.0, 128
    %1873 = vxpose.xlu0.b32.cont [8/16] 0.0, 128
    %1874 = vxpose.xlu0.b32.cont [9/16] 0.0, 128
    %1875 = vxpose.xlu0.b32.cont [10/16] 0.0, 128
    %1876 = vxpose.xlu0.b32.cont [11/16] 0.0, 128
    %1877 = vxpose.xlu0.b32.cont [12/16] 0.0, 128
    %1878 = vxpose.xlu0.b32.cont [13/16] 0.0, 128
    %1879 = vxpose.xlu0.b32.cont [14/16] 0.0, 128
    %1880 = vxpose.xlu0.b32.cont [15/16] 0.0, 128
    %1881 = vxpose.xlu0.b32.end [16/16] 0.0, 128
    %v1882 = vpop.trf.xlu0
    %v1883 = vpop.trf.xlu0
    %v1884 = vpop.trf.xlu0
    %v1885 = vpop.trf.xlu0
    %v1886 = vpop.trf.xlu0
    %v1887 = vpop.trf.xlu0
    %v1888 = vpop.trf.xlu0
    %v1889 = vpop.trf.xlu0
    %v1890 = vpop.trf.xlu0
    %v1891 = vpop.trf.xlu0
    %v1892 = vpop.trf.xlu0
    %v1893 = vpop.trf.xlu0
    %v1894 = vpop.trf.xlu0
    %v1895 = vpop.trf.xlu0
    %v1896 = vpop.trf.xlu0
    %v1897 = vpop.trf.xlu0
    %1898 = vset.pattern.permute.xlu0 2
    %1899 = vperm.xlu0 %1898, %v1673
    %v1900 = vpop.permute.xlu0 %1899
    %v1902 = vperm.slane %v1882, 0
    %v1903 = vadd.f32 %v1900, %v1902
    %vm1904 = vcmp.gt.f32.partialorder %v1903, 0.0
    %v1905 = vmul.f32 %v1903, 0.2
    %v1906 = vsel %vm1904, %v1903, %v1905
    %v1907 = vsel %vm1717, %v1906, -1e+30
    %v1908 = vsel %vm897, %v1907, -inf
    %1909 = vmax.xlane.f32.xlu0 %v1908
    %v1910 = vpop.xlane.xlu0 %1909
    %v1911 = vsub.f32 %v1907, %v1910
    %v1912 = vmul.f32 %v1911, 1.442695
    %v1913 = vpow.pop %v1912
    %v1914 = vsel %vm1717, %v1913, 0.0
    %v1915 = vsel %vm897, %v1914, 0.0
    %1916 = vadd.xlane.f32.xlu0 %v1915
    %v1917 = vpop.xlane.xlu0 %1916
    %v1918 = vmax.f32 %v1917, 1e-09
    %v1919 = vrcp.pop %v1918
    %v1920 = vmul.f32 %v1914, %v1919
    %1921 = vrot.lane.b32.xlu0 %v1604, 64
    %v1922 = vpop.permute.xlu0 %1921
    %1923 = vrot.lane.b32.xlu0 %v1605, 64
    %v1924 = vpop.permute.xlu0 %1923
    %1925 = vrot.lane.b32.xlu0 %v1606, 64
    %v1926 = vpop.permute.xlu0 %1925
    %v1931 = vsel %vm897, %v1920, 0
    %1933 = vmatpush.msra.mxu0 0.0
    %1934 = vmatpush.msra.mxu0 0.0
    %1935 = vmatpush.msra.mxu0 0.0
    %1936 = vmatpush.msra.mxu0 0.0
    %1937 = vmatpush.msra.mxu0 0.0
    %1938 = vmatpush.msra.mxu0 0.0
    %1939 = vmatpush.msra.mxu0 0.0
    %1940 = vmatpush.msra.mxu0 0.0
    %1941 = vmatpush.msra.mxu0 0.0
    %1942 = vmatpush.msra.mxu0 0.0
    %1943 = vmatpush.msra.mxu0 0.0
    %1944 = vmatpush.msra.mxu0 0.0
    %1945 = vmatpush.msra.mxu0 0.0
    %1946 = vmatpush.msra.mxu0 %v1926
    %1947 = vmatpush.msra.mxu0 %v1924
    %1948 = vmatpush.msra.mxu0 %v1922
    %1949 = vmatmul.f32.gmra.mxu0 %v1931
    %v1950 = vpop.f32.mrf.mxu0
    %v1951 = vadd.f32 0.0, %v1950
    %1952 = vdwg.mxu0
    %v1953 = vadd.f32 %v1855, %v1951
    %1954 = vrot.lane.b32.xlu0 %v1642, 125
    %v1955 = vpop.permute.xlu0 %1954
    %1956 = vrot.lane.b32.xlu0 %v1645, 125
    %v1957 = vpop.permute.xlu0 %1956
    %1958 = vrot.lane.b32.xlu0 %v1648, 125
    %v1959 = vpop.permute.xlu0 %1958
    %1963 = vxpose.xlu0.b32.start [1/16] %v1955, 128
    %1964 = vxpose.xlu0.b32.cont [2/16] %v1957, 128
    %1965 = vxpose.xlu0.b32.cont [3/16] %v1959, 128
    %1966 = vxpose.xlu0.b32.cont [4/16] 0.0, 128
    %1967 = vxpose.xlu0.b32.cont [5/16] 0.0, 128
    %1968 = vxpose.xlu0.b32.cont [6/16] 0.0, 128
    %1969 = vxpose.xlu0.b32.cont [7/16] 0.0, 128
    %1970 = vxpose.xlu0.b32.cont [8/16] 0.0, 128
    %1971 = vxpose.xlu0.b32.cont [9/16] 0.0, 128
    %1972 = vxpose.xlu0.b32.cont [10/16] 0.0, 128
    %1973 = vxpose.xlu0.b32.cont [11/16] 0.0, 128
    %1974 = vxpose.xlu0.b32.cont [12/16] 0.0, 128
    %1975 = vxpose.xlu0.b32.cont [13/16] 0.0, 128
    %1976 = vxpose.xlu0.b32.cont [14/16] 0.0, 128
    %1977 = vxpose.xlu0.b32.cont [15/16] 0.0, 128
    %1978 = vxpose.xlu0.b32.end [16/16] 0.0, 128
    %v1979 = vpop.trf.xlu0
    %v1980 = vpop.trf.xlu0
    %v1981 = vpop.trf.xlu0
    %v1982 = vpop.trf.xlu0
    %v1983 = vpop.trf.xlu0
    %v1984 = vpop.trf.xlu0
    %v1985 = vpop.trf.xlu0
    %v1986 = vpop.trf.xlu0
    %v1987 = vpop.trf.xlu0
    %v1988 = vpop.trf.xlu0
    %v1989 = vpop.trf.xlu0
    %v1990 = vpop.trf.xlu0
    %v1991 = vpop.trf.xlu0
    %v1992 = vpop.trf.xlu0
    %v1993 = vpop.trf.xlu0
    %v1994 = vpop.trf.xlu0
    %1995 = vset.pattern.permute.xlu0 3
    %1996 = vperm.xlu0 %1995, %v1673
    %v1997 = vpop.permute.xlu0 %1996
    %v1999 = vperm.slane %v1979, 0
    %v2000 = vadd.f32 %v1997, %v1999
    %vm2001 = vcmp.gt.f32.partialorder %v2000, 0.0
    %v2002 = vmul.f32 %v2000, 0.2
    %v2003 = vsel %vm2001, %v2000, %v2002
    %v2004 = vsel %vm1717, %v2003, -1e+30
    %v2005 = vsel %vm897, %v2004, -inf
    %2006 = vmax.xlane.f32.xlu0 %v2005
    %v2007 = vpop.xlane.xlu0 %2006
    %v2008 = vsub.f32 %v2004, %v2007
    %v2009 = vmul.f32 %v2008, 1.442695
    %v2010 = vpow.pop %v2009
    %v2011 = vsel %vm1717, %v2010, 0.0
    %v2012 = vsel %vm897, %v2011, 0.0
    %2013 = vadd.xlane.f32.xlu0 %v2012
    %v2014 = vpop.xlane.xlu0 %2013
    %v2015 = vmax.f32 %v2014, 1e-09
    %v2016 = vrcp.pop %v2015
    %v2017 = vmul.f32 %v2011, %v2016
    %2018 = vrot.lane.b32.xlu0 %v1604, 32
    %v2019 = vpop.permute.xlu0 %2018
    %2020 = vrot.lane.b32.xlu0 %v1605, 32
    %v2021 = vpop.permute.xlu0 %2020
    %2022 = vrot.lane.b32.xlu0 %v1606, 32
    %v2023 = vpop.permute.xlu0 %2022
    %v2028 = vsel %vm897, %v2017, 0
    %2030 = vmatpush.msra.mxu0 0.0
    %2031 = vmatpush.msra.mxu0 0.0
    %2032 = vmatpush.msra.mxu0 0.0
    %2033 = vmatpush.msra.mxu0 0.0
    %2034 = vmatpush.msra.mxu0 0.0
    %2035 = vmatpush.msra.mxu0 0.0
    %2036 = vmatpush.msra.mxu0 0.0
    %2037 = vmatpush.msra.mxu0 0.0
    %2038 = vmatpush.msra.mxu0 0.0
    %2039 = vmatpush.msra.mxu0 0.0
    %2040 = vmatpush.msra.mxu0 0.0
    %2041 = vmatpush.msra.mxu0 0.0
    %2042 = vmatpush.msra.mxu0 0.0
    %2043 = vmatpush.msra.mxu0 %v2023
    %2044 = vmatpush.msra.mxu0 %v2021
    %2045 = vmatpush.msra.mxu0 %v2019
    %2046 = vmatmul.f32.gmra.mxu0 %v2028
    %v2047 = vpop.f32.mrf.mxu0
    %v2048 = vadd.f32 0.0, %v2047
    %2049 = vdwg.mxu0
    %v2050 = vadd.f32 %v1953, %v2048
    %v2051 = vmul.f32 %v2050, 0.25
    %v2052 = vmax.f32 %v2051, 0.0
    %2053 = vmatpush.msra.mxu0 0.0
    %2054 = vmatpush.msra.mxu0 0.0
    %2055 = vmatpush.msra.mxu0 0.0
    %2056 = vmatpush.msra.mxu0 0.0
    %2057 = vmatpush.msra.mxu0 0.0
    %2058 = vmatpush.msra.mxu0 0.0
    %2059 = vmatpush.msra.mxu0 0.0
    %2060 = vmatpush.msra.mxu0 0.0
    %2061 = vmatpush.msra.mxu0 0.0
    %2062 = vmatpush.msra.mxu0 0.0
    %2063 = vmatpush.msra.mxu0 0.0
    %2064 = vmatpush.msra.mxu0 0.0
    %2065 = vmatpush.msra.mxu0 0.0
    %2066 = vmatpush.msra.mxu0 0.0
    %2067 = vmatpush.msra.mxu0 0.0
    %2068 = vmatpush.msra.mxu0 %v2052
    %2069 = vmatmul.f32.gmra.mxu0 %v571
    %v2070 = vpop.f32.mrf.mxu0
    %v2071 = vadd.f32 0.0, %v2070
    %2072 = vmatmul.f32.gmra.mxu0 %v574
    %v2073 = vpop.f32.mrf.mxu0
    %v2074 = vadd.f32 0.0, %v2073
    %2075 = vmatmul.f32.gmra.mxu0 %v577
    %v2076 = vpop.f32.mrf.mxu0
    %v2077 = vadd.f32 0.0, %v2076
    %2078 = vdwg.mxu0
    %2079 = vmatpush.msra.mxu0 0.0
    %2080 = vmatpush.msra.mxu0 0.0
    %2081 = vmatpush.msra.mxu0 0.0
    %2082 = vmatpush.msra.mxu0 0.0
    %2083 = vmatpush.msra.mxu0 0.0
    %2084 = vmatpush.msra.mxu0 0.0
    %2085 = vmatpush.msra.mxu0 0.0
    %2086 = vmatpush.msra.mxu0 0.0
    %2087 = vmatpush.msra.mxu0 0.0
    %2088 = vmatpush.msra.mxu0 0.0
    %2089 = vmatpush.msra.mxu0 0.0
    %2090 = vmatpush.msra.mxu0 0.0
    %2091 = vmatpush.msra.mxu0 0.0
    %2092 = vmatpush.msra.mxu0 0.0
    %2093 = vmatpush.msra.mxu0 0.0
    %2094 = vmatpush.msra.mxu0 %v2052
    %2095 = vmatmul.f32.gmra.mxu0 %v606
    %v2096 = vpop.f32.mrf.mxu0
    %v2097 = vadd.f32 0.0, %v2096
    %2098 = vmatmul.f32.gmra.mxu0 %v609
    %v2099 = vpop.f32.mrf.mxu0
    %v2100 = vadd.f32 0.0, %v2099
    %2101 = vmatmul.f32.gmra.mxu0 %v612
    %v2102 = vpop.f32.mrf.mxu0
    %v2103 = vadd.f32 0.0, %v2102
    %2104 = vdwg.mxu0
    %2108 = vrot.lane.b32.xlu0 %v2097, 32
    %v2109 = vpop.permute.xlu0 %2108
    %2110 = vrot.lane.b32.xlu0 %v2100, 32
    %v2111 = vpop.permute.xlu0 %2110
    %2112 = vrot.lane.b32.xlu0 %v2103, 32
    %v2113 = vpop.permute.xlu0 %2112
    %2117 = vrot.lane.b32.xlu0 %v457, 64
    %v2118 = vpop.permute.xlu0 %2117
    %2119 = vrot.lane.b32.xlu0 %v458, 64
    %v2120 = vpop.permute.xlu0 %2119
    %2121 = vrot.lane.b32.xlu0 %v459, 64
    %v2122 = vpop.permute.xlu0 %2121
    %v2126 = vsel %vm668, %v2071, %v2109
    %v2127 = vsel %vm668, %v2074, %v2111
    %v2128 = vsel %vm668, %v2077, %v2113
    %v2129 = vsel %vm684, %v2126, %v2118
    %v2130 = vsel %vm684, %v2127, %v2120
    %v2131 = vsel %vm684, %v2128, %v2122
    %v2132 = vld [vmem:[%s45] sm:$0xff]
    %v2133 = vld [vmem:[%s45 + $0x8] sm:$0xff]
    %v2134 = vld [vmem:[%s45 + $0x10] sm:$0xff]
    %v2135 = vld [vmem:[%s45 + $0x18] sm:$0xff]
    %v2136 = vld [vmem:[%s45 + $0x20] sm:$0xff]
    %v2137 = vld [vmem:[%s45 + $0x28] sm:$0xff]
    %v2138 = vld [vmem:[%s45 + $0x30] sm:$0xff]
    %v2139 = vld [vmem:[%s45 + $0x38] sm:$0xff]
    %v2140 = vld [vmem:[%s45 + $0x40] sm:$0xff]
    %v2141 = vld [vmem:[%s45 + $0x48] sm:$0xff]
    %v2142 = vld [vmem:[%s45 + $0x50] sm:$0xff]
    %v2143 = vld [vmem:[%s45 + $0x58] sm:$0xff]
    %v2144 = vld [vmem:[#allocation11] sm:$0x1]
    %v2146 = vperm.slane %v2144, 0
    %v2149 = vsel %vm1497, %v2129, 0
    %v2152 = vsel %vm1497, %v2130, 0
    %v2155 = vsel %vm1497, %v2131, 0
    %2157 = vmatpush.msra.mxu0 0.0
    %2158 = vmatpush.msra.mxu0 0.0
    %2159 = vmatpush.msra.mxu0 0.0
    %2160 = vmatpush.msra.mxu0 0.0
    %2161 = vmatpush.msra.mxu0 %v2143
    %2162 = vmatpush.msra.mxu0 %v2142
    %2163 = vmatpush.msra.mxu0 %v2141
    %2164 = vmatpush.msra.mxu0 %v2140
    %2165 = vmatpush.msra.mxu0 %v2139
    %2166 = vmatpush.msra.mxu0 %v2138
    %2167 = vmatpush.msra.mxu0 %v2137
    %2168 = vmatpush.msra.mxu0 %v2136
    %2169 = vmatpush.msra.mxu0 %v2135
    %2170 = vmatpush.msra.mxu0 %v2134
    %2171 = vmatpush.msra.mxu0 %v2133
    %2172 = vmatpush.msra.mxu0 %v2132
    %2173 = vmatmul.f32.gmra.mxu0 %v2149
    %v2174 = vpop.f32.mrf.mxu0
    %v2175 = vadd.f32 %v2146, %v2174
    %2176 = vmatmul.f32.gmra.mxu0 %v2152
    %v2177 = vpop.f32.mrf.mxu0
    %v2178 = vadd.f32 %v2146, %v2177
    %2179 = vmatmul.f32.gmra.mxu0 %v2155
    %v2180 = vpop.f32.mrf.mxu0
    %v2181 = vadd.f32 %v2146, %v2180
    %2182 = vdwg.mxu0
    %v2183 = vmax.f32 %v2175, 0.0
    %v2184 = vmax.f32 %v2178, 0.0
    %v2185 = vmax.f32 %v2181, 0.0
    %v2186 = vld [vmem:[#allocation12] sm:$0xff]
    %v2187 = vld [vmem:[#allocation12 + $0x8] sm:$0xff]
    %v2188 = vld [vmem:[#allocation12 + $0x10] sm:$0xff]
    %v2189 = vld [vmem:[#allocation12 + $0x18] sm:$0xff]
    %v2191 = vsel %vm668, %v2183, 0
    %v2194 = vsel %vm668, %v2184, 0
    %v2197 = vsel %vm668, %v2185, 0
    %2199 = vmatpush.msra.mxu0 0.0
    %2200 = vmatpush.msra.mxu0 0.0
    %2201 = vmatpush.msra.mxu0 0.0
    %2202 = vmatpush.msra.mxu0 0.0
    %2203 = vmatpush.msra.mxu0 0.0
    %2204 = vmatpush.msra.mxu0 0.0
    %2205 = vmatpush.msra.mxu0 0.0
    %2206 = vmatpush.msra.mxu0 0.0
    %2207 = vmatpush.msra.mxu0 0.0
    %2208 = vmatpush.msra.mxu0 0.0
    %2209 = vmatpush.msra.mxu0 0.0
    %2210 = vmatpush.msra.mxu0 0.0
    %2211 = vmatpush.msra.mxu0 %v2189
    %2212 = vmatpush.msra.mxu0 %v2188
    %2213 = vmatpush.msra.mxu0 %v2187
    %2214 = vmatpush.msra.mxu0 %v2186
    %2215 = vmatmul.f32.gmra.mxu0 %v2191
    %v2216 = vpop.f32.mrf.mxu0
    %v2217 = vadd.f32 0.0, %v2216
    %2218 = vmatmul.f32.gmra.mxu0 %v2194
    %v2219 = vpop.f32.mrf.mxu0
    %v2220 = vadd.f32 0.0, %v2219
    %2221 = vmatmul.f32.gmra.mxu0 %v2197
    %v2222 = vpop.f32.mrf.mxu0
    %v2223 = vadd.f32 0.0, %v2222
    %2224 = vdwg.mxu0
    %v2225 = vld [vmem:[#allocation14] sm:$0x1]
    %v2227 = vperm.slane %v2225, 0
    %v2229 = vmul.f32 %v2217, %v2227
    %v2230 = vmul.f32 %v2220, %v2227
    %v2231 = vmul.f32 %v2223, %v2227
    %2232 = vmatpush.msra.mxu0 %v568
    %2233 = vmatpush.msra.mxu0 %v567
    %2234 = vmatpush.msra.mxu0 %v566
    %2235 = vmatpush.msra.mxu0 %v565
    %2236 = vmatpush.msra.mxu0 %v564
    %2237 = vmatpush.msra.mxu0 %v563
    %2238 = vmatpush.msra.mxu0 %v562
    %2239 = vmatpush.msra.mxu0 %v561
    %2240 = vmatpush.msra.mxu0 %v560
    %2241 = vmatpush.msra.mxu0 %v559
    %2242 = vmatpush.msra.mxu0 %v558
    %2243 = vmatpush.msra.mxu0 %v557
    %2244 = vmatpush.msra.mxu0 %v556
    %2245 = vmatpush.msra.mxu0 %v555
    %2246 = vmatpush.msra.mxu0 %v554
    %2247 = vmatpush.msra.mxu0 %v553
    %2248 = vmatmul.f32.gmra.mxu0 %v2229
    %v2249 = vpop.f32.mrf.mxu0
    %v2250 = vadd.f32 0.0, %v2249
    %2251 = vmatmul.f32.gmra.mxu0 %v2230
    %v2252 = vpop.f32.mrf.mxu0
    %v2253 = vadd.f32 0.0, %v2252
    %2254 = vmatmul.f32.gmra.mxu0 %v2231
    %v2255 = vpop.f32.mrf.mxu0
    %v2256 = vadd.f32 0.0, %v2255
    %2257 = vdwg.mxu0
    %v2258 = vld [vmem:[#allocation15] sm:$0x1]
    %v2260 = vperm.slane %v2258, 0
    %v2262 = vmul.f32 %v2217, %v2260
    %v2263 = vmul.f32 %v2220, %v2260
    %v2264 = vmul.f32 %v2223, %v2260
    %2265 = vmatpush.msra.mxu0 %v568
    %2266 = vmatpush.msra.mxu0 %v567
    %2267 = vmatpush.msra.mxu0 %v566
    %2268 = vmatpush.msra.mxu0 %v565
    %2269 = vmatpush.msra.mxu0 %v564
    %2270 = vmatpush.msra.mxu0 %v563
    %2271 = vmatpush.msra.mxu0 %v562
    %2272 = vmatpush.msra.mxu0 %v561
    %2273 = vmatpush.msra.mxu0 %v560
    %2274 = vmatpush.msra.mxu0 %v559
    %2275 = vmatpush.msra.mxu0 %v558
    %2276 = vmatpush.msra.mxu0 %v557
    %2277 = vmatpush.msra.mxu0 %v556
    %2278 = vmatpush.msra.mxu0 %v555
    %2279 = vmatpush.msra.mxu0 %v554
    %2280 = vmatpush.msra.mxu0 %v553
    %2281 = vmatmul.f32.gmra.mxu0 %v2262
    %v2282 = vpop.f32.mrf.mxu0
    %v2283 = vadd.f32 0.0, %v2282
    %2284 = vmatmul.f32.gmra.mxu0 %v2263
    %v2285 = vpop.f32.mrf.mxu0
    %v2286 = vadd.f32 0.0, %v2285
    %2287 = vmatmul.f32.gmra.mxu0 %v2264
    %v2288 = vpop.f32.mrf.mxu0
    %v2289 = vadd.f32 0.0, %v2288
    %2290 = vdwg.mxu0
    %2291 = vxpose.xlu0.b32.start [1/16] %v2250, 128
    %2292 = vxpose.xlu0.b32.cont [2/16] %v2253, 128
    %2293 = vxpose.xlu0.b32.cont [3/16] %v2256, 128
    %2294 = vxpose.xlu0.b32.cont [4/16] 0.0, 128
    %2295 = vxpose.xlu0.b32.cont [5/16] 0.0, 128
    %2296 = vxpose.xlu0.b32.cont [6/16] 0.0, 128
    %2297 = vxpose.xlu0.b32.cont [7/16] 0.0, 128
    %2298 = vxpose.xlu0.b32.cont [8/16] 0.0, 128
    %2299 = vxpose.xlu0.b32.cont [9/16] 0.0, 128
    %2300 = vxpose.xlu0.b32.cont [10/16] 0.0, 128
    %2301 = vxpose.xlu0.b32.cont [11/16] 0.0, 128
    %2302 = vxpose.xlu0.b32.cont [12/16] 0.0, 128
    %2303 = vxpose.xlu0.b32.cont [13/16] 0.0, 128
    %2304 = vxpose.xlu0.b32.cont [14/16] 0.0, 128
    %2305 = vxpose.xlu0.b32.cont [15/16] 0.0, 128
    %2306 = vxpose.xlu0.b32.end [16/16] 0.0, 128
    %v2307 = vpop.trf.xlu0
    %v2308 = vpop.trf.xlu0
    %v2309 = vpop.trf.xlu0
    %v2310 = vpop.trf.xlu0
    %v2311 = vpop.trf.xlu0
    %v2312 = vpop.trf.xlu0
    %v2313 = vpop.trf.xlu0
    %v2314 = vpop.trf.xlu0
    %v2315 = vpop.trf.xlu0
    %v2316 = vpop.trf.xlu0
    %v2317 = vpop.trf.xlu0
    %v2318 = vpop.trf.xlu0
    %v2319 = vpop.trf.xlu0
    %v2320 = vpop.trf.xlu0
    %v2321 = vpop.trf.xlu0
    %v2322 = vpop.trf.xlu0
    %2324 = vset.pattern.permute.xlu0 0
    %2325 = vperm.xlu0 %2324, %v2283
    %v2326 = vpop.permute.xlu0 %2325
    %2329 = vset.pattern.permute.xlu0 0
    %2330 = vperm.xlu0 %2329, %v2286
    %v2331 = vpop.permute.xlu0 %2330
    %2334 = vset.pattern.permute.xlu0 0
    %2335 = vperm.xlu0 %2334, %v2289
    %v2336 = vpop.permute.xlu0 %2335
    %v2338 = vperm.slane %v2307, 0
    %v2339 = vadd.f32 %v2326, %v2338
    %v2340 = vadd.f32 %v2331, %v2338
    %v2341 = vadd.f32 %v2336, %v2338
    %vm2342 = vcmp.gt.f32.partialorder %v2339, 0.0
    %vm2343 = vcmp.gt.f32.partialorder %v2340, 0.0
    %vm2344 = vcmp.gt.f32.partialorder %v2341, 0.0
    %v2345 = vmul.f32 %v2339, 0.2
    %v2346 = vmul.f32 %v2340, 0.2
    %v2347 = vmul.f32 %v2341, 0.2
    %v2348 = vsel %vm2342, %v2339, %v2345
    %v2349 = vsel %vm2343, %v2340, %v2346
    %v2350 = vsel %vm2344, %v2341, %v2347
    %v2351 = vsel %vm891, %v2348, -1e+30
    %v2352 = vsel %vm892, %v2349, -1e+30
    %v2353 = vsel %vm893, %v2350, -1e+30
    %v2354 = vsel %vm897, %v2351, -inf
    %2355 = vmax.xlane.f32.xlu0 %v2354
    %v2356 = vpop.xlane.xlu0 %2355
    %v2357 = vsel %vm897, %v2352, -inf
    %2358 = vmax.xlane.f32.xlu0 %v2357
    %v2359 = vpop.xlane.xlu0 %2358
    %v2360 = vsel %vm897, %v2353, -inf
    %2361 = vmax.xlane.f32.xlu0 %v2360
    %v2362 = vpop.xlane.xlu0 %2361
    %v2363 = vsub.f32 %v2351, %v2356
    %v2364 = vsub.f32 %v2352, %v2359
    %v2365 = vsub.f32 %v2353, %v2362
    %v2366 = vmul.f32 %v2363, 1.442695
    %v2367 = vpow.pop %v2366
    %v2368 = vmul.f32 %v2364, 1.442695
    %v2369 = vpow.pop %v2368
    %v2370 = vmul.f32 %v2365, 1.442695
    %v2371 = vpow.pop %v2370
    %v2372 = vsel %vm891, %v2367, 0.0
    %v2373 = vsel %vm892, %v2369, 0.0
    %v2374 = vsel %vm893, %v2371, 0.0
    %v2375 = vsel %vm897, %v2372, 0.0
    %2376 = vadd.xlane.f32.xlu0 %v2375
    %v2377 = vpop.xlane.xlu0 %2376
    %v2378 = vsel %vm897, %v2373, 0.0
    %2379 = vadd.xlane.f32.xlu0 %v2378
    %v2380 = vpop.xlane.xlu0 %2379
    %v2381 = vsel %vm897, %v2374, 0.0
    %2382 = vadd.xlane.f32.xlu0 %v2381
    %v2383 = vpop.xlane.xlu0 %2382
    %v2384 = vmax.f32 %v2377, 1e-09
    %v2385 = vmax.f32 %v2380, 1e-09
    %v2386 = vmax.f32 %v2383, 1e-09
    %v2387 = vrcp.pop %v2384
    %v2388 = vrcp.pop %v2385
    %v2389 = vrcp.pop %v2386
    %v2390 = vmul.f32 %v2372, %v2387
    %v2391 = vmul.f32 %v2373, %v2388
    %v2392 = vmul.f32 %v2374, %v2389
    %v2394 = vsel %vm897, %v2390, 0
    %v2397 = vsel %vm897, %v2391, 0
    %v2400 = vsel %vm897, %v2392, 0
    %2402 = vmatpush.msra.mxu0 0.0
    %2403 = vmatpush.msra.mxu0 0.0
    %2404 = vmatpush.msra.mxu0 0.0
    %2405 = vmatpush.msra.mxu0 0.0
    %2406 = vmatpush.msra.mxu0 0.0
    %2407 = vmatpush.msra.mxu0 0.0
    %2408 = vmatpush.msra.mxu0 0.0
    %2409 = vmatpush.msra.mxu0 0.0
    %2410 = vmatpush.msra.mxu0 0.0
    %2411 = vmatpush.msra.mxu0 0.0
    %2412 = vmatpush.msra.mxu0 0.0
    %2413 = vmatpush.msra.mxu0 0.0
    %2414 = vmatpush.msra.mxu0 0.0
    %2415 = vmatpush.msra.mxu0 %v2223
    %2416 = vmatpush.msra.mxu0 %v2220
    %2417 = vmatpush.msra.mxu0 %v2217
    %2418 = vmatmul.f32.gmra.mxu0 %v2394
    %v2419 = vpop.f32.mrf.mxu0
    %v2420 = vadd.f32 0.0, %v2419
    %2421 = vmatmul.f32.gmra.mxu0 %v2397
    %v2422 = vpop.f32.mrf.mxu0
    %v2423 = vadd.f32 0.0, %v2422
    %2424 = vmatmul.f32.gmra.mxu0 %v2400
    %v2425 = vpop.f32.mrf.mxu0
    %v2426 = vadd.f32 0.0, %v2425
    %2427 = vdwg.mxu0
    %2431 = vrot.lane.b32.xlu0 %v2250, 127
    %v2432 = vpop.permute.xlu0 %2431
    %2433 = vrot.lane.b32.xlu0 %v2253, 127
    %v2434 = vpop.permute.xlu0 %2433
    %2435 = vrot.lane.b32.xlu0 %v2256, 127
    %v2436 = vpop.permute.xlu0 %2435
    %2440 = vxpose.xlu0.b32.start [1/16] %v2432, 128
    %2441 = vxpose.xlu0.b32.cont [2/16] %v2434, 128
    %2442 = vxpose.xlu0.b32.cont [3/16] %v2436, 128
    %2443 = vxpose.xlu0.b32.cont [4/16] 0.0, 128
    %2444 = vxpose.xlu0.b32.cont [5/16] 0.0, 128
    %2445 = vxpose.xlu0.b32.cont [6/16] 0.0, 128
    %2446 = vxpose.xlu0.b32.cont [7/16] 0.0, 128
    %2447 = vxpose.xlu0.b32.cont [8/16] 0.0, 128
    %2448 = vxpose.xlu0.b32.cont [9/16] 0.0, 128
    %2449 = vxpose.xlu0.b32.cont [10/16] 0.0, 128
    %2450 = vxpose.xlu0.b32.cont [11/16] 0.0, 128
    %2451 = vxpose.xlu0.b32.cont [12/16] 0.0, 128
    %2452 = vxpose.xlu0.b32.cont [13/16] 0.0, 128
    %2453 = vxpose.xlu0.b32.cont [14/16] 0.0, 128
    %2454 = vxpose.xlu0.b32.cont [15/16] 0.0, 128
    %2455 = vxpose.xlu0.b32.end [16/16] 0.0, 128
    %v2456 = vpop.trf.xlu0
    %v2457 = vpop.trf.xlu0
    %v2458 = vpop.trf.xlu0
    %v2459 = vpop.trf.xlu0
    %v2460 = vpop.trf.xlu0
    %v2461 = vpop.trf.xlu0
    %v2462 = vpop.trf.xlu0
    %v2463 = vpop.trf.xlu0
    %v2464 = vpop.trf.xlu0
    %v2465 = vpop.trf.xlu0
    %v2466 = vpop.trf.xlu0
    %v2467 = vpop.trf.xlu0
    %v2468 = vpop.trf.xlu0
    %v2469 = vpop.trf.xlu0
    %v2470 = vpop.trf.xlu0
    %v2471 = vpop.trf.xlu0
    %2472 = vset.pattern.permute.xlu0 1
    %2473 = vperm.xlu0 %2472, %v2283
    %v2474 = vpop.permute.xlu0 %2473
    %2476 = vset.pattern.permute.xlu0 1
    %2477 = vperm.xlu0 %2476, %v2286
    %v2478 = vpop.permute.xlu0 %2477
    %2480 = vset.pattern.permute.xlu0 1
    %2481 = vperm.xlu0 %2480, %v2289
    %v2482 = vpop.permute.xlu0 %2481
    %v2484 = vperm.slane %v2456, 0
    %v2485 = vadd.f32 %v2474, %v2484
    %v2486 = vadd.f32 %v2478, %v2484
    %v2487 = vadd.f32 %v2482, %v2484
    %vm2488 = vcmp.gt.f32.partialorder %v2485, 0.0
    %vm2489 = vcmp.gt.f32.partialorder %v2486, 0.0
    %vm2490 = vcmp.gt.f32.partialorder %v2487, 0.0
    %v2491 = vmul.f32 %v2485, 0.2
    %v2492 = vmul.f32 %v2486, 0.2
    %v2493 = vmul.f32 %v2487, 0.2
    %v2494 = vsel %vm2488, %v2485, %v2491
    %v2495 = vsel %vm2489, %v2486, %v2492
    %v2496 = vsel %vm2490, %v2487, %v2493
    %v2497 = vsel %vm1045, %v2494, -1e+30
    %v2498 = vsel %vm1046, %v2495, -1e+30
    %v2499 = vsel %vm1047, %v2496, -1e+30
    %v2500 = vsel %vm897, %v2497, -inf
    %2501 = vmax.xlane.f32.xlu0 %v2500
    %v2502 = vpop.xlane.xlu0 %2501
    %v2503 = vsel %vm897, %v2498, -inf
    %2504 = vmax.xlane.f32.xlu0 %v2503
    %v2505 = vpop.xlane.xlu0 %2504
    %v2506 = vsel %vm897, %v2499, -inf
    %2507 = vmax.xlane.f32.xlu0 %v2506
    %v2508 = vpop.xlane.xlu0 %2507
    %v2509 = vsub.f32 %v2497, %v2502
    %v2510 = vsub.f32 %v2498, %v2505
    %v2511 = vsub.f32 %v2499, %v2508
    %v2512 = vmul.f32 %v2509, 1.442695
    %v2513 = vpow.pop %v2512
    %v2514 = vmul.f32 %v2510, 1.442695
    %v2515 = vpow.pop %v2514
    %v2516 = vmul.f32 %v2511, 1.442695
    %v2517 = vpow.pop %v2516
    %v2518 = vsel %vm1045, %v2513, 0.0
    %v2519 = vsel %vm1046, %v2515, 0.0
    %v2520 = vsel %vm1047, %v2517, 0.0
    %v2521 = vsel %vm897, %v2518, 0.0
    %2522 = vadd.xlane.f32.xlu0 %v2521
    %v2523 = vpop.xlane.xlu0 %2522
    %v2524 = vsel %vm897, %v2519, 0.0
    %2525 = vadd.xlane.f32.xlu0 %v2524
    %v2526 = vpop.xlane.xlu0 %2525
    %v2527 = vsel %vm897, %v2520, 0.0
    %2528 = vadd.xlane.f32.xlu0 %v2527
    %v2529 = vpop.xlane.xlu0 %2528
    %v2530 = vmax.f32 %v2523, 1e-09
    %v2531 = vmax.f32 %v2526, 1e-09
    %v2532 = vmax.f32 %v2529, 1e-09
    %v2533 = vrcp.pop %v2530
    %v2534 = vrcp.pop %v2531
    %v2535 = vrcp.pop %v2532
    %v2536 = vmul.f32 %v2518, %v2533
    %v2537 = vmul.f32 %v2519, %v2534
    %v2538 = vmul.f32 %v2520, %v2535
    %2542 = vrot.lane.b32.xlu0 %v2217, 96
    %v2543 = vpop.permute.xlu0 %2542
    %2544 = vrot.lane.b32.xlu0 %v2220, 96
    %v2545 = vpop.permute.xlu0 %2544
    %2546 = vrot.lane.b32.xlu0 %v2223, 96
    %v2547 = vpop.permute.xlu0 %2546
    %v2552 = vsel %vm897, %v2536, 0
    %v2555 = vsel %vm897, %v2537, 0
    %v2558 = vsel %vm897, %v2538, 0
    %2560 = vmatpush.msra.mxu0 0.0
    %2561 = vmatpush.msra.mxu0 0.0
    %2562 = vmatpush.msra.mxu0 0.0
    %2563 = vmatpush.msra.mxu0 0.0
    %2564 = vmatpush.msra.mxu0 0.0
    %2565 = vmatpush.msra.mxu0 0.0
    %2566 = vmatpush.msra.mxu0 0.0
    %2567 = vmatpush.msra.mxu0 0.0
    %2568 = vmatpush.msra.mxu0 0.0
    %2569 = vmatpush.msra.mxu0 0.0
    %2570 = vmatpush.msra.mxu0 0.0
    %2571 = vmatpush.msra.mxu0 0.0
    %2572 = vmatpush.msra.mxu0 0.0
    %2573 = vmatpush.msra.mxu0 %v2547
    %2574 = vmatpush.msra.mxu0 %v2545
    %2575 = vmatpush.msra.mxu0 %v2543
    %2576 = vmatmul.f32.gmra.mxu0 %v2552
    %v2577 = vpop.f32.mrf.mxu0
    %v2578 = vadd.f32 0.0, %v2577
    %2579 = vmatmul.f32.gmra.mxu0 %v2555
    %v2580 = vpop.f32.mrf.mxu0
    %v2581 = vadd.f32 0.0, %v2580
    %2582 = vmatmul.f32.gmra.mxu0 %v2558
    %v2583 = vpop.f32.mrf.mxu0
    %v2584 = vadd.f32 0.0, %v2583
    %2585 = vdwg.mxu0
    %2586 = vrot.lane.b32.xlu0 %v2250, 126
    %v2587 = vpop.permute.xlu0 %2586
    %2588 = vrot.lane.b32.xlu0 %v2253, 126
    %v2589 = vpop.permute.xlu0 %2588
    %2590 = vrot.lane.b32.xlu0 %v2256, 126
    %v2591 = vpop.permute.xlu0 %2590
    %2595 = vxpose.xlu0.b32.start [1/16] %v2587, 128
    %2596 = vxpose.xlu0.b32.cont [2/16] %v2589, 128
    %2597 = vxpose.xlu0.b32.cont [3/16] %v2591, 128
    %2598 = vxpose.xlu0.b32.cont [4/16] 0.0, 128
    %2599 = vxpose.xlu0.b32.cont [5/16] 0.0, 128
    %2600 = vxpose.xlu0.b32.cont [6/16] 0.0, 128
    %2601 = vxpose.xlu0.b32.cont [7/16] 0.0, 128
    %2602 = vxpose.xlu0.b32.cont [8/16] 0.0, 128
    %2603 = vxpose.xlu0.b32.cont [9/16] 0.0, 128
    %2604 = vxpose.xlu0.b32.cont [10/16] 0.0, 128
    %2605 = vxpose.xlu0.b32.cont [11/16] 0.0, 128
    %2606 = vxpose.xlu0.b32.cont [12/16] 0.0, 128
    %2607 = vxpose.xlu0.b32.cont [13/16] 0.0, 128
    %2608 = vxpose.xlu0.b32.cont [14/16] 0.0, 128
    %2609 = vxpose.xlu0.b32.cont [15/16] 0.0, 128
    %2610 = vxpose.xlu0.b32.end [16/16] 0.0, 128
    %v2611 = vpop.trf.xlu0
    %v2612 = vpop.trf.xlu0
    %v2613 = vpop.trf.xlu0
    %v2614 = vpop.trf.xlu0
    %v2615 = vpop.trf.xlu0
    %v2616 = vpop.trf.xlu0
    %v2617 = vpop.trf.xlu0
    %v2618 = vpop.trf.xlu0
    %v2619 = vpop.trf.xlu0
    %v2620 = vpop.trf.xlu0
    %v2621 = vpop.trf.xlu0
    %v2622 = vpop.trf.xlu0
    %v2623 = vpop.trf.xlu0
    %v2624 = vpop.trf.xlu0
    %v2625 = vpop.trf.xlu0
    %v2626 = vpop.trf.xlu0
    %2627 = vset.pattern.permute.xlu0 2
    %2628 = vperm.xlu0 %2627, %v2283
    %v2629 = vpop.permute.xlu0 %2628
    %2631 = vset.pattern.permute.xlu0 2
    %2632 = vperm.xlu0 %2631, %v2286
    %v2633 = vpop.permute.xlu0 %2632
    %2635 = vset.pattern.permute.xlu0 2
    %2636 = vperm.xlu0 %2635, %v2289
    %v2637 = vpop.permute.xlu0 %2636
    %v2639 = vperm.slane %v2611, 0
    %v2640 = vadd.f32 %v2629, %v2639
    %v2641 = vadd.f32 %v2633, %v2639
    %v2642 = vadd.f32 %v2637, %v2639
    %vm2643 = vcmp.gt.f32.partialorder %v2640, 0.0
    %vm2644 = vcmp.gt.f32.partialorder %v2641, 0.0
    %vm2645 = vcmp.gt.f32.partialorder %v2642, 0.0
    %v2646 = vmul.f32 %v2640, 0.2
    %v2647 = vmul.f32 %v2641, 0.2
    %v2648 = vmul.f32 %v2642, 0.2
    %v2649 = vsel %vm2643, %v2640, %v2646
    %v2650 = vsel %vm2644, %v2641, %v2647
    %v2651 = vsel %vm2645, %v2642, %v2648
    %v2652 = vsel %vm1207, %v2649, -1e+30
    %v2653 = vsel %vm1208, %v2650, -1e+30
    %v2654 = vsel %vm1209, %v2651, -1e+30
    %v2655 = vsel %vm897, %v2652, -inf
    %2656 = vmax.xlane.f32.xlu0 %v2655
    %v2657 = vpop.xlane.xlu0 %2656
    %v2658 = vsel %vm897, %v2653, -inf
    %2659 = vmax.xlane.f32.xlu0 %v2658
    %v2660 = vpop.xlane.xlu0 %2659
    %v2661 = vsel %vm897, %v2654, -inf
    %2662 = vmax.xlane.f32.xlu0 %v2661
    %v2663 = vpop.xlane.xlu0 %2662
    %v2664 = vsub.f32 %v2652, %v2657
    %v2665 = vsub.f32 %v2653, %v2660
    %v2666 = vsub.f32 %v2654, %v2663
    %v2667 = vmul.f32 %v2664, 1.442695
    %v2668 = vpow.pop %v2667
    %v2669 = vmul.f32 %v2665, 1.442695
    %v2670 = vpow.pop %v2669
    %v2671 = vmul.f32 %v2666, 1.442695
    %v2672 = vpow.pop %v2671
    %v2673 = vsel %vm1207, %v2668, 0.0
    %v2674 = vsel %vm1208, %v2670, 0.0
    %v2675 = vsel %vm1209, %v2672, 0.0
    %v2676 = vsel %vm897, %v2673, 0.0
    %2677 = vadd.xlane.f32.xlu0 %v2676
    %v2678 = vpop.xlane.xlu0 %2677
    %v2679 = vsel %vm897, %v2674, 0.0
    %2680 = vadd.xlane.f32.xlu0 %v2679
    %v2681 = vpop.xlane.xlu0 %2680
    %v2682 = vsel %vm897, %v2675, 0.0
    %2683 = vadd.xlane.f32.xlu0 %v2682
    %v2684 = vpop.xlane.xlu0 %2683
    %v2685 = vmax.f32 %v2678, 1e-09
    %v2686 = vmax.f32 %v2681, 1e-09
    %v2687 = vmax.f32 %v2684, 1e-09
    %v2688 = vrcp.pop %v2685
    %v2689 = vrcp.pop %v2686
    %v2690 = vrcp.pop %v2687
    %v2691 = vmul.f32 %v2673, %v2688
    %v2692 = vmul.f32 %v2674, %v2689
    %v2693 = vmul.f32 %v2675, %v2690
    %2694 = vrot.lane.b32.xlu0 %v2217, 64
    %v2695 = vpop.permute.xlu0 %2694
    %2696 = vrot.lane.b32.xlu0 %v2220, 64
    %v2697 = vpop.permute.xlu0 %2696
    %2698 = vrot.lane.b32.xlu0 %v2223, 64
    %v2699 = vpop.permute.xlu0 %2698
    %v2704 = vsel %vm897, %v2691, 0
    %v2707 = vsel %vm897, %v2692, 0
    %v2710 = vsel %vm897, %v2693, 0
    %2712 = vmatpush.msra.mxu0 0.0
    %2713 = vmatpush.msra.mxu0 0.0
    %2714 = vmatpush.msra.mxu0 0.0
    %2715 = vmatpush.msra.mxu0 0.0
    %2716 = vmatpush.msra.mxu0 0.0
    %2717 = vmatpush.msra.mxu0 0.0
    %2718 = vmatpush.msra.mxu0 0.0
    %2719 = vmatpush.msra.mxu0 0.0
    %2720 = vmatpush.msra.mxu0 0.0
    %2721 = vmatpush.msra.mxu0 0.0
    %2722 = vmatpush.msra.mxu0 0.0
    %2723 = vmatpush.msra.mxu0 0.0
    %2724 = vmatpush.msra.mxu0 0.0
    %2725 = vmatpush.msra.mxu0 %v2699
    %2726 = vmatpush.msra.mxu0 %v2697
    %2727 = vmatpush.msra.mxu0 %v2695
    %2728 = vmatmul.f32.gmra.mxu0 %v2704
    %v2729 = vpop.f32.mrf.mxu0
    %v2730 = vadd.f32 0.0, %v2729
    %2731 = vmatmul.f32.gmra.mxu0 %v2707
    %v2732 = vpop.f32.mrf.mxu0
    %v2733 = vadd.f32 0.0, %v2732
    %2734 = vmatmul.f32.gmra.mxu0 %v2710
    %v2735 = vpop.f32.mrf.mxu0
    %v2736 = vadd.f32 0.0, %v2735
    %2737 = vdwg.mxu0
    %2738 = vrot.lane.b32.xlu0 %v2250, 125
    %v2739 = vpop.permute.xlu0 %2738
    %2740 = vrot.lane.b32.xlu0 %v2253, 125
    %v2741 = vpop.permute.xlu0 %2740
    %2742 = vrot.lane.b32.xlu0 %v2256, 125
    %v2743 = vpop.permute.xlu0 %2742
    %2747 = vxpose.xlu0.b32.start [1/16] %v2739, 128
    %2748 = vxpose.xlu0.b32.cont [2/16] %v2741, 128
    %2749 = vxpose.xlu0.b32.cont [3/16] %v2743, 128
    %2750 = vxpose.xlu0.b32.cont [4/16] 0.0, 128
    %2751 = vxpose.xlu0.b32.cont [5/16] 0.0, 128
    %2752 = vxpose.xlu0.b32.cont [6/16] 0.0, 128
    %2753 = vxpose.xlu0.b32.cont [7/16] 0.0, 128
    %2754 = vxpose.xlu0.b32.cont [8/16] 0.0, 128
    %2755 = vxpose.xlu0.b32.cont [9/16] 0.0, 128
    %2756 = vxpose.xlu0.b32.cont [10/16] 0.0, 128
    %2757 = vxpose.xlu0.b32.cont [11/16] 0.0, 128
    %2758 = vxpose.xlu0.b32.cont [12/16] 0.0, 128
    %2759 = vxpose.xlu0.b32.cont [13/16] 0.0, 128
    %2760 = vxpose.xlu0.b32.cont [14/16] 0.0, 128
    %2761 = vxpose.xlu0.b32.cont [15/16] 0.0, 128
    %2762 = vxpose.xlu0.b32.end [16/16] 0.0, 128
    %v2763 = vpop.trf.xlu0
    %v2764 = vpop.trf.xlu0
    %v2765 = vpop.trf.xlu0
    %v2766 = vpop.trf.xlu0
    %v2767 = vpop.trf.xlu0
    %v2768 = vpop.trf.xlu0
    %v2769 = vpop.trf.xlu0
    %v2770 = vpop.trf.xlu0
    %v2771 = vpop.trf.xlu0
    %v2772 = vpop.trf.xlu0
    %v2773 = vpop.trf.xlu0
    %v2774 = vpop.trf.xlu0
    %v2775 = vpop.trf.xlu0
    %v2776 = vpop.trf.xlu0
    %v2777 = vpop.trf.xlu0
    %v2778 = vpop.trf.xlu0
    %2779 = vset.pattern.permute.xlu0 3
    %2780 = vperm.xlu0 %2779, %v2283
    %v2781 = vpop.permute.xlu0 %2780
    %2783 = vset.pattern.permute.xlu0 3
    %2784 = vperm.xlu0 %2783, %v2286
    %v2785 = vpop.permute.xlu0 %2784
    %2787 = vset.pattern.permute.xlu0 3
    %2788 = vperm.xlu0 %2787, %v2289
    %v2789 = vpop.permute.xlu0 %2788
    %v2791 = vperm.slane %v2763, 0
    %v2792 = vadd.f32 %v2781, %v2791
    %v2793 = vadd.f32 %v2785, %v2791
    %v2794 = vadd.f32 %v2789, %v2791
    %vm2795 = vcmp.gt.f32.partialorder %v2792, 0.0
    %vm2796 = vcmp.gt.f32.partialorder %v2793, 0.0
    %vm2797 = vcmp.gt.f32.partialorder %v2794, 0.0
    %v2798 = vmul.f32 %v2792, 0.2
    %v2799 = vmul.f32 %v2793, 0.2
    %v2800 = vmul.f32 %v2794, 0.2
    %v2801 = vsel %vm2795, %v2792, %v2798
    %v2802 = vsel %vm2796, %v2793, %v2799
    %v2803 = vsel %vm2797, %v2794, %v2800
    %v2804 = vsel %vm1366, %v2801, -1e+30
    %v2805 = vsel %vm1367, %v2802, -1e+30
    %v2806 = vsel %vm1368, %v2803, -1e+30
    %v2807 = vsel %vm897, %v2804, -inf
    %2808 = vmax.xlane.f32.xlu0 %v2807
    %v2809 = vpop.xlane.xlu0 %2808
    %v2810 = vsel %vm897, %v2805, -inf
    %2811 = vmax.xlane.f32.xlu0 %v2810
    %v2812 = vpop.xlane.xlu0 %2811
    %v2813 = vsel %vm897, %v2806, -inf
    %2814 = vmax.xlane.f32.xlu0 %v2813
    %v2815 = vpop.xlane.xlu0 %2814
    %v2816 = vsub.f32 %v2804, %v2809
    %v2817 = vsub.f32 %v2805, %v2812
    %v2818 = vsub.f32 %v2806, %v2815
    %v2819 = vmul.f32 %v2816, 1.442695
    %v2820 = vpow.pop %v2819
    %v2821 = vmul.f32 %v2817, 1.442695
    %v2822 = vpow.pop %v2821
    %v2823 = vmul.f32 %v2818, 1.442695
    %v2824 = vpow.pop %v2823
    %v2825 = vsel %vm1366, %v2820, 0.0
    %v2826 = vsel %vm1367, %v2822, 0.0
    %v2827 = vsel %vm1368, %v2824, 0.0
    %v2828 = vsel %vm897, %v2825, 0.0
    %2829 = vadd.xlane.f32.xlu0 %v2828
    %v2830 = vpop.xlane.xlu0 %2829
    %v2831 = vsel %vm897, %v2826, 0.0
    %2832 = vadd.xlane.f32.xlu0 %v2831
    %v2833 = vpop.xlane.xlu0 %2832
    %v2834 = vsel %vm897, %v2827, 0.0
    %2835 = vadd.xlane.f32.xlu0 %v2834
    %v2836 = vpop.xlane.xlu0 %2835
    %v2837 = vmax.f32 %v2830, 1e-09
    %v2838 = vmax.f32 %v2833, 1e-09
    %v2839 = vmax.f32 %v2836, 1e-09
    %v2840 = vrcp.pop %v2837
    %v2841 = vrcp.pop %v2838
    %v2842 = vrcp.pop %v2839
    %v2843 = vmul.f32 %v2825, %v2840
    %v2844 = vmul.f32 %v2826, %v2841
    %v2845 = vmul.f32 %v2827, %v2842
    %2846 = vrot.lane.b32.xlu0 %v2217, 32
    %v2847 = vpop.permute.xlu0 %2846
    %2848 = vrot.lane.b32.xlu0 %v2220, 32
    %v2849 = vpop.permute.xlu0 %2848
    %2850 = vrot.lane.b32.xlu0 %v2223, 32
    %v2851 = vpop.permute.xlu0 %2850
    %v2856 = vsel %vm897, %v2843, 0
    %v2859 = vsel %vm897, %v2844, 0
    %v2862 = vsel %vm897, %v2845, 0
    %2864 = vmatpush.msra.mxu0 0.0
    %2865 = vmatpush.msra.mxu0 0.0
    %2866 = vmatpush.msra.mxu0 0.0
    %2867 = vmatpush.msra.mxu0 0.0
    %2868 = vmatpush.msra.mxu0 0.0
    %2869 = vmatpush.msra.mxu0 0.0
    %2870 = vmatpush.msra.mxu0 0.0
    %2871 = vmatpush.msra.mxu0 0.0
    %2872 = vmatpush.msra.mxu0 0.0
    %2873 = vmatpush.msra.mxu0 0.0
    %2874 = vmatpush.msra.mxu0 0.0
    %2875 = vmatpush.msra.mxu0 0.0
    %2876 = vmatpush.msra.mxu0 0.0
    %2877 = vmatpush.msra.mxu0 %v2851
    %2878 = vmatpush.msra.mxu0 %v2849
    %2879 = vmatpush.msra.mxu0 %v2847
    %2880 = vmatmul.f32.gmra.mxu0 %v2856
    %v2881 = vpop.f32.mrf.mxu0
    %v2882 = vadd.f32 0.0, %v2881
    %2883 = vmatmul.f32.gmra.mxu0 %v2859
    %v2884 = vpop.f32.mrf.mxu0
    %v2885 = vadd.f32 0.0, %v2884
    %2886 = vmatmul.f32.gmra.mxu0 %v2862
    %v2887 = vpop.f32.mrf.mxu0
    %v2888 = vadd.f32 0.0, %v2887
    %2889 = vdwg.mxu0
    %2893 = vrot.lane.b32.xlu0 %v2578, 32
    %v2894 = vpop.permute.xlu0 %2893
    %2895 = vrot.lane.b32.xlu0 %v2581, 32
    %v2896 = vpop.permute.xlu0 %2895
    %2897 = vrot.lane.b32.xlu0 %v2584, 32
    %v2898 = vpop.permute.xlu0 %2897
    %2905 = vrot.lane.b32.xlu0 %v2730, 64
    %v2906 = vpop.permute.xlu0 %2905
    %2907 = vrot.lane.b32.xlu0 %v2733, 64
    %v2908 = vpop.permute.xlu0 %2907
    %2909 = vrot.lane.b32.xlu0 %v2736, 64
    %v2910 = vpop.permute.xlu0 %2909
    %2917 = vrot.lane.b32.xlu0 %v2882, 96
    %v2918 = vpop.permute.xlu0 %2917
    %2919 = vrot.lane.b32.xlu0 %v2885, 96
    %v2920 = vpop.permute.xlu0 %2919
    %2921 = vrot.lane.b32.xlu0 %v2888, 96
    %v2922 = vpop.permute.xlu0 %2921
    %v2926 = vsel %vm668, %v2420, %v2894
    %v2927 = vsel %vm668, %v2423, %v2896
    %v2928 = vsel %vm668, %v2426, %v2898
    %v2929 = vsel %vm684, %v2926, %v2906
    %v2930 = vsel %vm684, %v2927, %v2908
    %v2931 = vsel %vm684, %v2928, %v2910
    %v2932 = vsel %vm1497, %v2929, %v2918
    %v2933 = vsel %vm1497, %v2930, %v2920
    %v2934 = vsel %vm1497, %v2931, %v2922
    %v2935 = vld [vmem:[%s55] sm:$0xff]
    %v2936 = vld [vmem:[%s55 + $0x8] sm:$0xff]
    %v2937 = vld [vmem:[%s55 + $0x10] sm:$0xff]
    %v2938 = vld [vmem:[%s55 + $0x18] sm:$0xff]
    %v2939 = vld [vmem:[%s55 + $0x20] sm:$0xff]
    %v2940 = vld [vmem:[%s55 + $0x28] sm:$0xff]
    %v2941 = vld [vmem:[%s55 + $0x30] sm:$0xff]
    %v2942 = vld [vmem:[%s55 + $0x38] sm:$0xff]
    %v2943 = vld [vmem:[%s55 + $0x40] sm:$0xff]
    %v2944 = vld [vmem:[%s55 + $0x48] sm:$0xff]
    %v2945 = vld [vmem:[%s55 + $0x50] sm:$0xff]
    %v2946 = vld [vmem:[%s55 + $0x58] sm:$0xff]
    %v2947 = vld [vmem:[%s55 + $0x60] sm:$0xff]
    %v2948 = vld [vmem:[%s55 + $0x68] sm:$0xff]
    %v2949 = vld [vmem:[%s55 + $0x70] sm:$0xff]
    %v2950 = vld [vmem:[%s55 + $0x78] sm:$0xff]
    %2951 = vmatpush.msra.mxu0 %v2950
    %2952 = vmatpush.msra.mxu0 %v2949
    %2953 = vmatpush.msra.mxu0 %v2948
    %2954 = vmatpush.msra.mxu0 %v2947
    %2955 = vmatpush.msra.mxu0 %v2946
    %2956 = vmatpush.msra.mxu0 %v2945
    %2957 = vmatpush.msra.mxu0 %v2944
    %2958 = vmatpush.msra.mxu0 %v2943
    %2959 = vmatpush.msra.mxu0 %v2942
    %2960 = vmatpush.msra.mxu0 %v2941
    %2961 = vmatpush.msra.mxu0 %v2940
    %2962 = vmatpush.msra.mxu0 %v2939
    %2963 = vmatpush.msra.mxu0 %v2938
    %2964 = vmatpush.msra.mxu0 %v2937
    %2965 = vmatpush.msra.mxu0 %v2936
    %2966 = vmatpush.msra.mxu0 %v2935
    %2967 = vmatmul.f32.gmra.mxu0 %v2932
    %v2968 = vpop.f32.mrf.mxu0
    %v2969 = vadd.f32 0.0, %v2968
    %2970 = vmatmul.f32.gmra.mxu0 %v2933
    %v2971 = vpop.f32.mrf.mxu0
    %v2972 = vadd.f32 0.0, %v2971
    %2973 = vmatmul.f32.gmra.mxu0 %v2934
    %v2974 = vpop.f32.mrf.mxu0
    %v2975 = vadd.f32 0.0, %v2974
    %2976 = vdwg.mxu0
    %v2977 = vld [vmem:[#allocation18] sm:$0xff]
    %v2978 = vld [vmem:[#allocation18 + $0x8] sm:$0xff]
    %v2979 = vld [vmem:[#allocation18 + $0x10] sm:$0xff]
    %v2980 = vld [vmem:[#allocation18 + $0x18] sm:$0xff]
    %2981 = vmatpush.msra.mxu0 0.0
    %2982 = vmatpush.msra.mxu0 0.0
    %2983 = vmatpush.msra.mxu0 0.0
    %2984 = vmatpush.msra.mxu0 0.0
    %2985 = vmatpush.msra.mxu0 0.0
    %2986 = vmatpush.msra.mxu0 0.0
    %2987 = vmatpush.msra.mxu0 0.0
    %2988 = vmatpush.msra.mxu0 0.0
    %2989 = vmatpush.msra.mxu0 0.0
    %2990 = vmatpush.msra.mxu0 0.0
    %2991 = vmatpush.msra.mxu0 0.0
    %2992 = vmatpush.msra.mxu0 0.0
    %2993 = vmatpush.msra.mxu0 %v2980
    %2994 = vmatpush.msra.mxu0 %v2979
    %2995 = vmatpush.msra.mxu0 %v2978
    %2996 = vmatpush.msra.mxu0 %v2977
    %2997 = vmatmul.f32.gmra.mxu0 %v1547
    %v2998 = vpop.f32.mrf.mxu0
    %v2999 = vadd.f32 0.0, %v2998
    %3000 = vmatmul.f32.gmra.mxu0 %v1549
    %v3001 = vpop.f32.mrf.mxu0
    %v3002 = vadd.f32 0.0, %v3001
    %3003 = vmatmul.f32.gmra.mxu0 %v1551
    %v3004 = vpop.f32.mrf.mxu0
    %v3005 = vadd.f32 0.0, %v3004
    %3006 = vdwg.mxu0
    %v3007 = vld [vmem:[#allocation17] sm:$0xff]
    %v3008 = vld [vmem:[#allocation17 + $0x8] sm:$0xff]
    %v3009 = vld [vmem:[#allocation17 + $0x10] sm:$0xff]
    %v3010 = vld [vmem:[#allocation17 + $0x18] sm:$0xff]
    %v3012 = vsel %vm668, %v2052, 0
    %3014 = vmatpush.msra.mxu0 0.0
    %3015 = vmatpush.msra.mxu0 0.0
    %3016 = vmatpush.msra.mxu0 0.0
    %3017 = vmatpush.msra.mxu0 0.0
    %3018 = vmatpush.msra.mxu0 0.0
    %3019 = vmatpush.msra.mxu0 0.0
    %3020 = vmatpush.msra.mxu0 0.0
    %3021 = vmatpush.msra.mxu0 0.0
    %3022 = vmatpush.msra.mxu0 0.0
    %3023 = vmatpush.msra.mxu0 0.0
    %3024 = vmatpush.msra.mxu0 0.0
    %3025 = vmatpush.msra.mxu0 0.0
    %3026 = vmatpush.msra.mxu0 %v3010
    %3027 = vmatpush.msra.mxu0 %v3009
    %3028 = vmatpush.msra.mxu0 %v3008
    %3029 = vmatpush.msra.mxu0 %v3007
    %3030 = vmatmul.f32.gmra.mxu0 %v3012
    %v3031 = vpop.f32.mrf.mxu0
    %v3032 = vadd.f32 0.0, %v3031
    %3033 = vdwg.mxu0
    %v3034 = vadd.f32 %v2969, %v2999
    %v3035 = vadd.f32 %v2972, %v3002
    %v3036 = vadd.f32 %v2975, %v3005
    %v3037 = vld [vmem:[#allocation20] sm:$0x1]
    %v3039 = vperm.slane %v3037, 0
    %v3041 = vmul.f32 %v2969, %v3039
    %v3042 = vmul.f32 %v2972, %v3039
    %v3043 = vmul.f32 %v2975, %v3039
    %v3044 = vld [vmem:[#allocation21] sm:$0x1]
    %v3046 = vperm.slane %v3044, 0
    %v3048 = vmul.f32 %v2999, %v3046
    %v3049 = vmul.f32 %v3002, %v3046
    %v3050 = vmul.f32 %v3005, %v3046
    %v3051 = vadd.f32 %v3041, %v3048
    %v3052 = vadd.f32 %v3042, %v3049
    %v3053 = vadd.f32 %v3043, %v3050
    %3054 = vmatpush.msra.mxu0 %v568
    %3055 = vmatpush.msra.mxu0 %v567
    %3056 = vmatpush.msra.mxu0 %v566
    %3057 = vmatpush.msra.mxu0 %v565
    %3058 = vmatpush.msra.mxu0 %v564
    %3059 = vmatpush.msra.mxu0 %v563
    %3060 = vmatpush.msra.mxu0 %v562
    %3061 = vmatpush.msra.mxu0 %v561
    %3062 = vmatpush.msra.mxu0 %v560
    %3063 = vmatpush.msra.mxu0 %v559
    %3064 = vmatpush.msra.mxu0 %v558
    %3065 = vmatpush.msra.mxu0 %v557
    %3066 = vmatpush.msra.mxu0 %v556
    %3067 = vmatpush.msra.mxu0 %v555
    %3068 = vmatpush.msra.mxu0 %v554
    %3069 = vmatpush.msra.mxu0 %v553
    %3070 = vmatmul.f32.gmra.mxu0 %v3051
    %v3071 = vpop.f32.mrf.mxu0
    %v3072 = vadd.f32 0.0, %v3071
    %3073 = vmatmul.f32.gmra.mxu0 %v3052
    %v3074 = vpop.f32.mrf.mxu0
    %v3075 = vadd.f32 0.0, %v3074
    %3076 = vmatmul.f32.gmra.mxu0 %v3053
    %v3077 = vpop.f32.mrf.mxu0
    %v3078 = vadd.f32 0.0, %v3077
    %3079 = vdwg.mxu0
    %v3080 = vld [vmem:[#allocation23] sm:$0x1]
    %v3082 = vperm.slane %v3080, 0
    %v3084 = vmul.f32 %v3032, %v3082
    %3085 = vmatpush.msra.mxu0 %v568
    %3086 = vmatpush.msra.mxu0 %v567
    %3087 = vmatpush.msra.mxu0 %v566
    %3088 = vmatpush.msra.mxu0 %v565
    %3089 = vmatpush.msra.mxu0 %v564
    %3090 = vmatpush.msra.mxu0 %v563
    %3091 = vmatpush.msra.mxu0 %v562
    %3092 = vmatpush.msra.mxu0 %v561
    %3093 = vmatpush.msra.mxu0 %v560
    %3094 = vmatpush.msra.mxu0 %v559
    %3095 = vmatpush.msra.mxu0 %v558
    %3096 = vmatpush.msra.mxu0 %v557
    %3097 = vmatpush.msra.mxu0 %v556
    %3098 = vmatpush.msra.mxu0 %v555
    %3099 = vmatpush.msra.mxu0 %v554
    %3100 = vmatpush.msra.mxu0 %v553
    %3101 = vmatmul.f32.gmra.mxu0 %v3084
    %v3102 = vpop.f32.mrf.mxu0
    %v3103 = vadd.f32 0.0, %v3102
    %3104 = vdwg.mxu0
    %3105 = vxpose.xlu0.b32.start [1/16] %v3072, 128
    %3106 = vxpose.xlu0.b32.cont [2/16] %v3075, 128
    %3107 = vxpose.xlu0.b32.cont [3/16] %v3078, 128
    %3108 = vxpose.xlu0.b32.cont [4/16] 0.0, 128
    %3109 = vxpose.xlu0.b32.cont [5/16] 0.0, 128
    %3110 = vxpose.xlu0.b32.cont [6/16] 0.0, 128
    %3111 = vxpose.xlu0.b32.cont [7/16] 0.0, 128
    %3112 = vxpose.xlu0.b32.cont [8/16] 0.0, 128
    %3113 = vxpose.xlu0.b32.cont [9/16] 0.0, 128
    %3114 = vxpose.xlu0.b32.cont [10/16] 0.0, 128
    %3115 = vxpose.xlu0.b32.cont [11/16] 0.0, 128
    %3116 = vxpose.xlu0.b32.cont [12/16] 0.0, 128
    %3117 = vxpose.xlu0.b32.cont [13/16] 0.0, 128
    %3118 = vxpose.xlu0.b32.cont [14/16] 0.0, 128
    %3119 = vxpose.xlu0.b32.cont [15/16] 0.0, 128
    %3120 = vxpose.xlu0.b32.end [16/16] 0.0, 128
    %v3121 = vpop.trf.xlu0
    %v3122 = vpop.trf.xlu0
    %v3123 = vpop.trf.xlu0
    %v3124 = vpop.trf.xlu0
    %v3125 = vpop.trf.xlu0
    %v3126 = vpop.trf.xlu0
    %v3127 = vpop.trf.xlu0
    %v3128 = vpop.trf.xlu0
    %v3129 = vpop.trf.xlu0
    %v3130 = vpop.trf.xlu0
    %v3131 = vpop.trf.xlu0
    %v3132 = vpop.trf.xlu0
    %v3133 = vpop.trf.xlu0
    %v3134 = vpop.trf.xlu0
    %v3135 = vpop.trf.xlu0
    %v3136 = vpop.trf.xlu0
    %3138 = vset.pattern.permute.xlu0 0
    %3139 = vperm.xlu0 %3138, %v3103
    %v3140 = vpop.permute.xlu0 %3139
    %v3142 = vperm.slane %v3121, 0
    %v3143 = vadd.f32 %v3140, %v3142
    %vm3144 = vcmp.gt.f32.partialorder %v3143, 0.0
    %v3145 = vmul.f32 %v3143, 0.2
    %v3146 = vsel %vm3144, %v3143, %v3145
    %v3147 = vsel %vm1717, %v3146, -1e+30
    %v3148 = vsel %vm897, %v3147, -inf
    %3149 = vmax.xlane.f32.xlu0 %v3148
    %v3150 = vpop.xlane.xlu0 %3149
    %v3151 = vsub.f32 %v3147, %v3150
    %v3152 = vmul.f32 %v3151, 1.442695
    %v3153 = vpow.pop %v3152
    %v3154 = vsel %vm1717, %v3153, 0.0
    %v3155 = vsel %vm897, %v3154, 0.0
    %3156 = vadd.xlane.f32.xlu0 %v3155
    %v3157 = vpop.xlane.xlu0 %3156
    %v3158 = vmax.f32 %v3157, 1e-09
    %v3159 = vrcp.pop %v3158
    %v3160 = vmul.f32 %v3154, %v3159
    %3164 = vrot.lane.b32.xlu0 %v3072, 127
    %v3165 = vpop.permute.xlu0 %3164
    %3166 = vrot.lane.b32.xlu0 %v3075, 127
    %v3167 = vpop.permute.xlu0 %3166
    %3168 = vrot.lane.b32.xlu0 %v3078, 127
    %v3169 = vpop.permute.xlu0 %3168
    %3173 = vxpose.xlu0.b32.start [1/16] %v3165, 128
    %3174 = vxpose.xlu0.b32.cont [2/16] %v3167, 128
    %3175 = vxpose.xlu0.b32.cont [3/16] %v3169, 128
    %3176 = vxpose.xlu0.b32.cont [4/16] 0.0, 128
    %3177 = vxpose.xlu0.b32.cont [5/16] 0.0, 128
    %3178 = vxpose.xlu0.b32.cont [6/16] 0.0, 128
    %3179 = vxpose.xlu0.b32.cont [7/16] 0.0, 128
    %3180 = vxpose.xlu0.b32.cont [8/16] 0.0, 128
    %3181 = vxpose.xlu0.b32.cont [9/16] 0.0, 128
    %3182 = vxpose.xlu0.b32.cont [10/16] 0.0, 128
    %3183 = vxpose.xlu0.b32.cont [11/16] 0.0, 128
    %3184 = vxpose.xlu0.b32.cont [12/16] 0.0, 128
    %3185 = vxpose.xlu0.b32.cont [13/16] 0.0, 128
    %3186 = vxpose.xlu0.b32.cont [14/16] 0.0, 128
    %3187 = vxpose.xlu0.b32.cont [15/16] 0.0, 128
    %3188 = vxpose.xlu0.b32.end [16/16] 0.0, 128
    %v3189 = vpop.trf.xlu0
    %v3190 = vpop.trf.xlu0
    %v3191 = vpop.trf.xlu0
    %v3192 = vpop.trf.xlu0
    %v3193 = vpop.trf.xlu0
    %v3194 = vpop.trf.xlu0
    %v3195 = vpop.trf.xlu0
    %v3196 = vpop.trf.xlu0
    %v3197 = vpop.trf.xlu0
    %v3198 = vpop.trf.xlu0
    %v3199 = vpop.trf.xlu0
    %v3200 = vpop.trf.xlu0
    %v3201 = vpop.trf.xlu0
    %v3202 = vpop.trf.xlu0
    %v3203 = vpop.trf.xlu0
    %v3204 = vpop.trf.xlu0
    %3205 = vset.pattern.permute.xlu0 1
    %3206 = vperm.xlu0 %3205, %v3103
    %v3207 = vpop.permute.xlu0 %3206
    %v3209 = vperm.slane %v3189, 0
    %v3210 = vadd.f32 %v3207, %v3209
    %vm3211 = vcmp.gt.f32.partialorder %v3210, 0.0
    %v3212 = vmul.f32 %v3210, 0.2
    %v3213 = vsel %vm3211, %v3210, %v3212
    %v3214 = vsel %vm1717, %v3213, -1e+30
    %v3215 = vsel %vm897, %v3214, -inf
    %3216 = vmax.xlane.f32.xlu0 %v3215
    %v3217 = vpop.xlane.xlu0 %3216
    %v3218 = vsub.f32 %v3214, %v3217
    %v3219 = vmul.f32 %v3218, 1.442695
    %v3220 = vpow.pop %v3219
    %v3221 = vsel %vm1717, %v3220, 0.0
    %v3222 = vsel %vm897, %v3221, 0.0
    %3223 = vadd.xlane.f32.xlu0 %v3222
    %v3224 = vpop.xlane.xlu0 %3223
    %v3225 = vmax.f32 %v3224, 1e-09
    %v3226 = vrcp.pop %v3225
    %v3227 = vmul.f32 %v3221, %v3226
    %3231 = vrot.lane.b32.xlu0 %v3034, 96
    %v3232 = vpop.permute.xlu0 %3231
    %3233 = vrot.lane.b32.xlu0 %v3035, 96
    %v3234 = vpop.permute.xlu0 %3233
    %3235 = vrot.lane.b32.xlu0 %v3036, 96
    %v3236 = vpop.permute.xlu0 %3235
    %v3241 = vsel %vm897, %v3227, 0
    %3243 = vmatpush.msra.mxu0 0.0
    %3244 = vmatpush.msra.mxu0 0.0
    %3245 = vmatpush.msra.mxu0 0.0
    %3246 = vmatpush.msra.mxu0 0.0
    %3247 = vmatpush.msra.mxu0 0.0
    %3248 = vmatpush.msra.mxu0 0.0
    %3249 = vmatpush.msra.mxu0 0.0
    %3250 = vmatpush.msra.mxu0 0.0
    %3251 = vmatpush.msra.mxu0 0.0
    %3252 = vmatpush.msra.mxu0 0.0
    %3253 = vmatpush.msra.mxu0 0.0
    %3254 = vmatpush.msra.mxu0 0.0
    %3255 = vmatpush.msra.mxu0 0.0
    %3256 = vmatpush.msra.mxu0 %v3236
    %3257 = vmatpush.msra.mxu0 %v3234
    %3258 = vmatpush.msra.mxu0 %v3232
    %3259 = vmatmul.f32.gmra.mxu0 %v3241
    %v3260 = vpop.f32.mrf.mxu0
    %v3261 = vadd.f32 0.0, %v3260
    %3262 = vdwg.mxu0
    %v3264 = vsel %vm897, %v3160, 0
    %3266 = vmatpush.msra.mxu0 0.0
    %3267 = vmatpush.msra.mxu0 0.0
    %3268 = vmatpush.msra.mxu0 0.0
    %3269 = vmatpush.msra.mxu0 0.0
    %3270 = vmatpush.msra.mxu0 0.0
    %3271 = vmatpush.msra.mxu0 0.0
    %3272 = vmatpush.msra.mxu0 0.0
    %3273 = vmatpush.msra.mxu0 0.0
    %3274 = vmatpush.msra.mxu0 0.0
    %3275 = vmatpush.msra.mxu0 0.0
    %3276 = vmatpush.msra.mxu0 0.0
    %3277 = vmatpush.msra.mxu0 0.0
    %3278 = vmatpush.msra.mxu0 0.0
    %3279 = vmatpush.msra.mxu0 %v3036
    %3280 = vmatpush.msra.mxu0 %v3035
    %3281 = vmatpush.msra.mxu0 %v3034
    %3282 = vmatmul.f32.gmra.mxu0 %v3264
    %v3283 = vpop.f32.mrf.mxu0
    %v3284 = vadd.f32 %v3261, %v3283
    %3285 = vdwg.mxu0
    %3286 = vrot.lane.b32.xlu0 %v3072, 126
    %v3287 = vpop.permute.xlu0 %3286
    %3288 = vrot.lane.b32.xlu0 %v3075, 126
    %v3289 = vpop.permute.xlu0 %3288
    %3290 = vrot.lane.b32.xlu0 %v3078, 126
    %v3291 = vpop.permute.xlu0 %3290
    %3295 = vxpose.xlu0.b32.start [1/16] %v3287, 128
    %3296 = vxpose.xlu0.b32.cont [2/16] %v3289, 128
    %3297 = vxpose.xlu0.b32.cont [3/16] %v3291, 128
    %3298 = vxpose.xlu0.b32.cont [4/16] 0.0, 128
    %3299 = vxpose.xlu0.b32.cont [5/16] 0.0, 128
    %3300 = vxpose.xlu0.b32.cont [6/16] 0.0, 128
    %3301 = vxpose.xlu0.b32.cont [7/16] 0.0, 128
    %3302 = vxpose.xlu0.b32.cont [8/16] 0.0, 128
    %3303 = vxpose.xlu0.b32.cont [9/16] 0.0, 128
    %3304 = vxpose.xlu0.b32.cont [10/16] 0.0, 128
    %3305 = vxpose.xlu0.b32.cont [11/16] 0.0, 128
    %3306 = vxpose.xlu0.b32.cont [12/16] 0.0, 128
    %3307 = vxpose.xlu0.b32.cont [13/16] 0.0, 128
    %3308 = vxpose.xlu0.b32.cont [14/16] 0.0, 128
    %3309 = vxpose.xlu0.b32.cont [15/16] 0.0, 128
    %3310 = vxpose.xlu0.b32.end [16/16] 0.0, 128
    %v3311 = vpop.trf.xlu0
    %v3312 = vpop.trf.xlu0
    %v3313 = vpop.trf.xlu0
    %v3314 = vpop.trf.xlu0
    %v3315 = vpop.trf.xlu0
    %v3316 = vpop.trf.xlu0
    %v3317 = vpop.trf.xlu0
    %v3318 = vpop.trf.xlu0
    %v3319 = vpop.trf.xlu0
    %v3320 = vpop.trf.xlu0
    %v3321 = vpop.trf.xlu0
    %v3322 = vpop.trf.xlu0
    %v3323 = vpop.trf.xlu0
    %v3324 = vpop.trf.xlu0
    %v3325 = vpop.trf.xlu0
    %v3326 = vpop.trf.xlu0
    %3327 = vset.pattern.permute.xlu0 2
    %3328 = vperm.xlu0 %3327, %v3103
    %v3329 = vpop.permute.xlu0 %3328
    %v3331 = vperm.slane %v3311, 0
    %v3332 = vadd.f32 %v3329, %v3331
    %vm3333 = vcmp.gt.f32.partialorder %v3332, 0.0
    %v3334 = vmul.f32 %v3332, 0.2
    %v3335 = vsel %vm3333, %v3332, %v3334
    %v3336 = vsel %vm1717, %v3335, -1e+30
    %v3337 = vsel %vm897, %v3336, -inf
    %3338 = vmax.xlane.f32.xlu0 %v3337
    %v3339 = vpop.xlane.xlu0 %3338
    %v3340 = vsub.f32 %v3336, %v3339
    %v3341 = vmul.f32 %v3340, 1.442695
    %v3342 = vpow.pop %v3341
    %v3343 = vsel %vm1717, %v3342, 0.0
    %v3344 = vsel %vm897, %v3343, 0.0
    %3345 = vadd.xlane.f32.xlu0 %v3344
    %v3346 = vpop.xlane.xlu0 %3345
    %v3347 = vmax.f32 %v3346, 1e-09
    %v3348 = vrcp.pop %v3347
    %v3349 = vmul.f32 %v3343, %v3348
    %3350 = vrot.lane.b32.xlu0 %v3034, 64
    %v3351 = vpop.permute.xlu0 %3350
    %3352 = vrot.lane.b32.xlu0 %v3035, 64
    %v3353 = vpop.permute.xlu0 %3352
    %3354 = vrot.lane.b32.xlu0 %v3036, 64
    %v3355 = vpop.permute.xlu0 %3354
    %v3360 = vsel %vm897, %v3349, 0
    %3362 = vmatpush.msra.mxu0 0.0
    %3363 = vmatpush.msra.mxu0 0.0
    %3364 = vmatpush.msra.mxu0 0.0
    %3365 = vmatpush.msra.mxu0 0.0
    %3366 = vmatpush.msra.mxu0 0.0
    %3367 = vmatpush.msra.mxu0 0.0
    %3368 = vmatpush.msra.mxu0 0.0
    %3369 = vmatpush.msra.mxu0 0.0
    %3370 = vmatpush.msra.mxu0 0.0
    %3371 = vmatpush.msra.mxu0 0.0
    %3372 = vmatpush.msra.mxu0 0.0
    %3373 = vmatpush.msra.mxu0 0.0
    %3374 = vmatpush.msra.mxu0 0.0
    %3375 = vmatpush.msra.mxu0 %v3355
    %3376 = vmatpush.msra.mxu0 %v3353
    %3377 = vmatpush.msra.mxu0 %v3351
    %3378 = vmatmul.f32.gmra.mxu0 %v3360
    %v3379 = vpop.f32.mrf.mxu0
    %v3380 = vadd.f32 0.0, %v3379
    %3381 = vdwg.mxu0
    %v3382 = vadd.f32 %v3284, %v3380
    %3383 = vrot.lane.b32.xlu0 %v3072, 125
    %v3384 = vpop.permute.xlu0 %3383
    %3385 = vrot.lane.b32.xlu0 %v3075, 125
    %v3386 = vpop.permute.xlu0 %3385
    %3387 = vrot.lane.b32.xlu0 %v3078, 125
    %v3388 = vpop.permute.xlu0 %3387
    %3392 = vxpose.xlu0.b32.start [1/16] %v3384, 128
    %3393 = vxpose.xlu0.b32.cont [2/16] %v3386, 128
    %3394 = vxpose.xlu0.b32.cont [3/16] %v3388, 128
    %3395 = vxpose.xlu0.b32.cont [4/16] 0.0, 128
    %3396 = vxpose.xlu0.b32.cont [5/16] 0.0, 128
    %3397 = vxpose.xlu0.b32.cont [6/16] 0.0, 128
    %3398 = vxpose.xlu0.b32.cont [7/16] 0.0, 128
    %3399 = vxpose.xlu0.b32.cont [8/16] 0.0, 128
    %3400 = vxpose.xlu0.b32.cont [9/16] 0.0, 128
    %3401 = vxpose.xlu0.b32.cont [10/16] 0.0, 128
    %3402 = vxpose.xlu0.b32.cont [11/16] 0.0, 128
    %3403 = vxpose.xlu0.b32.cont [12/16] 0.0, 128
    %3404 = vxpose.xlu0.b32.cont [13/16] 0.0, 128
    %3405 = vxpose.xlu0.b32.cont [14/16] 0.0, 128
    %3406 = vxpose.xlu0.b32.cont [15/16] 0.0, 128
    %3407 = vxpose.xlu0.b32.end [16/16] 0.0, 128
    %v3408 = vpop.trf.xlu0
    %v3409 = vpop.trf.xlu0
    %v3410 = vpop.trf.xlu0
    %v3411 = vpop.trf.xlu0
    %v3412 = vpop.trf.xlu0
    %v3413 = vpop.trf.xlu0
    %v3414 = vpop.trf.xlu0
    %v3415 = vpop.trf.xlu0
    %v3416 = vpop.trf.xlu0
    %v3417 = vpop.trf.xlu0
    %v3418 = vpop.trf.xlu0
    %v3419 = vpop.trf.xlu0
    %v3420 = vpop.trf.xlu0
    %v3421 = vpop.trf.xlu0
    %v3422 = vpop.trf.xlu0
    %v3423 = vpop.trf.xlu0
    %3424 = vset.pattern.permute.xlu0 3
    %3425 = vperm.xlu0 %3424, %v3103
    %v3426 = vpop.permute.xlu0 %3425
    %v3428 = vperm.slane %v3408, 0
    %v3429 = vadd.f32 %v3426, %v3428
    %vm3430 = vcmp.gt.f32.partialorder %v3429, 0.0
    %v3431 = vmul.f32 %v3429, 0.2
    %v3432 = vsel %vm3430, %v3429, %v3431
    %v3433 = vsel %vm1717, %v3432, -1e+30
    %v3434 = vsel %vm897, %v3433, -inf
    %3435 = vmax.xlane.f32.xlu0 %v3434
    %v3436 = vpop.xlane.xlu0 %3435
    %v3437 = vsub.f32 %v3433, %v3436
    %v3438 = vmul.f32 %v3437, 1.442695
    %v3439 = vpow.pop %v3438
    %v3440 = vsel %vm1717, %v3439, 0.0
    %v3441 = vsel %vm897, %v3440, 0.0
    %3442 = vadd.xlane.f32.xlu0 %v3441
    %v3443 = vpop.xlane.xlu0 %3442
    %v3444 = vmax.f32 %v3443, 1e-09
    %v3445 = vrcp.pop %v3444
    %v3446 = vmul.f32 %v3440, %v3445
    %3447 = vrot.lane.b32.xlu0 %v3034, 32
    %v3448 = vpop.permute.xlu0 %3447
    %3449 = vrot.lane.b32.xlu0 %v3035, 32
    %v3450 = vpop.permute.xlu0 %3449
    %3451 = vrot.lane.b32.xlu0 %v3036, 32
    %v3452 = vpop.permute.xlu0 %3451
    %v3457 = vsel %vm897, %v3446, 0
    %3459 = vmatpush.msra.mxu0 0.0
    %3460 = vmatpush.msra.mxu0 0.0
    %3461 = vmatpush.msra.mxu0 0.0
    %3462 = vmatpush.msra.mxu0 0.0
    %3463 = vmatpush.msra.mxu0 0.0
    %3464 = vmatpush.msra.mxu0 0.0
    %3465 = vmatpush.msra.mxu0 0.0
    %3466 = vmatpush.msra.mxu0 0.0
    %3467 = vmatpush.msra.mxu0 0.0
    %3468 = vmatpush.msra.mxu0 0.0
    %3469 = vmatpush.msra.mxu0 0.0
    %3470 = vmatpush.msra.mxu0 0.0
    %3471 = vmatpush.msra.mxu0 0.0
    %3472 = vmatpush.msra.mxu0 %v3452
    %3473 = vmatpush.msra.mxu0 %v3450
    %3474 = vmatpush.msra.mxu0 %v3448
    %3475 = vmatmul.f32.gmra.mxu0 %v3457
    %v3476 = vpop.f32.mrf.mxu0
    %v3477 = vadd.f32 0.0, %v3476
    %3478 = vdwg.mxu0
    %v3479 = vadd.f32 %v3382, %v3477
    %v3480 = vmul.f32 %v3479, 0.25
    %v3481 = vmax.f32 %v3480, 0.0
    %v3482 = vld [vmem:[%s13] sm:$0xff]
    %v3484 = vsel %vm897, %v3482, 0
    %3486 = vmatpush.msra.mxu0 0.0
    %3487 = vmatpush.msra.mxu0 0.0
    %3488 = vmatpush.msra.mxu0 0.0
    %3489 = vmatpush.msra.mxu0 0.0
    %3490 = vmatpush.msra.mxu0 0.0
    %3491 = vmatpush.msra.mxu0 0.0
    %3492 = vmatpush.msra.mxu0 0.0
    %3493 = vmatpush.msra.mxu0 0.0
    %3494 = vmatpush.msra.mxu0 0.0
    %3495 = vmatpush.msra.mxu0 0.0
    %3496 = vmatpush.msra.mxu0 0.0
    %3497 = vmatpush.msra.mxu0 0.0
    %3498 = vmatpush.msra.mxu0 0.0
    %3499 = vmatpush.msra.mxu0 %v2934
    %3500 = vmatpush.msra.mxu0 %v2933
    %3501 = vmatpush.msra.mxu0 %v2932
    %3502 = vmatmul.f32.gmra.mxu0 %v3484
    %v3503 = vpop.f32.mrf.mxu0
    %v3504 = vadd.f32 0.0, %v3503
    %3505 = vdwg.mxu0
    %v3506 = vld [vmem:[%s67] sm:$0xff]
    %v3507 = vld [vmem:[%s67 + $0x8] sm:$0xff]
    %v3508 = vld [vmem:[%s67 + $0x10] sm:$0xff]
    %v3509 = vld [vmem:[%s67 + $0x18] sm:$0xff]
    %v3510 = vld [vmem:[%s67 + $0x20] sm:$0xff]
    %v3511 = vld [vmem:[%s67 + $0x28] sm:$0xff]
    %v3512 = vld [vmem:[%s67 + $0x30] sm:$0xff]
    %v3513 = vld [vmem:[%s67 + $0x38] sm:$0xff]
    %v3514 = vld [vmem:[%s67 + $0x40] sm:$0xff]
    %v3515 = vld [vmem:[%s67 + $0x48] sm:$0xff]
    %v3516 = vld [vmem:[%s67 + $0x50] sm:$0xff]
    %v3517 = vld [vmem:[%s67 + $0x58] sm:$0xff]
    %v3518 = vld [vmem:[%s67 + $0x60] sm:$0xff]
    %v3519 = vld [vmem:[%s67 + $0x68] sm:$0xff]
    %v3520 = vld [vmem:[%s67 + $0x70] sm:$0xff]
    %v3521 = vld [vmem:[%s67 + $0x78] sm:$0xff]
    %v3522 = vld [vmem:[%s69] sm:$0x1]
    %v3524 = vperm.slane %v3522, 0
    %3526 = vmatpush.msra.mxu0 %v3521
    %3527 = vmatpush.msra.mxu0 %v3520
    %3528 = vmatpush.msra.mxu0 %v3519
    %3529 = vmatpush.msra.mxu0 %v3518
    %3530 = vmatpush.msra.mxu0 %v3517
    %3531 = vmatpush.msra.mxu0 %v3516
    %3532 = vmatpush.msra.mxu0 %v3515
    %3533 = vmatpush.msra.mxu0 %v3514
    %3534 = vmatpush.msra.mxu0 %v3513
    %3535 = vmatpush.msra.mxu0 %v3512
    %3536 = vmatpush.msra.mxu0 %v3511
    %3537 = vmatpush.msra.mxu0 %v3510
    %3538 = vmatpush.msra.mxu0 %v3509
    %3539 = vmatpush.msra.mxu0 %v3508
    %3540 = vmatpush.msra.mxu0 %v3507
    %3541 = vmatpush.msra.mxu0 %v3506
    %3542 = vmatmul.f32.gmra.mxu0 %v3504
    %v3543 = vpop.f32.mrf.mxu0
    %v3544 = vadd.f32 %v3524, %v3543
    %3545 = vdwg.mxu0
    %v3546 = vmax.f32 %v3544, 0.0
    %v3547 = vld [vmem:[%s71] sm:$0xff]
    %v3548 = vld [vmem:[%s71 + $0x8] sm:$0xff]
    %v3549 = vld [vmem:[%s71 + $0x10] sm:$0xff]
    %v3550 = vld [vmem:[%s71 + $0x18] sm:$0xff]
    %v3552 = vsel %vm668, %v3546, 0
    %3554 = vmatpush.msra.mxu0 0.0
    %3555 = vmatpush.msra.mxu0 0.0
    %3556 = vmatpush.msra.mxu0 0.0
    %3557 = vmatpush.msra.mxu0 0.0
    %3558 = vmatpush.msra.mxu0 0.0
    %3559 = vmatpush.msra.mxu0 0.0
    %3560 = vmatpush.msra.mxu0 0.0
    %3561 = vmatpush.msra.mxu0 0.0
    %3562 = vmatpush.msra.mxu0 0.0
    %3563 = vmatpush.msra.mxu0 0.0
    %3564 = vmatpush.msra.mxu0 0.0
    %3565 = vmatpush.msra.mxu0 0.0
    %3566 = vmatpush.msra.mxu0 %v3550
    %3567 = vmatpush.msra.mxu0 %v3549
    %3568 = vmatpush.msra.mxu0 %v3548
    %3569 = vmatpush.msra.mxu0 %v3547
    %3570 = vmatmul.f32.gmra.mxu0 %v3552
    %v3571 = vpop.f32.mrf.mxu0
    %v3572 = vadd.f32 0.0, %v3571
    %3573 = vdwg.mxu0
    %v3574 = vld [vmem:[%s15] sm:$0xff]
    %vm3575 = vcmp.gt.f32.partialorder %v3574, 0.0
    %v3576 = vsel %vm3575, 1, 0
    %v3577 = vcvt.s32.f32 %v3576
    %v3578 = vmul.f32 %v3572, %v3577
    %3579 = vxpose.xlu0.b32.start [1/16] %v3578, 128
    %3580 = vxpose.xlu0.b32.cont [2/16] 0.0, 128
    %3581 = vxpose.xlu0.b32.cont [3/16] 0.0, 128
    %3582 = vxpose.xlu0.b32.cont [4/16] 0.0, 128
    %3583 = vxpose.xlu0.b32.cont [5/16] 0.0, 128
    %3584 = vxpose.xlu0.b32.cont [6/16] 0.0, 128
    %3585 = vxpose.xlu0.b32.cont [7/16] 0.0, 128
    %3586 = vxpose.xlu0.b32.cont [8/16] 0.0, 128
    %3587 = vxpose.xlu0.b32.cont [9/16] 0.0, 128
    %3588 = vxpose.xlu0.b32.cont [10/16] 0.0, 128
    %3589 = vxpose.xlu0.b32.cont [11/16] 0.0, 128
    %3590 = vxpose.xlu0.b32.cont [12/16] 0.0, 128
    %3591 = vxpose.xlu0.b32.cont [13/16] 0.0, 128
    %3592 = vxpose.xlu0.b32.cont [14/16] 0.0, 128
    %3593 = vxpose.xlu0.b32.cont [15/16] 0.0, 128
    %3594 = vxpose.xlu0.b32.end [16/16] 0.0, 128
    %v3595 = vpop.trf.xlu0
    %v3596 = vpop.trf.xlu0
    %v3597 = vpop.trf.xlu0
    %v3598 = vpop.trf.xlu0
    %v3599 = vpop.trf.xlu0
    %v3600 = vpop.trf.xlu0
    %v3601 = vpop.trf.xlu0
    %v3602 = vpop.trf.xlu0
    %v3603 = vpop.trf.xlu0
    %v3604 = vpop.trf.xlu0
    %v3605 = vpop.trf.xlu0
    %v3606 = vpop.trf.xlu0
    %v3607 = vpop.trf.xlu0
    %v3608 = vpop.trf.xlu0
    %v3609 = vpop.trf.xlu0
    %v3610 = vpop.trf.xlu0
    %vm3611 = vcmask 57344
    %3612 = vst.msk [vmem:[#allocation26] sm:$0x1] %vm3611, %v3595
    %v3613 = vsel %vm668, %v3481, 0.0
    %v3614 = vrot.slane %v3613, 4
    %v3615 = vadd.f32 %v3613, %v3614
    %v3616 = vrot.slane %v3615, 2
    %v3617 = vadd.f32 %v3615, %v3616
    %v3618 = vrot.slane %v3617, 1
    %v3619 = vadd.f32 %v3617, %v3618
    %v3620 = vld [vmem:[#allocation24] sm:$0xff]
    %v3621 = vld [vmem:[#allocation24 + $0x8] sm:$0xff]
    %v3622 = vld [vmem:[#allocation24 + $0x10] sm:$0xff]
    %v3623 = vld [vmem:[#allocation24 + $0x18] sm:$0xff]
    %v3624 = vld [vmem:[%s75] sm:$0x1]
    %v3626 = vsel %vm668, %v3619, 0
    %3628 = vmatpush.msra.mxu0 0.0
    %3629 = vmatpush.msra.mxu0 0.0
    %3630 = vmatpush.msra.mxu0 0.0
    %3631 = vmatpush.msra.mxu0 0.0
    %3632 = vmatpush.msra.mxu0 0.0
    %3633 = vmatpush.msra.mxu0 0.0
    %3634 = vmatpush.msra.mxu0 0.0
    %3635 = vmatpush.msra.mxu0 0.0
    %3636 = vmatpush.msra.mxu0 0.0
    %3637 = vmatpush.msra.mxu0 0.0
    %3638 = vmatpush.msra.mxu0 0.0
    %3639 = vmatpush.msra.mxu0 0.0
    %3640 = vmatpush.msra.mxu0 %v3623
    %3641 = vmatpush.msra.mxu0 %v3622
    %3642 = vmatpush.msra.mxu0 %v3621
    %3643 = vmatpush.msra.mxu0 %v3620
    %3644 = vmatmul.f32.gmra.mxu0 %v3626
    %v3645 = vpop.f32.mrf.mxu0
    %v3646 = vadd.f32 %v3624, %v3645
    %3647 = vdwg.mxu0
    %v3648 = vmax.f32 %v3646, 0.0
    %v3649 = vld [vmem:[%s77] sm:$0xff]
    %v3650 = vld [vmem:[%s77 + $0x8] sm:$0xff]
    %v3651 = vld [vmem:[%s77 + $0x10] sm:$0xff]
    %v3652 = vld [vmem:[%s77 + $0x18] sm:$0xff]
    %v3653 = vld [vmem:[%s79] sm:$0x1]
    %v3655 = vsel %vm668, %v3648, 0
    %3657 = vmatpush.msra.mxu0 0.0
    %3658 = vmatpush.msra.mxu0 0.0
    %3659 = vmatpush.msra.mxu0 0.0
    %3660 = vmatpush.msra.mxu0 0.0
    %3661 = vmatpush.msra.mxu0 0.0
    %3662 = vmatpush.msra.mxu0 0.0
    %3663 = vmatpush.msra.mxu0 0.0
    %3664 = vmatpush.msra.mxu0 0.0
    %3665 = vmatpush.msra.mxu0 0.0
    %3666 = vmatpush.msra.mxu0 0.0
    %3667 = vmatpush.msra.mxu0 0.0
    %3668 = vmatpush.msra.mxu0 0.0
    %3669 = vmatpush.msra.mxu0 %v3652
    %3670 = vmatpush.msra.mxu0 %v3651
    %3671 = vmatpush.msra.mxu0 %v3650
    %3672 = vmatpush.msra.mxu0 %v3649
    %3673 = vmatmul.f32.gmra.mxu0 %v3655
    %v3674 = vpop.f32.mrf.mxu0
    %v3675 = vadd.f32 %v3653, %v3674
    %3676 = vdwg.mxu0
    %v3677 = vmax.f32 %v3675, 0.0
    %v3678 = vld [vmem:[%s81] sm:$0xff]
    %v3679 = vld [vmem:[%s81 + $0x8] sm:$0xff]
    %v3680 = vld [vmem:[#allocation2] sm:$0x1]
    %v3682 = vsel %vm664, %v3677, 0
    %3684 = vmatpush.msra.mxu0 0.0
    %3685 = vmatpush.msra.mxu0 0.0
    %3686 = vmatpush.msra.mxu0 0.0
    %3687 = vmatpush.msra.mxu0 0.0
    %3688 = vmatpush.msra.mxu0 0.0
    %3689 = vmatpush.msra.mxu0 0.0
    %3690 = vmatpush.msra.mxu0 0.0
    %3691 = vmatpush.msra.mxu0 0.0
    %3692 = vmatpush.msra.mxu0 0.0
    %3693 = vmatpush.msra.mxu0 0.0
    %3694 = vmatpush.msra.mxu0 0.0
    %3695 = vmatpush.msra.mxu0 0.0
    %3696 = vmatpush.msra.mxu0 0.0
    %3697 = vmatpush.msra.mxu0 0.0
    %3698 = vmatpush.msra.mxu0 %v3679
    %3699 = vmatpush.msra.mxu0 %v3678
    %3700 = vmatmul.f32.gmra.mxu0 %v3682
    %v3701 = vpop.f32.mrf.mxu0
    %v3702 = vadd.f32 %v3680, %v3701
    %3703 = vdwg.mxu0
    %vm3704 = vcmask 0
    %3705 = vst.msk [vmem:[#allocation27] sm:$0x1] %vm3704, %v3702
    // Predicated region
    $region226: #{curvagn_forward.1} parent=1 // pred_check
      _
    $region227: #{curvagn_forward.1} parent=1 // pred_check_branch
      %3707 = sbr.rel (0) target = $region229
    $region228: #{curvagn_forward.1} parent=1 // pred_region
      %3709 = vsyncadd [#allocation5], 0
      %s3711 = sshll.u32 [#allocation26], 4
      %s3712 = int_to_ptr.vmem [resolvable:$true] %s3711
      %s3713 = sshll.u32 %s85, 4
      %s3714 = int_to_ptr.hbm [resolvable:$true] %s3713
      %3716 = dma.vmem_to_hbm [thread:$0]  %s3712, 16, %s3714, [#allocation5]
    $region229: #{curvagn_forward.1} parent=1 // pred_fallthru
      _
    // Predicated region
    $region230: #{curvagn_forward.1} parent=1 // pred_check
      _
    $region231: #{curvagn_forward.1} parent=1 // pred_check_branch
      %3718 = sbr.rel (0) target = $region233
    $region232: #{curvagn_forward.1} parent=1 // pred_region
      %3720 = vsyncadd [#allocation28], 0
      %s3722 = sshll.u32 [#allocation27], 4
      %s3723 = int_to_ptr.vmem [resolvable:$true] %s3722
      %s3724 = sshll.u32 %s87, 4
      %s3725 = int_to_ptr.hbm [resolvable:$true] %s3724
      %3727 = dma.vmem_to_hbm [thread:$0]  %s3723, 16, %s3725, [#allocation28]
    $region233: #{curvagn_forward.1} parent=1 // pred_fallthru
      _
    // Predicated region
    $region234: #{curvagn_forward.1} parent=1 // pred_check
      _
    $region235: #{curvagn_forward.1} parent=1 // pred_check_branch
      %3729 = sbr.rel (0) target = $region237
    $region236: #{curvagn_forward.1} parent=1 // pred_region
      %3731 = dma.done [#allocation5], 16
    $region237: #{curvagn_forward.1} parent=1 // pred_fallthru
      _
    // Predicated region
    $region238: #{curvagn_forward.1} parent=1 // pred_check
      _
    $region239: #{curvagn_forward.1} parent=1 // pred_check_branch
      %3733 = sbr.rel (0) target = $region241
    $region240: #{curvagn_forward.1} parent=1 // pred_region
      %3735 = dma.done [#allocation28], 16
    $region241: #{curvagn_forward.1} parent=1 // pred_fallthru
      _
    %3736 = vsyncpa [#allocation4], 1
    %3737 = vsyncpa [#allocation7], 1
    %3738 = vsyncpa [#allocation10], 1
    %3739 = vsyncpa [#allocation13], 1
    %3740 = vsyncpa [#allocation16], 1
    %3741 = vsyncpa [#allocation19], 1
    %3742 = vsyncpa [#allocation22], 1
    %3743 = vsyncpa [#allocation25], 1
    %3744 = vsyncpa [#allocation5], 1
    %3745 = vsyncpa [#allocation28], 1

</llo_original>
